<compile_context>
chip_gen: v5e
topology: v5e:2x2
jax: 0.10.0
libtpu: 0.0.40
codegen_flags: <defaults>
</compile_context>

<pallas_src>
import functools
import math

import jax
import jax.numpy as jnp
from jax import lax
from jax.experimental import pallas as pl
from jax.experimental.pallas import tpu as pltpu


# ---------------------------------------------------------------------------
# Fused multi-head attention + residual + LayerNorm  (one pallas_call / block)
# ---------------------------------------------------------------------------

def _mha_ln_kernel(xq_ref, xkv_ref, wqkv_ref, bqkv_ref, wo_ref, bo_ref,
                   nw_ref, nb_ref, o_ref, *, nhead, self_attention, eps):
    # xq_ref: (1, Sq, D)   xkv_ref: (1, Sk, D)
    # wqkv_ref: (D, 3D) pre-transposed, columns ordered [q | k | v]
    # wo_ref:   (D, D)  pre-transposed (rows = input dim)
    xq = xq_ref[0]                                   # (Sq, D)
    sq, d = xq.shape
    dh = d // nhead
    scale = 1.0 / math.sqrt(dh)

    if self_attention:
        # Single packed QKV projection: one MXU pass, lane-dense 3D-wide output.
        qkv = jnp.dot(xq, wqkv_ref[...],
                      preferred_element_type=jnp.float32) + bqkv_ref[...]
        q = qkv[:, :d]
        k = qkv[:, d:2 * d]
        v = qkv[:, 2 * d:]
    else:
        xkv = xkv_ref[0]                             # (Sk, D)
        q = jnp.dot(xq, wqkv_ref[:, :d],
                    preferred_element_type=jnp.float32) + bqkv_ref[:, :d]
        kv = jnp.dot(xkv, wqkv_ref[:, d:],
                     preferred_element_type=jnp.float32) + bqkv_ref[:, d:]
        k = kv[:, :d]
        v = kv[:, d:]

    # Per-head attention; output projection folded into the head loop
    # (out = sum_h oh @ Wo[h-slice, :]) so no concat / extra HBM traffic.
    acc = jnp.zeros((sq, d), jnp.float32)
    for h in range(nhead):                           # static unroll (nhead small)
        hs = h * dh
        qh = q[:, hs:hs + dh]
        kh = k[:, hs:hs + dh]
        vh = v[:, hs:hs + dh]
        # contraction on dim 1 of both operands -> no transpose in the kernel
        s = lax.dot_general(qh, kh, (((1,), (1,)), ((), ())),
                            preferred_element_type=jnp.float32) * scale
        m = jnp.max(s, axis=-1, keepdims=True)
        p = jnp.exp(s - m)
        denom = jnp.sum(p, axis=-1, keepdims=True)
        p = p * pl.reciprocal(denom, approx=True)    # EUP slot, frees VALU
        oh = jnp.dot(p, vh, preferred_element_type=jnp.float32)      # (Sq, Dh)
        acc = acc + jnp.dot(oh, wo_ref[hs:hs + dh, :],
                            preferred_element_type=jnp.float32)      # (Sq, D)

    # residual + LayerNorm epilogue (stays in VMEM)
    y = xq + acc + bo_ref[...]
    mean = jnp.mean(y, axis=-1, keepdims=True)
    var = jnp.mean((y - mean) * (y - mean), axis=-1, keepdims=True)
    o_ref[0] = (y - mean) * lax.rsqrt(var + eps) * nw_ref[...] + nb_ref[...]


def fused_mha_ln(x_q, x_kv, attn_p, norm_w, norm_b, nhead, *,
                 self_attention, eps=1e-5):
    """x_q: (B, Sq, D), x_kv: (B, Sk, D) -> LayerNorm(x_q + MHA(x_q, x_kv))."""
    b, sq, d = x_q.shape
    sk = x_kv.shape[1]
    w_qkv_t = attn_p["w_qkv_t"]                      # (D, 3D)
    b_qkv = attn_p["b_qkv"].reshape(1, 3 * d)
    w_out_t = attn_p["w_out_t"]                      # (D, D)
    b_out = attn_p["b_out"].reshape(1, d)

    kernel = functools.partial(_mha_ln_kernel, nhead=nhead,
                               self_attention=self_attention, eps=eps)
    return pl.pallas_call(
        kernel,
        grid=(b,),
        in_specs=[
            pl.BlockSpec((1, sq, d), lambda i: (i, 0, 0)),
            pl.BlockSpec((1, sk, d), lambda i: (i, 0, 0)),
            pl.BlockSpec((d, 3 * d), lambda i: (0, 0)),   # weights resident
            pl.BlockSpec((1, 3 * d), lambda i: (0, 0)),
            pl.BlockSpec((d, d), lambda i: (0, 0)),
            pl.BlockSpec((1, d), lambda i: (0, 0)),
            pl.BlockSpec((1, d), lambda i: (0, 0)),
            pl.BlockSpec((1, d), lambda i: (0, 0)),
        ],
        out_specs=pl.BlockSpec((1, sq, d), lambda i: (i, 0, 0)),
        out_shape=jax.ShapeDtypeStruct((b, sq, d), jnp.float32),
        compiler_params=pltpu.CompilerParams(
            dimension_semantics=("parallel",)),
    )(x_q, x_kv, w_qkv_t, b_qkv, w_out_t, b_out,
      norm_w.reshape(1, d), norm_b.reshape(1, d))


# ---------------------------------------------------------------------------
# Fused feed-forward (lin1 + ReLU + lin2) + residual + LayerNorm
# ---------------------------------------------------------------------------

def _ffn_ln_kernel(x_ref, w1_ref, b1_ref, w2_ref, b2_ref, nw_ref, nb_ref,
                   o_ref, *, eps):
    x = x_ref[...]                                                   # (bn, D)
    h = jnp.dot(x, w1_ref[...], preferred_element_type=jnp.float32) + b1_ref[...]
    h = jnp.maximum(h, 0.0)                                          # (bn, F), VMEM only
    ff = jnp.dot(h, w2_ref[...], preferred_element_type=jnp.float32) + b2_ref[...]
    y = x + ff
    mean = jnp.mean(y, axis=-1, keepdims=True)
    var = jnp.mean((y - mean) * (y - mean), axis=-1, keepdims=True)
    o_ref[...] = (y - mean) * lax.rsqrt(var + eps) * nw_ref[...] + nb_ref[...]


def ffn_ln(x, w1_t, b1, w2_t, b2, norm_w, norm_b, *, eps=1e-5, block_rows=256):
    # block_rows sized conservatively so 2x double-buffered tiles + resident
    # weights also fit v7x's 64 MiB VMEM at realistic d_model / dim_ff.
    n, d = x.shape
    f = w1_t.shape[1]
    bn = min(block_rows, n)
    return pl.pallas_call(
        functools.partial(_ffn_ln_kernel, eps=eps),
        grid=(pl.cdiv(n, bn),),
        in_specs=[
            pl.BlockSpec((bn, d), lambda i: (i, 0)),
            pl.BlockSpec((d, f), lambda i: (0, 0)),
            pl.BlockSpec((1, f), lambda i: (0, 0)),
            pl.BlockSpec((f, d), lambda i: (0, 0)),
            pl.BlockSpec((1, d), lambda i: (0, 0)),
            pl.BlockSpec((1, d), lambda i: (0, 0)),
            pl.BlockSpec((1, d), lambda i: (0, 0)),
        ],
        out_specs=pl.BlockSpec((bn, d), lambda i: (i, 0)),
        out_shape=jax.ShapeDtypeStruct((n, d), jnp.float32),
        compiler_params=pltpu.CompilerParams(
            dimension_semantics=("parallel",)),
    )(x, w1_t, b1.reshape(1, f), w2_t, b2.reshape(1, d),
      norm_w.reshape(1, d), norm_b.reshape(1, d))


# ---------------------------------------------------------------------------
# Plain LayerNorm (final norm — no fake zero residual)
# ---------------------------------------------------------------------------

def _ln_kernel(x_ref, w_ref, b_ref, o_ref, *, eps):
    x = x_ref[...]
    mean = jnp.mean(x, axis=-1, keepdims=True)
    var = jnp.mean((x - mean) * (x - mean), axis=-1, keepdims=True)
    o_ref[...] = (x - mean) * lax.rsqrt(var + eps) * w_ref[...] + b_ref[...]


def layernorm(x, w, b, *, eps=1e-5, block_rows=512):
    n, d = x.shape
    bn = min(block_rows, n)
    return pl.pallas_call(
        functools.partial(_ln_kernel, eps=eps),
        grid=(pl.cdiv(n, bn),),
        in_specs=[pl.BlockSpec((bn, d), lambda i: (i, 0)),
                  pl.BlockSpec((1, d), lambda i: (0, 0)),
                  pl.BlockSpec((1, d), lambda i: (0, 0))],
        out_specs=pl.BlockSpec((bn, d), lambda i: (i, 0)),
        out_shape=jax.ShapeDtypeStruct((n, d), jnp.float32),
        compiler_params=pltpu.CompilerParams(
            dimension_semantics=("parallel",)),
    )(x, w.reshape(1, d), b.reshape(1, d))


# ---------------------------------------------------------------------------
# Module composition (3 fused pallas_calls per decoder layer)
# ---------------------------------------------------------------------------

def decoder_layer_forward(x_bsd, mem_bsd, p, nhead):
    b, s, d = x_bsd.shape
    # self-attention block + norm1 (fused)
    x = fused_mha_ln(x_bsd, x_bsd, p["self_attn"], p["norm1_w"], p["norm1_b"],
                     nhead, self_attention=True)
    # cross-attention block + norm2 (fused)
    x = fused_mha_ln(x, mem_bsd, p["cross_attn"], p["norm2_w"], p["norm2_b"],
                     nhead, self_attention=False)
    # feed-forward block + norm3 (fused; reshape is contiguous in (B,S,D))
    y = ffn_ln(x.reshape(b * s, d), p["lin1_w_t"], p["lin1_b"],
               p["lin2_w_t"], p["lin2_b"], p["norm3_w"], p["norm3_b"])
    return y.reshape(b, s, d)


def transformer_decoder_forward(tgt, memory, params, nhead):
    """tgt/memory: (S, B, D) as in PyTorch's non-batch_first convention."""
    out = jnp.transpose(tgt, (1, 0, 2))      # single layout change at the edge
    mem = jnp.transpose(memory, (1, 0, 2))
    for layer_p in params["layers"]:
        out = decoder_layer_forward(out, mem, layer_p, nhead)
    if params.get("final_norm") is not None:
        b, s, d = out.shape
        fn = params["final_norm"]
        out = layernorm(out.reshape(b * s, d), fn["w"], fn["b"]).reshape(b, s, d)
    return jnp.transpose(out, (1, 0, 2))


# ---------------------------------------------------------------------------
# Parameters: PyTorch-layout init + one-time kernel-layout preparation
# ---------------------------------------------------------------------------

def init_params(key, d_model, nhead, dim_ff, num_layers):
    def nrm(k, shape, scale=0.05):
        return (scale * jax.random.normal(k, shape)).astype(jnp.float32)

    layers = []
    keys = jax.random.split(key, num_layers + 1)
    for li in range(num_layers):
        ks = jax.random.split(keys[li], 12)
        attn_p = lambda a, b2, c, d2: {
            "in_proj_w": nrm(a, (3 * d_model, d_model)),    # PyTorch layout
            "in_proj_b": nrm(b2, (3 * d_model,)),
            "out_w": nrm(c, (d_model, d_model)),
            "out_b": nrm(d2, (d_model,)),
        }
        layers.append({
            "self_attn": attn_p(ks[0], ks[1], ks[2], ks[3]),
            "cross_attn": attn_p(ks[4], ks[5], ks[6], ks[7]),
            "lin1_w": nrm(ks[8], (dim_ff, d_model)),
            "lin1_b": nrm(ks[9], (dim_ff,)),
            "lin2_w": nrm(ks[10], (d_model, dim_ff)),
            "lin2_b": nrm(ks[11], (d_model,)),
            "norm1_w": jnp.ones((d_model,), jnp.float32),
            "norm1_b": jnp.zeros((d_model,), jnp.float32),
            "norm2_w": jnp.ones((d_model,), jnp.float32),
            "norm2_b": jnp.zeros((d_model,), jnp.float32),
            "norm3_w": jnp.ones((d_model,), jnp.float32),
            "norm3_b": jnp.zeros((d_model,), jnp.float32),
        })
    final_norm = {
        "w": jnp.ones((d_model,), jnp.float32),
        "b": jnp.zeros((d_model,), jnp.float32),
    }
    return {"layers": layers, "final_norm": final_norm}


def prepare_params(params_pt):
    """Pre-transpose weights to (Din, Dout) so kernels never transpose."""
    def attn(p):
        return {
            "w_qkv_t": p["in_proj_w"].T,      # (D, 3D), cols [q | k | v]
            "b_qkv": p["in_proj_b"],
            "w_out_t": p["out_w"].T,          # (D, D)
            "b_out": p["out_b"],
        }
    layers = []
    for lp in params_pt["layers"]:
        layers.append({
            "self_attn": attn(lp["self_attn"]),
            "cross_attn": attn(lp["cross_attn"]),
            "lin1_w_t": lp["lin1_w"].T,       # (D, F)
            "lin1_b": lp["lin1_b"],
            "lin2_w_t": lp["lin2_w"].T,       # (F, D)
            "lin2_b": lp["lin2_b"],
            "norm1_w": lp["norm1_w"], "norm1_b": lp["norm1_b"],
            "norm2_w": lp["norm2_w"], "norm2_b": lp["norm2_b"],
            "norm3_w": lp["norm3_w"], "norm3_b": lp["norm3_b"],
        })
    return {"layers": layers, "final_norm": params_pt["final_norm"]}


# ---------------------------------------------------------------------------

if __name__ == "__main__":
    d_model, nhead, dim_ff, num_layers = 32, 4, 64, 2
    seq_tgt, seq_mem, batch = 8, 8, 2

    root = jax.random.PRNGKey(0)
    k_tgt, k_mem, k_par = jax.random.split(root, 3)
    tgt = jax.random.normal(k_tgt, (seq_tgt, batch, d_model), jnp.float32)
    memory = jax.random.normal(k_mem, (seq_mem, batch, d_model), jnp.float32)
    params = prepare_params(init_params(k_par, d_model, nhead, dim_ff, num_layers))

    fwd = jax.jit(transformer_decoder_forward, static_argnums=3)
    out = fwd(tgt, memory, params, nhead)
    out = jax.block_until_ready(out)
    assert out.shape == (seq_tgt, batch, d_model)
    assert bool(jnp.all(jnp.isfinite(out)))
    print("KERNEL_OK")
</pallas_src>

<mosaic_0001>
module attributes {stable_mosaic.version = 11 : i64} {
  func.func @_mha_ln_kernel(%arg0: i32, %arg1: memref<1x8x32xf32, #tpu.memory_space<vmem>>, %arg2: memref<1x8x32xf32, #tpu.memory_space<vmem>>, %arg3: memref<32x96xf32, #tpu.memory_space<vmem>>, %arg4: memref<1x96xf32, #tpu.memory_space<vmem>>, %arg5: memref<32x32xf32, #tpu.memory_space<vmem>>, %arg6: memref<1x32xf32, #tpu.memory_space<vmem>>, %arg7: memref<1x32xf32, #tpu.memory_space<vmem>>, %arg8: memref<1x32xf32, #tpu.memory_space<vmem>>, %arg9: memref<1x8x32xf32, #tpu.memory_space<vmem>>) attributes {dimension_semantics = [#tpu.dimension_semantics<parallel>], iteration_bounds = array<i64: 2>, scalar_prefetch = 0 : i64, scratch_operands = 0 : i64, tpu.core_type = #tpu.core_type<tc>, window_params = [{transform_indices = @transform_0, window_bounds = array<i64: 1, 8, 32>}, {transform_indices = @transform_1, window_bounds = array<i64: 1, 8, 32>}, {pipeline_mode = #tpu.pipeline_mode<synchronous>, transform_indices = @transform_2, window_bounds = array<i64: 32, 96>}, {pipeline_mode = #tpu.pipeline_mode<synchronous>, transform_indices = @transform_3, window_bounds = array<i64: 1, 96>}, {pipeline_mode = #tpu.pipeline_mode<synchronous>, transform_indices = @transform_4, window_bounds = array<i64: 32, 32>}, {pipeline_mode = #tpu.pipeline_mode<synchronous>, transform_indices = @transform_5, window_bounds = array<i64: 1, 32>}, {pipeline_mode = #tpu.pipeline_mode<synchronous>, transform_indices = @transform_6, window_bounds = array<i64: 1, 32>}, {pipeline_mode = #tpu.pipeline_mode<synchronous>, transform_indices = @transform_7, window_bounds = array<i64: 1, 32>}, {transform_indices = @transform_8, window_bounds = array<i64: 1, 8, 32>}]} {
    %c0 = arith.constant 0 : index
    %c0_0 = arith.constant 0 : index
    %c0_1 = arith.constant 0 : index
    %0 = vector.load %arg1[%c0, %c0_0, %c0_1] : memref<1x8x32xf32, #tpu.memory_space<vmem>>, vector<1x8x32xf32>
    %1 = vector.shape_cast %0 : vector<1x8x32xf32> to vector<8x32xf32>
    %c0_2 = arith.constant 0 : index
    %c0_3 = arith.constant 0 : index
    %2 = vector.load %arg3[%c0_2, %c0_3] : memref<32x96xf32, #tpu.memory_space<vmem>>, vector<32x96xf32>
    %cst = arith.constant dense<0.000000e+00> : vector<8x96xf32>
    %3 = tpu.matmul %1, %2, %cst {dimension_numbers = #tpu.dot_dimension_numbers<[1], [0], [0], [1], [0, 0, 1, 1], [], []>} : vector<8x32xf32>, vector<32x96xf32>, vector<8x96xf32> -> vector<8x96xf32>
    %c0_4 = arith.constant 0 : index
    %c0_5 = arith.constant 0 : index
    %4 = vector.load %arg4[%c0_4, %c0_5] : memref<1x96xf32, #tpu.memory_space<vmem>>, vector<1x96xf32>
    %5 = vector.broadcast %4 : vector<1x96xf32> to vector<8x96xf32>
    %6 = arith.addf %3, %5 : vector<8x96xf32>
    %7 = vector.extract_strided_slice %6 {offsets = [0, 0], sizes = [8, 32], strides = [1, 1]} : vector<8x96xf32> to vector<8x32xf32>
    %8 = vector.extract_strided_slice %6 {offsets = [0, 32], sizes = [8, 32], strides = [1, 1]} : vector<8x96xf32> to vector<8x32xf32>
    %9 = vector.extract_strided_slice %6 {offsets = [0, 64], sizes = [8, 32], strides = [1, 1]} : vector<8x96xf32> to vector<8x32xf32>
    %cst_6 = arith.constant 0.000000e+00 : f32
    %10 = vector.broadcast %cst_6 : f32 to vector<8x32xf32>
    %11 = vector.extract_strided_slice %7 {offsets = [0, 0], sizes = [8, 8], strides = [1, 1]} : vector<8x32xf32> to vector<8x8xf32>
    %12 = vector.extract_strided_slice %8 {offsets = [0, 0], sizes = [8, 8], strides = [1, 1]} : vector<8x32xf32> to vector<8x8xf32>
    %13 = vector.extract_strided_slice %9 {offsets = [0, 0], sizes = [8, 8], strides = [1, 1]} : vector<8x32xf32> to vector<8x8xf32>
    %cst_7 = arith.constant dense<0.000000e+00> : vector<8x8xf32>
    %14 = tpu.matmul %11, %12, %cst_7 {dimension_numbers = #tpu.dot_dimension_numbers<[1], [1], [0], [0], [0, 0, 1, 0], [], []>} : vector<8x8xf32>, vector<8x8xf32>, vector<8x8xf32> -> vector<8x8xf32>
    %cst_8 = arith.constant 0.353553385 : f32
    %15 = vector.broadcast %cst_8 : f32 to vector<8x8xf32>
    %16 = arith.mulf %14, %15 : vector<8x8xf32>
    %cst_9 = arith.constant dense<0xFF800000> : vector<8xf32>
    %17 = vector.multi_reduction <maximumf>, %16, %cst_9 [1] : vector<8x8xf32> to vector<8xf32>
    %18 = vector.shape_cast %17 : vector<8xf32> to vector<8x1xf32>
    %19 = vector.broadcast %18 : vector<8x1xf32> to vector<8x8xf32>
    %20 = arith.subf %16, %19 : vector<8x8xf32>
    %21 = math.exp %20 : vector<8x8xf32>
    %cst_10 = arith.constant dense<0.000000e+00> : vector<8xf32>
    %22 = vector.multi_reduction <add>, %21, %cst_10 [1] : vector<8x8xf32> to vector<8xf32>
    %23 = vector.shape_cast %22 : vector<8xf32> to vector<8x1xf32>
    %24 = tpu.reciprocal %23 {approx = true} : vector<8x1xf32> -> vector<8x1xf32>
    %25 = vector.broadcast %24 : vector<8x1xf32> to vector<8x8xf32>
    %26 = arith.mulf %21, %25 : vector<8x8xf32>
    %cst_11 = arith.constant dense<0.000000e+00> : vector<8x8xf32>
    %27 = tpu.matmul %26, %13, %cst_11 {dimension_numbers = #tpu.dot_dimension_numbers<[1], [0], [0], [1], [0, 0, 1, 1], [], []>} : vector<8x8xf32>, vector<8x8xf32>, vector<8x8xf32> -> vector<8x8xf32>
    %c0_12 = arith.constant 0 : index
    %c0_13 = arith.constant 0 : index
    %28 = vector.load %arg5[%c0_12, %c0_13] : memref<32x32xf32, #tpu.memory_space<vmem>>, vector<8x32xf32>
    %cst_14 = arith.constant dense<0.000000e+00> : vector<8x32xf32>
    %29 = tpu.matmul %27, %28, %cst_14 {dimension_numbers = #tpu.dot_dimension_numbers<[1], [0], [0], [1], [0, 0, 1, 1], [], []>} : vector<8x8xf32>, vector<8x32xf32>, vector<8x32xf32> -> vector<8x32xf32>
    %30 = arith.addf %10, %29 : vector<8x32xf32>
    %31 = vector.extract_strided_slice %7 {offsets = [0, 8], sizes = [8, 8], strides = [1, 1]} : vector<8x32xf32> to vector<8x8xf32>
    %32 = vector.extract_strided_slice %8 {offsets = [0, 8], sizes = [8, 8], strides = [1, 1]} : vector<8x32xf32> to vector<8x8xf32>
    %33 = vector.extract_strided_slice %9 {offsets = [0, 8], sizes = [8, 8], strides = [1, 1]} : vector<8x32xf32> to vector<8x8xf32>
    %cst_15 = arith.constant dense<0.000000e+00> : vector<8x8xf32>
    %34 = tpu.matmul %31, %32, %cst_15 {dimension_numbers = #tpu.dot_dimension_numbers<[1], [1], [0], [0], [0, 0, 1, 0], [], []>} : vector<8x8xf32>, vector<8x8xf32>, vector<8x8xf32> -> vector<8x8xf32>
    %cst_16 = arith.constant 0.353553385 : f32
    %35 = vector.broadcast %cst_16 : f32 to vector<8x8xf32>
    %36 = arith.mulf %34, %35 : vector<8x8xf32>
    %cst_17 = arith.constant dense<0xFF800000> : vector<8xf32>
    %37 = vector.multi_reduction <maximumf>, %36, %cst_17 [1] : vector<8x8xf32> to vector<8xf32>
    %38 = vector.shape_cast %37 : vector<8xf32> to vector<8x1xf32>
    %39 = vector.broadcast %38 : vector<8x1xf32> to vector<8x8xf32>
    %40 = arith.subf %36, %39 : vector<8x8xf32>
    %41 = math.exp %40 : vector<8x8xf32>
    %cst_18 = arith.constant dense<0.000000e+00> : vector<8xf32>
    %42 = vector.multi_reduction <add>, %41, %cst_18 [1] : vector<8x8xf32> to vector<8xf32>
    %43 = vector.shape_cast %42 : vector<8xf32> to vector<8x1xf32>
    %44 = tpu.reciprocal %43 {approx = true} : vector<8x1xf32> -> vector<8x1xf32>
    %45 = vector.broadcast %44 : vector<8x1xf32> to vector<8x8xf32>
    %46 = arith.mulf %41, %45 : vector<8x8xf32>
    %cst_19 = arith.constant dense<0.000000e+00> : vector<8x8xf32>
    %47 = tpu.matmul %46, %33, %cst_19 {dimension_numbers = #tpu.dot_dimension_numbers<[1], [0], [0], [1], [0, 0, 1, 1], [], []>} : vector<8x8xf32>, vector<8x8xf32>, vector<8x8xf32> -> vector<8x8xf32>
    %c8 = arith.constant 8 : index
    %c0_20 = arith.constant 0 : index
    %48 = vector.load %arg5[%c8, %c0_20] : memref<32x32xf32, #tpu.memory_space<vmem>>, vector<8x32xf32>
    %cst_21 = arith.constant dense<0.000000e+00> : vector<8x32xf32>
    %49 = tpu.matmul %47, %48, %cst_21 {dimension_numbers = #tpu.dot_dimension_numbers<[1], [0], [0], [1], [0, 0, 1, 1], [], []>} : vector<8x8xf32>, vector<8x32xf32>, vector<8x32xf32> -> vector<8x32xf32>
    %50 = arith.addf %30, %49 : vector<8x32xf32>
    %51 = vector.extract_strided_slice %7 {offsets = [0, 16], sizes = [8, 8], strides = [1, 1]} : vector<8x32xf32> to vector<8x8xf32>
    %52 = vector.extract_strided_slice %8 {offsets = [0, 16], sizes = [8, 8], strides = [1, 1]} : vector<8x32xf32> to vector<8x8xf32>
    %53 = vector.extract_strided_slice %9 {offsets = [0, 16], sizes = [8, 8], strides = [1, 1]} : vector<8x32xf32> to vector<8x8xf32>
    %cst_22 = arith.constant dense<0.000000e+00> : vector<8x8xf32>
    %54 = tpu.matmul %51, %52, %cst_22 {dimension_numbers = #tpu.dot_dimension_numbers<[1], [1], [0], [0], [0, 0, 1, 0], [], []>} : vector<8x8xf32>, vector<8x8xf32>, vector<8x8xf32> -> vector<8x8xf32>
    %cst_23 = arith.constant 0.353553385 : f32
    %55 = vector.broadcast %cst_23 : f32 to vector<8x8xf32>
    %56 = arith.mulf %54, %55 : vector<8x8xf32>
    %cst_24 = arith.constant dense<0xFF800000> : vector<8xf32>
    %57 = vector.multi_reduction <maximumf>, %56, %cst_24 [1] : vector<8x8xf32> to vector<8xf32>
    %58 = vector.shape_cast %57 : vector<8xf32> to vector<8x1xf32>
    %59 = vector.broadcast %58 : vector<8x1xf32> to vector<8x8xf32>
    %60 = arith.subf %56, %59 : vector<8x8xf32>
    %61 = math.exp %60 : vector<8x8xf32>
    %cst_25 = arith.constant dense<0.000000e+00> : vector<8xf32>
    %62 = vector.multi_reduction <add>, %61, %cst_25 [1] : vector<8x8xf32> to vector<8xf32>
    %63 = vector.shape_cast %62 : vector<8xf32> to vector<8x1xf32>
    %64 = tpu.reciprocal %63 {approx = true} : vector<8x1xf32> -> vector<8x1xf32>
    %65 = vector.broadcast %64 : vector<8x1xf32> to vector<8x8xf32>
    %66 = arith.mulf %61, %65 : vector<8x8xf32>
    %cst_26 = arith.constant dense<0.000000e+00> : vector<8x8xf32>
    %67 = tpu.matmul %66, %53, %cst_26 {dimension_numbers = #tpu.dot_dimension_numbers<[1], [0], [0], [1], [0, 0, 1, 1], [], []>} : vector<8x8xf32>, vector<8x8xf32>, vector<8x8xf32> -> vector<8x8xf32>
    %c16 = arith.constant 16 : index
    %c0_27 = arith.constant 0 : index
    %68 = vector.load %arg5[%c16, %c0_27] : memref<32x32xf32, #tpu.memory_space<vmem>>, vector<8x32xf32>
    %cst_28 = arith.constant dense<0.000000e+00> : vector<8x32xf32>
    %69 = tpu.matmul %67, %68, %cst_28 {dimension_numbers = #tpu.dot_dimension_numbers<[1], [0], [0], [1], [0, 0, 1, 1], [], []>} : vector<8x8xf32>, vector<8x32xf32>, vector<8x32xf32> -> vector<8x32xf32>
    %70 = arith.addf %50, %69 : vector<8x32xf32>
    %71 = vector.extract_strided_slice %7 {offsets = [0, 24], sizes = [8, 8], strides = [1, 1]} : vector<8x32xf32> to vector<8x8xf32>
    %72 = vector.extract_strided_slice %8 {offsets = [0, 24], sizes = [8, 8], strides = [1, 1]} : vector<8x32xf32> to vector<8x8xf32>
    %73 = vector.extract_strided_slice %9 {offsets = [0, 24], sizes = [8, 8], strides = [1, 1]} : vector<8x32xf32> to vector<8x8xf32>
    %cst_29 = arith.constant dense<0.000000e+00> : vector<8x8xf32>
    %74 = tpu.matmul %71, %72, %cst_29 {dimension_numbers = #tpu.dot_dimension_numbers<[1], [1], [0], [0], [0, 0, 1, 0], [], []>} : vector<8x8xf32>, vector<8x8xf32>, vector<8x8xf32> -> vector<8x8xf32>
    %cst_30 = arith.constant 0.353553385 : f32
    %75 = vector.broadcast %cst_30 : f32 to vector<8x8xf32>
    %76 = arith.mulf %74, %75 : vector<8x8xf32>
    %cst_31 = arith.constant dense<0xFF800000> : vector<8xf32>
    %77 = vector.multi_reduction <maximumf>, %76, %cst_31 [1] : vector<8x8xf32> to vector<8xf32>
    %78 = vector.shape_cast %77 : vector<8xf32> to vector<8x1xf32>
    %79 = vector.broadcast %78 : vector<8x1xf32> to vector<8x8xf32>
    %80 = arith.subf %76, %79 : vector<8x8xf32>
    %81 = math.exp %80 : vector<8x8xf32>
    %cst_32 = arith.constant dense<0.000000e+00> : vector<8xf32>
    %82 = vector.multi_reduction <add>, %81, %cst_32 [1] : vector<8x8xf32> to vector<8xf32>
    %83 = vector.shape_cast %82 : vector<8xf32> to vector<8x1xf32>
    %84 = tpu.reciprocal %83 {approx = true} : vector<8x1xf32> -> vector<8x1xf32>
    %85 = vector.broadcast %84 : vector<8x1xf32> to vector<8x8xf32>
    %86 = arith.mulf %81, %85 : vector<8x8xf32>
    %cst_33 = arith.constant dense<0.000000e+00> : vector<8x8xf32>
    %87 = tpu.matmul %86, %73, %cst_33 {dimension_numbers = #tpu.dot_dimension_numbers<[1], [0], [0], [1], [0, 0, 1, 1], [], []>} : vector<8x8xf32>, vector<8x8xf32>, vector<8x8xf32> -> vector<8x8xf32>
    %c24 = arith.constant 24 : index
    %c0_34 = arith.constant 0 : index
    %88 = vector.load %arg5[%c24, %c0_34] : memref<32x32xf32, #tpu.memory_space<vmem>>, vector<8x32xf32>
    %cst_35 = arith.constant dense<0.000000e+00> : vector<8x32xf32>
    %89 = tpu.matmul %87, %88, %cst_35 {dimension_numbers = #tpu.dot_dimension_numbers<[1], [0], [0], [1], [0, 0, 1, 1], [], []>} : vector<8x8xf32>, vector<8x32xf32>, vector<8x32xf32> -> vector<8x32xf32>
    %90 = arith.addf %70, %89 : vector<8x32xf32>
    %91 = arith.addf %1, %90 : vector<8x32xf32>
    %c0_36 = arith.constant 0 : index
    %c0_37 = arith.constant 0 : index
    %92 = vector.load %arg6[%c0_36, %c0_37] : memref<1x32xf32, #tpu.memory_space<vmem>>, vector<1x32xf32>
    %93 = vector.broadcast %92 : vector<1x32xf32> to vector<8x32xf32>
    %94 = arith.addf %91, %93 : vector<8x32xf32>
    %cst_38 = arith.constant dense<0.000000e+00> : vector<8xf32>
    %95 = vector.multi_reduction <add>, %94, %cst_38 [1] : vector<8x32xf32> to vector<8xf32>
    %96 = vector.shape_cast %95 : vector<8xf32> to vector<8x1xf32>
    %cst_39 = arith.constant 3.200000e+01 : f32
    %97 = vector.broadcast %cst_39 : f32 to vector<8x1xf32>
    %98 = arith.divf %96, %97 : vector<8x1xf32>
    %99 = vector.broadcast %98 : vector<8x1xf32> to vector<8x32xf32>
    %100 = arith.subf %94, %99 : vector<8x32xf32>
    %101 = vector.broadcast %98 : vector<8x1xf32> to vector<8x32xf32>
    %102 = arith.subf %94, %101 : vector<8x32xf32>
    %103 = arith.mulf %100, %102 : vector<8x32xf32>
    %cst_40 = arith.constant dense<0.000000e+00> : vector<8xf32>
    %104 = vector.multi_reduction <add>, %103, %cst_40 [1] : vector<8x32xf32> to vector<8xf32>
    %105 = vector.shape_cast %104 : vector<8xf32> to vector<8x1xf32>
    %cst_41 = arith.constant 3.200000e+01 : f32
    %106 = vector.broadcast %cst_41 : f32 to vector<8x1xf32>
    %107 = arith.divf %105, %106 : vector<8x1xf32>
    %108 = vector.broadcast %98 : vector<8x1xf32> to vector<8x32xf32>
    %109 = arith.subf %94, %108 : vector<8x32xf32>
    %cst_42 = arith.constant 9.99999974E-6 : f32
    %110 = vector.broadcast %cst_42 : f32 to vector<8x1xf32>
    %111 = arith.addf %107, %110 : vector<8x1xf32>
    %112 = math.rsqrt %111 : vector<8x1xf32>
    %113 = vector.broadcast %112 : vector<8x1xf32> to vector<8x32xf32>
    %114 = arith.mulf %109, %113 : vector<8x32xf32>
    %c0_43 = arith.constant 0 : index
    %c0_44 = arith.constant 0 : index
    %115 = vector.load %arg7[%c0_43, %c0_44] : memref<1x32xf32, #tpu.memory_space<vmem>>, vector<1x32xf32>
    %116 = vector.broadcast %115 : vector<1x32xf32> to vector<8x32xf32>
    %117 = arith.mulf %114, %116 : vector<8x32xf32>
    %c0_45 = arith.constant 0 : index
    %c0_46 = arith.constant 0 : index
    %118 = vector.load %arg8[%c0_45, %c0_46] : memref<1x32xf32, #tpu.memory_space<vmem>>, vector<1x32xf32>
    %119 = vector.broadcast %118 : vector<1x32xf32> to vector<8x32xf32>
    %120 = arith.addf %117, %119 : vector<8x32xf32>
    %c0_47 = arith.constant 0 : index
    %c0_48 = arith.constant 0 : index
    %c0_49 = arith.constant 0 : index
    %121 = vector.load %arg9[%c0_47, %c0_48, %c0_49] : memref<1x8x32xf32, #tpu.memory_space<vmem>>, vector<1x8x32xf32>
    %122 = vector.shape_cast %121 : vector<1x8x32xf32> to vector<8x32xf32>
    %123 = vector.shape_cast %120 : vector<8x32xf32> to vector<1x8x32xf32>
    tpu.vector_store %arg9[%c0_47, %c0_48, %c0_49], %123 {strides = array<i32>} : memref<1x8x32xf32, #tpu.memory_space<vmem>>, vector<1x8x32xf32>,
    return
  }
  func.func @transform_0(%arg0: i32) -> (i32, i32, i32) {
    %c0_i32 = arith.constant 0 : i32
    %c0_i32_0 = arith.constant 0 : i32
    %c0_i32_1 = arith.constant 0 : i32
    return %arg0, %c0_i32, %c0_i32_0 : i32, i32, i32
  }
  func.func @transform_1(%arg0: i32) -> (i32, i32, i32) {
    %c0_i32 = arith.constant 0 : i32
    %c0_i32_0 = arith.constant 0 : i32
    %c0_i32_1 = arith.constant 0 : i32
    return %arg0, %c0_i32, %c0_i32_0 : i32, i32, i32
  }
  func.func @transform_2(%arg0: i32) -> (i32, i32) {
    %c0_i32 = arith.constant 0 : i32
    %c0_i32_0 = arith.constant 0 : i32
    %c0_i32_1 = arith.constant 0 : i32
    return %c0_i32, %c0_i32_0 : i32, i32
  }
  func.func @transform_3(%arg0: i32) -> (i32, i32) {
    %c0_i32 = arith.constant 0 : i32
    %c0_i32_0 = arith.constant 0 : i32
    %c0_i32_1 = arith.constant 0 : i32
    return %c0_i32, %c0_i32_0 : i32, i32
  }
  func.func @transform_4(%arg0: i32) -> (i32, i32) {
    %c0_i32 = arith.constant 0 : i32
    %c0_i32_0 = arith.constant 0 : i32
    %c0_i32_1 = arith.constant 0 : i32
    return %c0_i32, %c0_i32_0 : i32, i32
  }
  func.func @transform_5(%arg0: i32) -> (i32, i32) {
    %c0_i32 = arith.constant 0 : i32
    %c0_i32_0 = arith.constant 0 : i32
    %c0_i32_1 = arith.constant 0 : i32
    return %c0_i32, %c0_i32_0 : i32, i32
  }
  func.func @transform_6(%arg0: i32) -> (i32, i32) {
    %c0_i32 = arith.constant 0 : i32
    %c0_i32_0 = arith.constant 0 : i32
    %c0_i32_1 = arith.constant 0 : i32
    return %c0_i32, %c0_i32_0 : i32, i32
  }
  func.func @transform_7(%arg0: i32) -> (i32, i32) {
    %c0_i32 = arith.constant 0 : i32
    %c0_i32_0 = arith.constant 0 : i32
    %c0_i32_1 = arith.constant 0 : i32
    return %c0_i32, %c0_i32_0 : i32, i32
  }
  func.func @transform_8(%arg0: i32) -> (i32, i32, i32) {
    %c0_i32 = arith.constant 0 : i32
    %c0_i32_0 = arith.constant 0 : i32
    %c0_i32_1 = arith.constant 0 : i32
    return %arg0, %c0_i32, %c0_i32_0 : i32, i32, i32
  }
}

module attributes {stable_mosaic.version = 11 : i64} {
  func.func @_mha_ln_kernel(%arg0: i32, %arg1: memref<1x8x32xf32, #tpu.memory_space<vmem>>, %arg2: memref<1x8x32xf32, #tpu.memory_space<vmem>>, %arg3: memref<32x96xf32, #tpu.memory_space<vmem>>, %arg4: memref<1x96xf32, #tpu.memory_space<vmem>>, %arg5: memref<32x32xf32, #tpu.memory_space<vmem>>, %arg6: memref<1x32xf32, #tpu.memory_space<vmem>>, %arg7: memref<1x32xf32, #tpu.memory_space<vmem>>, %arg8: memref<1x32xf32, #tpu.memory_space<vmem>>, %arg9: memref<1x8x32xf32, #tpu.memory_space<vmem>>) attributes {dimension_semantics = [#tpu.dimension_semantics<parallel>], iteration_bounds = array<i64: 2>, scalar_prefetch = 0 : i64, scratch_operands = 0 : i64, tpu.core_type = #tpu.core_type<tc>, window_params = [{transform_indices = @transform_0, window_bounds = array<i64: 1, 8, 32>}, {transform_indices = @transform_1, window_bounds = array<i64: 1, 8, 32>}, {pipeline_mode = #tpu.pipeline_mode<synchronous>, transform_indices = @transform_2, window_bounds = array<i64: 32, 96>}, {pipeline_mode = #tpu.pipeline_mode<synchronous>, transform_indices = @transform_3, window_bounds = array<i64: 1, 96>}, {pipeline_mode = #tpu.pipeline_mode<synchronous>, transform_indices = @transform_4, window_bounds = array<i64: 32, 32>}, {pipeline_mode = #tpu.pipeline_mode<synchronous>, transform_indices = @transform_5, window_bounds = array<i64: 1, 32>}, {pipeline_mode = #tpu.pipeline_mode<synchronous>, transform_indices = @transform_6, window_bounds = array<i64: 1, 32>}, {pipeline_mode = #tpu.pipeline_mode<synchronous>, transform_indices = @transform_7, window_bounds = array<i64: 1, 32>}, {transform_indices = @transform_8, window_bounds = array<i64: 1, 8, 32>}]} {
    %c0 = arith.constant 0 : index
    %c0_0 = arith.constant 0 : index
    %c0_1 = arith.constant 0 : index
    %0 = vector.load %arg1[%c0, %c0_0, %c0_1] : memref<1x8x32xf32, #tpu.memory_space<vmem>>, vector<1x8x32xf32>
    %1 = vector.shape_cast %0 : vector<1x8x32xf32> to vector<8x32xf32>
    %c0_2 = arith.constant 0 : index
    %c0_3 = arith.constant 0 : index
    %c0_4 = arith.constant 0 : index
    %2 = vector.load %arg2[%c0_2, %c0_3, %c0_4] : memref<1x8x32xf32, #tpu.memory_space<vmem>>, vector<1x8x32xf32>
    %3 = vector.shape_cast %2 : vector<1x8x32xf32> to vector<8x32xf32>
    %c0_5 = arith.constant 0 : index
    %c0_6 = arith.constant 0 : index
    %4 = vector.load %arg3[%c0_5, %c0_6] : memref<32x96xf32, #tpu.memory_space<vmem>>, vector<32x32xf32>
    %cst = arith.constant dense<0.000000e+00> : vector<8x32xf32>
    %5 = tpu.matmul %1, %4, %cst {dimension_numbers = #tpu.dot_dimension_numbers<[1], [0], [0], [1], [0, 0, 1, 1], [], []>} : vector<8x32xf32>, vector<32x32xf32>, vector<8x32xf32> -> vector<8x32xf32>
    %c0_7 = arith.constant 0 : index
    %c0_8 = arith.constant 0 : index
    %6 = vector.load %arg4[%c0_7, %c0_8] : memref<1x96xf32, #tpu.memory_space<vmem>>, vector<1x32xf32>
    %7 = vector.broadcast %6 : vector<1x32xf32> to vector<8x32xf32>
    %8 = arith.addf %5, %7 : vector<8x32xf32>
    %c0_9 = arith.constant 0 : index
    %c32 = arith.constant 32 : index
    %9 = vector.load %arg3[%c0_9, %c32] : memref<32x96xf32, #tpu.memory_space<vmem>>, vector<32x64xf32>
    %cst_10 = arith.constant dense<0.000000e+00> : vector<8x64xf32>
    %10 = tpu.matmul %3, %9, %cst_10 {dimension_numbers = #tpu.dot_dimension_numbers<[1], [0], [0], [1], [0, 0, 1, 1], [], []>} : vector<8x32xf32>, vector<32x64xf32>, vector<8x64xf32> -> vector<8x64xf32>
    %c0_11 = arith.constant 0 : index
    %c32_12 = arith.constant 32 : index
    %11 = vector.load %arg4[%c0_11, %c32_12] : memref<1x96xf32, #tpu.memory_space<vmem>>, vector<1x64xf32>
    %12 = vector.broadcast %11 : vector<1x64xf32> to vector<8x64xf32>
    %13 = arith.addf %10, %12 : vector<8x64xf32>
    %14 = vector.extract_strided_slice %13 {offsets = [0, 0], sizes = [8, 32], strides = [1, 1]} : vector<8x64xf32> to vector<8x32xf32>
    %15 = vector.extract_strided_slice %13 {offsets = [0, 32], sizes = [8, 32], strides = [1, 1]} : vector<8x64xf32> to vector<8x32xf32>
    %cst_13 = arith.constant 0.000000e+00 : f32
    %16 = vector.broadcast %cst_13 : f32 to vector<8x32xf32>
    %17 = vector.extract_strided_slice %8 {offsets = [0, 0], sizes = [8, 8], strides = [1, 1]} : vector<8x32xf32> to vector<8x8xf32>
    %18 = vector.extract_strided_slice %14 {offsets = [0, 0], sizes = [8, 8], strides = [1, 1]} : vector<8x32xf32> to vector<8x8xf32>
    %19 = vector.extract_strided_slice %15 {offsets = [0, 0], sizes = [8, 8], strides = [1, 1]} : vector<8x32xf32> to vector<8x8xf32>
    %cst_14 = arith.constant dense<0.000000e+00> : vector<8x8xf32>
    %20 = tpu.matmul %17, %18, %cst_14 {dimension_numbers = #tpu.dot_dimension_numbers<[1], [1], [0], [0], [0, 0, 1, 0], [], []>} : vector<8x8xf32>, vector<8x8xf32>, vector<8x8xf32> -> vector<8x8xf32>
    %cst_15 = arith.constant 0.353553385 : f32
    %21 = vector.broadcast %cst_15 : f32 to vector<8x8xf32>
    %22 = arith.mulf %20, %21 : vector<8x8xf32>
    %cst_16 = arith.constant dense<0xFF800000> : vector<8xf32>
    %23 = vector.multi_reduction <maximumf>, %22, %cst_16 [1] : vector<8x8xf32> to vector<8xf32>
    %24 = vector.shape_cast %23 : vector<8xf32> to vector<8x1xf32>
    %25 = vector.broadcast %24 : vector<8x1xf32> to vector<8x8xf32>
    %26 = arith.subf %22, %25 : vector<8x8xf32>
    %27 = math.exp %26 : vector<8x8xf32>
    %cst_17 = arith.constant dense<0.000000e+00> : vector<8xf32>
    %28 = vector.multi_reduction <add>, %27, %cst_17 [1] : vector<8x8xf32> to vector<8xf32>
    %29 = vector.shape_cast %28 : vector<8xf32> to vector<8x1xf32>
    %30 = tpu.reciprocal %29 {approx = true} : vector<8x1xf32> -> vector<8x1xf32>
    %31 = vector.broadcast %30 : vector<8x1xf32> to vector<8x8xf32>
    %32 = arith.mulf %27, %31 : vector<8x8xf32>
    %cst_18 = arith.constant dense<0.000000e+00> : vector<8x8xf32>
    %33 = tpu.matmul %32, %19, %cst_18 {dimension_numbers = #tpu.dot_dimension_numbers<[1], [0], [0], [1], [0, 0, 1, 1], [], []>} : vector<8x8xf32>, vector<8x8xf32>, vector<8x8xf32> -> vector<8x8xf32>
    %c0_19 = arith.constant 0 : index
    %c0_20 = arith.constant 0 : index
    %34 = vector.load %arg5[%c0_19, %c0_20] : memref<32x32xf32, #tpu.memory_space<vmem>>, vector<8x32xf32>
    %cst_21 = arith.constant dense<0.000000e+00> : vector<8x32xf32>
    %35 = tpu.matmul %33, %34, %cst_21 {dimension_numbers = #tpu.dot_dimension_numbers<[1], [0], [0], [1], [0, 0, 1, 1], [], []>} : vector<8x8xf32>, vector<8x32xf32>, vector<8x32xf32> -> vector<8x32xf32>
    %36 = arith.addf %16, %35 : vector<8x32xf32>
    %37 = vector.extract_strided_slice %8 {offsets = [0, 8], sizes = [8, 8], strides = [1, 1]} : vector<8x32xf32> to vector<8x8xf32>
    %38 = vector.extract_strided_slice %14 {offsets = [0, 8], sizes = [8, 8], strides = [1, 1]} : vector<8x32xf32> to vector<8x8xf32>
    %39 = vector.extract_strided_slice %15 {offsets = [0, 8], sizes = [8, 8], strides = [1, 1]} : vector<8x32xf32> to vector<8x8xf32>
    %cst_22 = arith.constant dense<0.000000e+00> : vector<8x8xf32>
    %40 = tpu.matmul %37, %38, %cst_22 {dimension_numbers = #tpu.dot_dimension_numbers<[1], [1], [0], [0], [0, 0, 1, 0], [], []>} : vector<8x8xf32>, vector<8x8xf32>, vector<8x8xf32> -> vector<8x8xf32>
    %cst_23 = arith.constant 0.353553385 : f32
    %41 = vector.broadcast %cst_23 : f32 to vector<8x8xf32>
    %42 = arith.mulf %40, %41 : vector<8x8xf32>
    %cst_24 = arith.constant dense<0xFF800000> : vector<8xf32>
    %43 = vector.multi_reduction <maximumf>, %42, %cst_24 [1] : vector<8x8xf32> to vector<8xf32>
    %44 = vector.shape_cast %43 : vector<8xf32> to vector<8x1xf32>
    %45 = vector.broadcast %44 : vector<8x1xf32> to vector<8x8xf32>
    %46 = arith.subf %42, %45 : vector<8x8xf32>
    %47 = math.exp %46 : vector<8x8xf32>
    %cst_25 = arith.constant dense<0.000000e+00> : vector<8xf32>
    %48 = vector.multi_reduction <add>, %47, %cst_25 [1] : vector<8x8xf32> to vector<8xf32>
    %49 = vector.shape_cast %48 : vector<8xf32> to vector<8x1xf32>
    %50 = tpu.reciprocal %49 {approx = true} : vector<8x1xf32> -> vector<8x1xf32>
    %51 = vector.broadcast %50 : vector<8x1xf32> to vector<8x8xf32>
    %52 = arith.mulf %47, %51 : vector<8x8xf32>
    %cst_26 = arith.constant dense<0.000000e+00> : vector<8x8xf32>
    %53 = tpu.matmul %52, %39, %cst_26 {dimension_numbers = #tpu.dot_dimension_numbers<[1], [0], [0], [1], [0, 0, 1, 1], [], []>} : vector<8x8xf32>, vector<8x8xf32>, vector<8x8xf32> -> vector<8x8xf32>
    %c8 = arith.constant 8 : index
    %c0_27 = arith.constant 0 : index
    %54 = vector.load %arg5[%c8, %c0_27] : memref<32x32xf32, #tpu.memory_space<vmem>>, vector<8x32xf32>
    %cst_28 = arith.constant dense<0.000000e+00> : vector<8x32xf32>
    %55 = tpu.matmul %53, %54, %cst_28 {dimension_numbers = #tpu.dot_dimension_numbers<[1], [0], [0], [1], [0, 0, 1, 1], [], []>} : vector<8x8xf32>, vector<8x32xf32>, vector<8x32xf32> -> vector<8x32xf32>
    %56 = arith.addf %36, %55 : vector<8x32xf32>
    %57 = vector.extract_strided_slice %8 {offsets = [0, 16], sizes = [8, 8], strides = [1, 1]} : vector<8x32xf32> to vector<8x8xf32>
    %58 = vector.extract_strided_slice %14 {offsets = [0, 16], sizes = [8, 8], strides = [1, 1]} : vector<8x32xf32> to vector<8x8xf32>
    %59 = vector.extract_strided_slice %15 {offsets = [0, 16], sizes = [8, 8], strides = [1, 1]} : vector<8x32xf32> to vector<8x8xf32>
    %cst_29 = arith.constant dense<0.000000e+00> : vector<8x8xf32>
    %60 = tpu.matmul %57, %58, %cst_29 {dimension_numbers = #tpu.dot_dimension_numbers<[1], [1], [0], [0], [0, 0, 1, 0], [], []>} : vector<8x8xf32>, vector<8x8xf32>, vector<8x8xf32> -> vector<8x8xf32>
    %cst_30 = arith.constant 0.353553385 : f32
    %61 = vector.broadcast %cst_30 : f32 to vector<8x8xf32>
    %62 = arith.mulf %60, %61 : vector<8x8xf32>
    %cst_31 = arith.constant dense<0xFF800000> : vector<8xf32>
    %63 = vector.multi_reduction <maximumf>, %62, %cst_31 [1] : vector<8x8xf32> to vector<8xf32>
    %64 = vector.shape_cast %63 : vector<8xf32> to vector<8x1xf32>
    %65 = vector.broadcast %64 : vector<8x1xf32> to vector<8x8xf32>
    %66 = arith.subf %62, %65 : vector<8x8xf32>
    %67 = math.exp %66 : vector<8x8xf32>
    %cst_32 = arith.constant dense<0.000000e+00> : vector<8xf32>
    %68 = vector.multi_reduction <add>, %67, %cst_32 [1] : vector<8x8xf32> to vector<8xf32>
    %69 = vector.shape_cast %68 : vector<8xf32> to vector<8x1xf32>
    %70 = tpu.reciprocal %69 {approx = true} : vector<8x1xf32> -> vector<8x1xf32>
    %71 = vector.broadcast %70 : vector<8x1xf32> to vector<8x8xf32>
    %72 = arith.mulf %67, %71 : vector<8x8xf32>
    %cst_33 = arith.constant dense<0.000000e+00> : vector<8x8xf32>
    %73 = tpu.matmul %72, %59, %cst_33 {dimension_numbers = #tpu.dot_dimension_numbers<[1], [0], [0], [1], [0, 0, 1, 1], [], []>} : vector<8x8xf32>, vector<8x8xf32>, vector<8x8xf32> -> vector<8x8xf32>
    %c16 = arith.constant 16 : index
    %c0_34 = arith.constant 0 : index
    %74 = vector.load %arg5[%c16, %c0_34] : memref<32x32xf32, #tpu.memory_space<vmem>>, vector<8x32xf32>
    %cst_35 = arith.constant dense<0.000000e+00> : vector<8x32xf32>
    %75 = tpu.matmul %73, %74, %cst_35 {dimension_numbers = #tpu.dot_dimension_numbers<[1], [0], [0], [1], [0, 0, 1, 1], [], []>} : vector<8x8xf32>, vector<8x32xf32>, vector<8x32xf32> -> vector<8x32xf32>
    %76 = arith.addf %56, %75 : vector<8x32xf32>
    %77 = vector.extract_strided_slice %8 {offsets = [0, 24], sizes = [8, 8], strides = [1, 1]} : vector<8x32xf32> to vector<8x8xf32>
    %78 = vector.extract_strided_slice %14 {offsets = [0, 24], sizes = [8, 8], strides = [1, 1]} : vector<8x32xf32> to vector<8x8xf32>
    %79 = vector.extract_strided_slice %15 {offsets = [0, 24], sizes = [8, 8], strides = [1, 1]} : vector<8x32xf32> to vector<8x8xf32>
    %cst_36 = arith.constant dense<0.000000e+00> : vector<8x8xf32>
    %80 = tpu.matmul %77, %78, %cst_36 {dimension_numbers = #tpu.dot_dimension_numbers<[1], [1], [0], [0], [0, 0, 1, 0], [], []>} : vector<8x8xf32>, vector<8x8xf32>, vector<8x8xf32> -> vector<8x8xf32>
    %cst_37 = arith.constant 0.353553385 : f32
    %81 = vector.broadcast %cst_37 : f32 to vector<8x8xf32>
    %82 = arith.mulf %80, %81 : vector<8x8xf32>
    %cst_38 = arith.constant dense<0xFF800000> : vector<8xf32>
    %83 = vector.multi_reduction <maximumf>, %82, %cst_38 [1] : vector<8x8xf32> to vector<8xf32>
    %84 = vector.shape_cast %83 : vector<8xf32> to vector<8x1xf32>
    %85 = vector.broadcast %84 : vector<8x1xf32> to vector<8x8xf32>
    %86 = arith.subf %82, %85 : vector<8x8xf32>
    %87 = math.exp %86 : vector<8x8xf32>
    %cst_39 = arith.constant dense<0.000000e+00> : vector<8xf32>
    %88 = vector.multi_reduction <add>, %87, %cst_39 [1] : vector<8x8xf32> to vector<8xf32>
    %89 = vector.shape_cast %88 : vector<8xf32> to vector<8x1xf32>
    %90 = tpu.reciprocal %89 {approx = true} : vector<8x1xf32> -> vector<8x1xf32>
    %91 = vector.broadcast %90 : vector<8x1xf32> to vector<8x8xf32>
    %92 = arith.mulf %87, %91 : vector<8x8xf32>
    %cst_40 = arith.constant dense<0.000000e+00> : vector<8x8xf32>
    %93 = tpu.matmul %92, %79, %cst_40 {dimension_numbers = #tpu.dot_dimension_numbers<[1], [0], [0], [1], [0, 0, 1, 1], [], []>} : vector<8x8xf32>, vector<8x8xf32>, vector<8x8xf32> -> vector<8x8xf32>
    %c24 = arith.constant 24 : index
    %c0_41 = arith.constant 0 : index
    %94 = vector.load %arg5[%c24, %c0_41] : memref<32x32xf32, #tpu.memory_space<vmem>>, vector<8x32xf32>
    %cst_42 = arith.constant dense<0.000000e+00> : vector<8x32xf32>
    %95 = tpu.matmul %93, %94, %cst_42 {dimension_numbers = #tpu.dot_dimension_numbers<[1], [0], [0], [1], [0, 0, 1, 1], [], []>} : vector<8x8xf32>, vector<8x32xf32>, vector<8x32xf32> -> vector<8x32xf32>
    %96 = arith.addf %76, %95 : vector<8x32xf32>
    %97 = arith.addf %1, %96 : vector<8x32xf32>
    %c0_43 = arith.constant 0 : index
    %c0_44 = arith.constant 0 : index
    %98 = vector.load %arg6[%c0_43, %c0_44] : memref<1x32xf32, #tpu.memory_space<vmem>>, vector<1x32xf32>
    %99 = vector.broadcast %98 : vector<1x32xf32> to vector<8x32xf32>
    %100 = arith.addf %97, %99 : vector<8x32xf32>
    %cst_45 = arith.constant dense<0.000000e+00> : vector<8xf32>
    %101 = vector.multi_reduction <add>, %100, %cst_45 [1] : vector<8x32xf32> to vector<8xf32>
    %102 = vector.shape_cast %101 : vector<8xf32> to vector<8x1xf32>
    %cst_46 = arith.constant 3.200000e+01 : f32
    %103 = vector.broadcast %cst_46 : f32 to vector<8x1xf32>
    %104 = arith.divf %102, %103 : vector<8x1xf32>
    %105 = vector.broadcast %104 : vector<8x1xf32> to vector<8x32xf32>
    %106 = arith.subf %100, %105 : vector<8x32xf32>
    %107 = vector.broadcast %104 : vector<8x1xf32> to vector<8x32xf32>
    %108 = arith.subf %100, %107 : vector<8x32xf32>
    %109 = arith.mulf %106, %108 : vector<8x32xf32>
    %cst_47 = arith.constant dense<0.000000e+00> : vector<8xf32>
    %110 = vector.multi_reduction <add>, %109, %cst_47 [1] : vector<8x32xf32> to vector<8xf32>
    %111 = vector.shape_cast %110 : vector<8xf32> to vector<8x1xf32>
    %cst_48 = arith.constant 3.200000e+01 : f32
    %112 = vector.broadcast %cst_48 : f32 to vector<8x1xf32>
    %113 = arith.divf %111, %112 : vector<8x1xf32>
    %114 = vector.broadcast %104 : vector<8x1xf32> to vector<8x32xf32>
    %115 = arith.subf %100, %114 : vector<8x32xf32>
    %cst_49 = arith.constant 9.99999974E-6 : f32
    %116 = vector.broadcast %cst_49 : f32 to vector<8x1xf32>
    %117 = arith.addf %113, %116 : vector<8x1xf32>
    %118 = math.rsqrt %117 : vector<8x1xf32>
    %119 = vector.broadcast %118 : vector<8x1xf32> to vector<8x32xf32>
    %120 = arith.mulf %115, %119 : vector<8x32xf32>
    %c0_50 = arith.constant 0 : index
    %c0_51 = arith.constant 0 : index
    %121 = vector.load %arg7[%c0_50, %c0_51] : memref<1x32xf32, #tpu.memory_space<vmem>>, vector<1x32xf32>
    %122 = vector.broadcast %121 : vector<1x32xf32> to vector<8x32xf32>
    %123 = arith.mulf %120, %122 : vector<8x32xf32>
    %c0_52 = arith.constant 0 : index
    %c0_53 = arith.constant 0 : index
    %124 = vector.load %arg8[%c0_52, %c0_53] : memref<1x32xf32, #tpu.memory_space<vmem>>, vector<1x32xf32>
    %125 = vector.broadcast %124 : vector<1x32xf32> to vector<8x32xf32>
    %126 = arith.addf %123, %125 : vector<8x32xf32>
    %c0_54 = arith.constant 0 : index
    %c0_55 = arith.constant 0 : index
    %c0_56 = arith.constant 0 : index
    %127 = vector.load %arg9[%c0_54, %c0_55, %c0_56] : memref<1x8x32xf32, #tpu.memory_space<vmem>>, vector<1x8x32xf32>
    %128 = vector.shape_cast %127 : vector<1x8x32xf32> to vector<8x32xf32>
    %129 = vector.shape_cast %126 : vector<8x32xf32> to vector<1x8x32xf32>
    tpu.vector_store %arg9[%c0_54, %c0_55, %c0_56], %129 {strides = array<i32>} : memref<1x8x32xf32, #tpu.memory_space<vmem>>, vector<1x8x32xf32>,
    return
  }
  func.func @transform_0(%arg0: i32) -> (i32, i32, i32) {
    %c0_i32 = arith.constant 0 : i32
    %c0_i32_0 = arith.constant 0 : i32
    %c0_i32_1 = arith.constant 0 : i32
    return %arg0, %c0_i32, %c0_i32_0 : i32, i32, i32
  }
  func.func @transform_1(%arg0: i32) -> (i32, i32, i32) {
    %c0_i32 = arith.constant 0 : i32
    %c0_i32_0 = arith.constant 0 : i32
    %c0_i32_1 = arith.constant 0 : i32
    return %arg0, %c0_i32, %c0_i32_0 : i32, i32, i32
  }
  func.func @transform_2(%arg0: i32) -> (i32, i32) {
    %c0_i32 = arith.constant 0 : i32
    %c0_i32_0 = arith.constant 0 : i32
    %c0_i32_1 = arith.constant 0 : i32
    return %c0_i32, %c0_i32_0 : i32, i32
  }
  func.func @transform_3(%arg0: i32) -> (i32, i32) {
    %c0_i32 = arith.constant 0 : i32
    %c0_i32_0 = arith.constant 0 : i32
    %c0_i32_1 = arith.constant 0 : i32
    return %c0_i32, %c0_i32_0 : i32, i32
  }
  func.func @transform_4(%arg0: i32) -> (i32, i32) {
    %c0_i32 = arith.constant 0 : i32
    %c0_i32_0 = arith.constant 0 : i32
    %c0_i32_1 = arith.constant 0 : i32
    return %c0_i32, %c0_i32_0 : i32, i32
  }
  func.func @transform_5(%arg0: i32) -> (i32, i32) {
    %c0_i32 = arith.constant 0 : i32
    %c0_i32_0 = arith.constant 0 : i32
    %c0_i32_1 = arith.constant 0 : i32
    return %c0_i32, %c0_i32_0 : i32, i32
  }
  func.func @transform_6(%arg0: i32) -> (i32, i32) {
    %c0_i32 = arith.constant 0 : i32
    %c0_i32_0 = arith.constant 0 : i32
    %c0_i32_1 = arith.constant 0 : i32
    return %c0_i32, %c0_i32_0 : i32, i32
  }
  func.func @transform_7(%arg0: i32) -> (i32, i32) {
    %c0_i32 = arith.constant 0 : i32
    %c0_i32_0 = arith.constant 0 : i32
    %c0_i32_1 = arith.constant 0 : i32
    return %c0_i32, %c0_i32_0 : i32, i32
  }
  func.func @transform_8(%arg0: i32) -> (i32, i32, i32) {
    %c0_i32 = arith.constant 0 : i32
    %c0_i32_0 = arith.constant 0 : i32
    %c0_i32_1 = arith.constant 0 : i32
    return %arg0, %c0_i32, %c0_i32_0 : i32, i32, i32
  }
}

module attributes {stable_mosaic.version = 11 : i64} {
  func.func @_ffn_ln_kernel(%arg0: i32, %arg1: memref<16x32xf32, #tpu.memory_space<vmem>>, %arg2: memref<32x64xf32, #tpu.memory_space<vmem>>, %arg3: memref<1x64xf32, #tpu.memory_space<vmem>>, %arg4: memref<64x32xf32, #tpu.memory_space<vmem>>, %arg5: memref<1x32xf32, #tpu.memory_space<vmem>>, %arg6: memref<1x32xf32, #tpu.memory_space<vmem>>, %arg7: memref<1x32xf32, #tpu.memory_space<vmem>>, %arg8: memref<16x32xf32, #tpu.memory_space<vmem>>) attributes {dimension_semantics = [#tpu.dimension_semantics<parallel>], iteration_bounds = array<i64: 1>, scalar_prefetch = 0 : i64, scratch_operands = 0 : i64, tpu.core_type = #tpu.core_type<tc>, window_params = [{transform_indices = @transform_0, window_bounds = array<i64: 16, 32>}, {pipeline_mode = #tpu.pipeline_mode<synchronous>, transform_indices = @transform_1, window_bounds = array<i64: 32, 64>}, {pipeline_mode = #tpu.pipeline_mode<synchronous>, transform_indices = @transform_2, window_bounds = array<i64: 1, 64>}, {pipeline_mode = #tpu.pipeline_mode<synchronous>, transform_indices = @transform_3, window_bounds = array<i64: 64, 32>}, {pipeline_mode = #tpu.pipeline_mode<synchronous>, transform_indices = @transform_4, window_bounds = array<i64: 1, 32>}, {pipeline_mode = #tpu.pipeline_mode<synchronous>, transform_indices = @transform_5, window_bounds = array<i64: 1, 32>}, {pipeline_mode = #tpu.pipeline_mode<synchronous>, transform_indices = @transform_6, window_bounds = array<i64: 1, 32>}, {transform_indices = @transform_7, window_bounds = array<i64: 16, 32>}]} {
    %c0 = arith.constant 0 : index
    %c0_0 = arith.constant 0 : index
    %0 = vector.load %arg1[%c0, %c0_0] : memref<16x32xf32, #tpu.memory_space<vmem>>, vector<16x32xf32>
    %c0_1 = arith.constant 0 : index
    %c0_2 = arith.constant 0 : index
    %1 = vector.load %arg2[%c0_1, %c0_2] : memref<32x64xf32, #tpu.memory_space<vmem>>, vector<32x64xf32>
    %cst = arith.constant dense<0.000000e+00> : vector<16x64xf32>
    %2 = tpu.matmul %0, %1, %cst {dimension_numbers = #tpu.dot_dimension_numbers<[1], [0], [0], [1], [0, 0, 1, 1], [], []>} : vector<16x32xf32>, vector<32x64xf32>, vector<16x64xf32> -> vector<16x64xf32>
    %c0_3 = arith.constant 0 : index
    %c0_4 = arith.constant 0 : index
    %3 = vector.load %arg3[%c0_3, %c0_4] : memref<1x64xf32, #tpu.memory_space<vmem>>, vector<1x64xf32>
    %4 = vector.broadcast %3 : vector<1x64xf32> to vector<16x64xf32>
    %5 = arith.addf %2, %4 : vector<16x64xf32>
    %cst_5 = arith.constant 0.000000e+00 : f32
    %6 = vector.broadcast %cst_5 : f32 to vector<16x64xf32>
    %7 = arith.maximumf %5, %6 : vector<16x64xf32>
    %c0_6 = arith.constant 0 : index
    %c0_7 = arith.constant 0 : index
    %8 = vector.load %arg4[%c0_6, %c0_7] : memref<64x32xf32, #tpu.memory_space<vmem>>, vector<64x32xf32>
    %cst_8 = arith.constant dense<0.000000e+00> : vector<16x32xf32>
    %9 = tpu.matmul %7, %8, %cst_8 {dimension_numbers = #tpu.dot_dimension_numbers<[1], [0], [0], [1], [0, 0, 1, 1], [], []>} : vector<16x64xf32>, vector<64x32xf32>, vector<16x32xf32> -> vector<16x32xf32>
    %c0_9 = arith.constant 0 : index
    %c0_10 = arith.constant 0 : index
    %10 = vector.load %arg5[%c0_9, %c0_10] : memref<1x32xf32, #tpu.memory_space<vmem>>, vector<1x32xf32>
    %11 = vector.broadcast %10 : vector<1x32xf32> to vector<16x32xf32>
    %12 = arith.addf %9, %11 : vector<16x32xf32>
    %13 = arith.addf %0, %12 : vector<16x32xf32>
    %cst_11 = arith.constant dense<0.000000e+00> : vector<16xf32>
    %14 = vector.multi_reduction <add>, %13, %cst_11 [1] : vector<16x32xf32> to vector<16xf32>
    %15 = vector.shape_cast %14 : vector<16xf32> to vector<16x1xf32>
    %cst_12 = arith.constant 3.200000e+01 : f32
    %16 = vector.broadcast %cst_12 : f32 to vector<16x1xf32>
    %17 = arith.divf %15, %16 : vector<16x1xf32>
    %18 = vector.broadcast %17 : vector<16x1xf32> to vector<16x32xf32>
    %19 = arith.subf %13, %18 : vector<16x32xf32>
    %20 = vector.broadcast %17 : vector<16x1xf32> to vector<16x32xf32>
    %21 = arith.subf %13, %20 : vector<16x32xf32>
    %22 = arith.mulf %19, %21 : vector<16x32xf32>
    %cst_13 = arith.constant dense<0.000000e+00> : vector<16xf32>
    %23 = vector.multi_reduction <add>, %22, %cst_13 [1] : vector<16x32xf32> to vector<16xf32>
    %24 = vector.shape_cast %23 : vector<16xf32> to vector<16x1xf32>
    %cst_14 = arith.constant 3.200000e+01 : f32
    %25 = vector.broadcast %cst_14 : f32 to vector<16x1xf32>
    %26 = arith.divf %24, %25 : vector<16x1xf32>
    %27 = vector.broadcast %17 : vector<16x1xf32> to vector<16x32xf32>
    %28 = arith.subf %13, %27 : vector<16x32xf32>
    %cst_15 = arith.constant 9.99999974E-6 : f32
    %29 = vector.broadcast %cst_15 : f32 to vector<16x1xf32>
    %30 = arith.addf %26, %29 : vector<16x1xf32>
    %31 = math.rsqrt %30 : vector<16x1xf32>
    %32 = vector.broadcast %31 : vector<16x1xf32> to vector<16x32xf32>
    %33 = arith.mulf %28, %32 : vector<16x32xf32>
    %c0_16 = arith.constant 0 : index
    %c0_17 = arith.constant 0 : index
    %34 = vector.load %arg6[%c0_16, %c0_17] : memref<1x32xf32, #tpu.memory_space<vmem>>, vector<1x32xf32>
    %35 = vector.broadcast %34 : vector<1x32xf32> to vector<16x32xf32>
    %36 = arith.mulf %33, %35 : vector<16x32xf32>
    %c0_18 = arith.constant 0 : index
    %c0_19 = arith.constant 0 : index
    %37 = vector.load %arg7[%c0_18, %c0_19] : memref<1x32xf32, #tpu.memory_space<vmem>>, vector<1x32xf32>
    %38 = vector.broadcast %37 : vector<1x32xf32> to vector<16x32xf32>
    %39 = arith.addf %36, %38 : vector<16x32xf32>
    %c0_20 = arith.constant 0 : index
    %c0_21 = arith.constant 0 : index
    %40 = vector.load %arg8[%c0_20, %c0_21] : memref<16x32xf32, #tpu.memory_space<vmem>>, vector<16x32xf32>
    tpu.vector_store %arg8[%c0_20, %c0_21], %39 {strides = array<i32>} : memref<16x32xf32, #tpu.memory_space<vmem>>, vector<16x32xf32>,
    return
  }
  func.func @transform_0(%arg0: i32) -> (i32, i32) {
    %c0_i32 = arith.constant 0 : i32
    %c0_i32_0 = arith.constant 0 : i32
    return %arg0, %c0_i32 : i32, i32
  }
  func.func @transform_1(%arg0: i32) -> (i32, i32) {
    %c0_i32 = arith.constant 0 : i32
    %c0_i32_0 = arith.constant 0 : i32
    %c0_i32_1 = arith.constant 0 : i32
    return %c0_i32, %c0_i32_0 : i32, i32
  }
  func.func @transform_2(%arg0: i32) -> (i32, i32) {
    %c0_i32 = arith.constant 0 : i32
    %c0_i32_0 = arith.constant 0 : i32
    %c0_i32_1 = arith.constant 0 : i32
    return %c0_i32, %c0_i32_0 : i32, i32
  }
  func.func @transform_3(%arg0: i32) -> (i32, i32) {
    %c0_i32 = arith.constant 0 : i32
    %c0_i32_0 = arith.constant 0 : i32
    %c0_i32_1 = arith.constant 0 : i32
    return %c0_i32, %c0_i32_0 : i32, i32
  }
  func.func @transform_4(%arg0: i32) -> (i32, i32) {
    %c0_i32 = arith.constant 0 : i32
    %c0_i32_0 = arith.constant 0 : i32
    %c0_i32_1 = arith.constant 0 : i32
    return %c0_i32, %c0_i32_0 : i32, i32
  }
  func.func @transform_5(%arg0: i32) -> (i32, i32) {
    %c0_i32 = arith.constant 0 : i32
    %c0_i32_0 = arith.constant 0 : i32
    %c0_i32_1 = arith.constant 0 : i32
    return %c0_i32, %c0_i32_0 : i32, i32
  }
  func.func @transform_6(%arg0: i32) -> (i32, i32) {
    %c0_i32 = arith.constant 0 : i32
    %c0_i32_0 = arith.constant 0 : i32
    %c0_i32_1 = arith.constant 0 : i32
    return %c0_i32, %c0_i32_0 : i32, i32
  }
  func.func @transform_7(%arg0: i32) -> (i32, i32) {
    %c0_i32 = arith.constant 0 : i32
    %c0_i32_0 = arith.constant 0 : i32
    return %arg0, %c0_i32 : i32, i32
  }
}

module attributes {stable_mosaic.version = 11 : i64} {
  func.func @_mha_ln_kernel(%arg0: i32, %arg1: memref<1x8x32xf32, #tpu.memory_space<vmem>>, %arg2: memref<1x8x32xf32, #tpu.memory_space<vmem>>, %arg3: memref<32x96xf32, #tpu.memory_space<vmem>>, %arg4: memref<1x96xf32, #tpu.memory_space<vmem>>, %arg5: memref<32x32xf32, #tpu.memory_space<vmem>>, %arg6: memref<1x32xf32, #tpu.memory_space<vmem>>, %arg7: memref<1x32xf32, #tpu.memory_space<vmem>>, %arg8: memref<1x32xf32, #tpu.memory_space<vmem>>, %arg9: memref<1x8x32xf32, #tpu.memory_space<vmem>>) attributes {dimension_semantics = [#tpu.dimension_semantics<parallel>], iteration_bounds = array<i64: 2>, scalar_prefetch = 0 : i64, scratch_operands = 0 : i64, tpu.core_type = #tpu.core_type<tc>, window_params = [{transform_indices = @transform_0, window_bounds = array<i64: 1, 8, 32>}, {transform_indices = @transform_1, window_bounds = array<i64: 1, 8, 32>}, {pipeline_mode = #tpu.pipeline_mode<synchronous>, transform_indices = @transform_2, window_bounds = array<i64: 32, 96>}, {pipeline_mode = #tpu.pipeline_mode<synchronous>, transform_indices = @transform_3, window_bounds = array<i64: 1, 96>}, {pipeline_mode = #tpu.pipeline_mode<synchronous>, transform_indices = @transform_4, window_bounds = array<i64: 32, 32>}, {pipeline_mode = #tpu.pipeline_mode<synchronous>, transform_indices = @transform_5, window_bounds = array<i64: 1, 32>}, {pipeline_mode = #tpu.pipeline_mode<synchronous>, transform_indices = @transform_6, window_bounds = array<i64: 1, 32>}, {pipeline_mode = #tpu.pipeline_mode<synchronous>, transform_indices = @transform_7, window_bounds = array<i64: 1, 32>}, {transform_indices = @transform_8, window_bounds = array<i64: 1, 8, 32>}]} {
    %c0 = arith.constant 0 : index
    %c0_0 = arith.constant 0 : index
    %c0_1 = arith.constant 0 : index
    %0 = vector.load %arg1[%c0, %c0_0, %c0_1] : memref<1x8x32xf32, #tpu.memory_space<vmem>>, vector<1x8x32xf32>
    %1 = vector.shape_cast %0 : vector<1x8x32xf32> to vector<8x32xf32>
    %c0_2 = arith.constant 0 : index
    %c0_3 = arith.constant 0 : index
    %2 = vector.load %arg3[%c0_2, %c0_3] : memref<32x96xf32, #tpu.memory_space<vmem>>, vector<32x96xf32>
    %cst = arith.constant dense<0.000000e+00> : vector<8x96xf32>
    %3 = tpu.matmul %1, %2, %cst {dimension_numbers = #tpu.dot_dimension_numbers<[1], [0], [0], [1], [0, 0, 1, 1], [], []>} : vector<8x32xf32>, vector<32x96xf32>, vector<8x96xf32> -> vector<8x96xf32>
    %c0_4 = arith.constant 0 : index
    %c0_5 = arith.constant 0 : index
    %4 = vector.load %arg4[%c0_4, %c0_5] : memref<1x96xf32, #tpu.memory_space<vmem>>, vector<1x96xf32>
    %5 = vector.broadcast %4 : vector<1x96xf32> to vector<8x96xf32>
    %6 = arith.addf %3, %5 : vector<8x96xf32>
    %7 = vector.extract_strided_slice %6 {offsets = [0, 0], sizes = [8, 32], strides = [1, 1]} : vector<8x96xf32> to vector<8x32xf32>
    %8 = vector.extract_strided_slice %6 {offsets = [0, 32], sizes = [8, 32], strides = [1, 1]} : vector<8x96xf32> to vector<8x32xf32>
    %9 = vector.extract_strided_slice %6 {offsets = [0, 64], sizes = [8, 32], strides = [1, 1]} : vector<8x96xf32> to vector<8x32xf32>
    %cst_6 = arith.constant 0.000000e+00 : f32
    %10 = vector.broadcast %cst_6 : f32 to vector<8x32xf32>
    %11 = vector.extract_strided_slice %7 {offsets = [0, 0], sizes = [8, 8], strides = [1, 1]} : vector<8x32xf32> to vector<8x8xf32>
    %12 = vector.extract_strided_slice %8 {offsets = [0, 0], sizes = [8, 8], strides = [1, 1]} : vector<8x32xf32> to vector<8x8xf32>
    %13 = vector.extract_strided_slice %9 {offsets = [0, 0], sizes = [8, 8], strides = [1, 1]} : vector<8x32xf32> to vector<8x8xf32>
    %cst_7 = arith.constant dense<0.000000e+00> : vector<8x8xf32>
    %14 = tpu.matmul %11, %12, %cst_7 {dimension_numbers = #tpu.dot_dimension_numbers<[1], [1], [0], [0], [0, 0, 1, 0], [], []>} : vector<8x8xf32>, vector<8x8xf32>, vector<8x8xf32> -> vector<8x8xf32>
    %cst_8 = arith.constant 0.353553385 : f32
    %15 = vector.broadcast %cst_8 : f32 to vector<8x8xf32>
    %16 = arith.mulf %14, %15 : vector<8x8xf32>
    %cst_9 = arith.constant dense<0xFF800000> : vector<8xf32>
    %17 = vector.multi_reduction <maximumf>, %16, %cst_9 [1] : vector<8x8xf32> to vector<8xf32>
    %18 = vector.shape_cast %17 : vector<8xf32> to vector<8x1xf32>
    %19 = vector.broadcast %18 : vector<8x1xf32> to vector<8x8xf32>
    %20 = arith.subf %16, %19 : vector<8x8xf32>
    %21 = math.exp %20 : vector<8x8xf32>
    %cst_10 = arith.constant dense<0.000000e+00> : vector<8xf32>
    %22 = vector.multi_reduction <add>, %21, %cst_10 [1] : vector<8x8xf32> to vector<8xf32>
    %23 = vector.shape_cast %22 : vector<8xf32> to vector<8x1xf32>
    %24 = tpu.reciprocal %23 {approx = true} : vector<8x1xf32> -> vector<8x1xf32>
    %25 = vector.broadcast %24 : vector<8x1xf32> to vector<8x8xf32>
    %26 = arith.mulf %21, %25 : vector<8x8xf32>
    %cst_11 = arith.constant dense<0.000000e+00> : vector<8x8xf32>
    %27 = tpu.matmul %26, %13, %cst_11 {dimension_numbers = #tpu.dot_dimension_numbers<[1], [0], [0], [1], [0, 0, 1, 1], [], []>} : vector<8x8xf32>, vector<8x8xf32>, vector<8x8xf32> -> vector<8x8xf32>
    %c0_12 = arith.constant 0 : index
    %c0_13 = arith.constant 0 : index
    %28 = vector.load %arg5[%c0_12, %c0_13] : memref<32x32xf32, #tpu.memory_space<vmem>>, vector<8x32xf32>
    %cst_14 = arith.constant dense<0.000000e+00> : vector<8x32xf32>
    %29 = tpu.matmul %27, %28, %cst_14 {dimension_numbers = #tpu.dot_dimension_numbers<[1], [0], [0], [1], [0, 0, 1, 1], [], []>} : vector<8x8xf32>, vector<8x32xf32>, vector<8x32xf32> -> vector<8x32xf32>
    %30 = arith.addf %10, %29 : vector<8x32xf32>
    %31 = vector.extract_strided_slice %7 {offsets = [0, 8], sizes = [8, 8], strides = [1, 1]} : vector<8x32xf32> to vector<8x8xf32>
    %32 = vector.extract_strided_slice %8 {offsets = [0, 8], sizes = [8, 8], strides = [1, 1]} : vector<8x32xf32> to vector<8x8xf32>
    %33 = vector.extract_strided_slice %9 {offsets = [0, 8], sizes = [8, 8], strides = [1, 1]} : vector<8x32xf32> to vector<8x8xf32>
    %cst_15 = arith.constant dense<0.000000e+00> : vector<8x8xf32>
    %34 = tpu.matmul %31, %32, %cst_15 {dimension_numbers = #tpu.dot_dimension_numbers<[1], [1], [0], [0], [0, 0, 1, 0], [], []>} : vector<8x8xf32>, vector<8x8xf32>, vector<8x8xf32> -> vector<8x8xf32>
    %cst_16 = arith.constant 0.353553385 : f32
    %35 = vector.broadcast %cst_16 : f32 to vector<8x8xf32>
    %36 = arith.mulf %34, %35 : vector<8x8xf32>
    %cst_17 = arith.constant dense<0xFF800000> : vector<8xf32>
    %37 = vector.multi_reduction <maximumf>, %36, %cst_17 [1] : vector<8x8xf32> to vector<8xf32>
    %38 = vector.shape_cast %37 : vector<8xf32> to vector<8x1xf32>
    %39 = vector.broadcast %38 : vector<8x1xf32> to vector<8x8xf32>
    %40 = arith.subf %36, %39 : vector<8x8xf32>
    %41 = math.exp %40 : vector<8x8xf32>
    %cst_18 = arith.constant dense<0.000000e+00> : vector<8xf32>
    %42 = vector.multi_reduction <add>, %41, %cst_18 [1] : vector<8x8xf32> to vector<8xf32>
    %43 = vector.shape_cast %42 : vector<8xf32> to vector<8x1xf32>
    %44 = tpu.reciprocal %43 {approx = true} : vector<8x1xf32> -> vector<8x1xf32>
    %45 = vector.broadcast %44 : vector<8x1xf32> to vector<8x8xf32>
    %46 = arith.mulf %41, %45 : vector<8x8xf32>
    %cst_19 = arith.constant dense<0.000000e+00> : vector<8x8xf32>
    %47 = tpu.matmul %46, %33, %cst_19 {dimension_numbers = #tpu.dot_dimension_numbers<[1], [0], [0], [1], [0, 0, 1, 1], [], []>} : vector<8x8xf32>, vector<8x8xf32>, vector<8x8xf32> -> vector<8x8xf32>
    %c8 = arith.constant 8 : index
    %c0_20 = arith.constant 0 : index
    %48 = vector.load %arg5[%c8, %c0_20] : memref<32x32xf32, #tpu.memory_space<vmem>>, vector<8x32xf32>
    %cst_21 = arith.constant dense<0.000000e+00> : vector<8x32xf32>
    %49 = tpu.matmul %47, %48, %cst_21 {dimension_numbers = #tpu.dot_dimension_numbers<[1], [0], [0], [1], [0, 0, 1, 1], [], []>} : vector<8x8xf32>, vector<8x32xf32>, vector<8x32xf32> -> vector<8x32xf32>
    %50 = arith.addf %30, %49 : vector<8x32xf32>
    %51 = vector.extract_strided_slice %7 {offsets = [0, 16], sizes = [8, 8], strides = [1, 1]} : vector<8x32xf32> to vector<8x8xf32>
    %52 = vector.extract_strided_slice %8 {offsets = [0, 16], sizes = [8, 8], strides = [1, 1]} : vector<8x32xf32> to vector<8x8xf32>
    %53 = vector.extract_strided_slice %9 {offsets = [0, 16], sizes = [8, 8], strides = [1, 1]} : vector<8x32xf32> to vector<8x8xf32>
    %cst_22 = arith.constant dense<0.000000e+00> : vector<8x8xf32>
    %54 = tpu.matmul %51, %52, %cst_22 {dimension_numbers = #tpu.dot_dimension_numbers<[1], [1], [0], [0], [0, 0, 1, 0], [], []>} : vector<8x8xf32>, vector<8x8xf32>, vector<8x8xf32> -> vector<8x8xf32>
    %cst_23 = arith.constant 0.353553385 : f32
    %55 = vector.broadcast %cst_23 : f32 to vector<8x8xf32>
    %56 = arith.mulf %54, %55 : vector<8x8xf32>
    %cst_24 = arith.constant dense<0xFF800000> : vector<8xf32>
    %57 = vector.multi_reduction <maximumf>, %56, %cst_24 [1] : vector<8x8xf32> to vector<8xf32>
    %58 = vector.shape_cast %57 : vector<8xf32> to vector<8x1xf32>
    %59 = vector.broadcast %58 : vector<8x1xf32> to vector<8x8xf32>
    %60 = arith.subf %56, %59 : vector<8x8xf32>
    %61 = math.exp %60 : vector<8x8xf32>
    %cst_25 = arith.constant dense<0.000000e+00> : vector<8xf32>
    %62 = vector.multi_reduction <add>, %61, %cst_25 [1] : vector<8x8xf32> to vector<8xf32>
    %63 = vector.shape_cast %62 : vector<8xf32> to vector<8x1xf32>
    %64 = tpu.reciprocal %63 {approx = true} : vector<8x1xf32> -> vector<8x1xf32>
    %65 = vector.broadcast %64 : vector<8x1xf32> to vector<8x8xf32>
    %66 = arith.mulf %61, %65 : vector<8x8xf32>
    %cst_26 = arith.constant dense<0.000000e+00> : vector<8x8xf32>
    %67 = tpu.matmul %66, %53, %cst_26 {dimension_numbers = #tpu.dot_dimension_numbers<[1], [0], [0], [1], [0, 0, 1, 1], [], []>} : vector<8x8xf32>, vector<8x8xf32>, vector<8x8xf32> -> vector<8x8xf32>
    %c16 = arith.constant 16 : index
    %c0_27 = arith.constant 0 : index
    %68 = vector.load %arg5[%c16, %c0_27] : memref<32x32xf32, #tpu.memory_space<vmem>>, vector<8x32xf32>
    %cst_28 = arith.constant dense<0.000000e+00> : vector<8x32xf32>
    %69 = tpu.matmul %67, %68, %cst_28 {dimension_numbers = #tpu.dot_dimension_numbers<[1], [0], [0], [1], [0, 0, 1, 1], [], []>} : vector<8x8xf32>, vector<8x32xf32>, vector<8x32xf32> -> vector<8x32xf32>
    %70 = arith.addf %50, %69 : vector<8x32xf32>
    %71 = vector.extract_strided_slice %7 {offsets = [0, 24], sizes = [8, 8], strides = [1, 1]} : vector<8x32xf32> to vector<8x8xf32>
    %72 = vector.extract_strided_slice %8 {offsets = [0, 24], sizes = [8, 8], strides = [1, 1]} : vector<8x32xf32> to vector<8x8xf32>
    %73 = vector.extract_strided_slice %9 {offsets = [0, 24], sizes = [8, 8], strides = [1, 1]} : vector<8x32xf32> to vector<8x8xf32>
    %cst_29 = arith.constant dense<0.000000e+00> : vector<8x8xf32>
    %74 = tpu.matmul %71, %72, %cst_29 {dimension_numbers = #tpu.dot_dimension_numbers<[1], [1], [0], [0], [0, 0, 1, 0], [], []>} : vector<8x8xf32>, vector<8x8xf32>, vector<8x8xf32> -> vector<8x8xf32>
    %cst_30 = arith.constant 0.353553385 : f32
    %75 = vector.broadcast %cst_30 : f32 to vector<8x8xf32>
    %76 = arith.mulf %74, %75 : vector<8x8xf32>
    %cst_31 = arith.constant dense<0xFF800000> : vector<8xf32>
    %77 = vector.multi_reduction <maximumf>, %76, %cst_31 [1] : vector<8x8xf32> to vector<8xf32>
    %78 = vector.shape_cast %77 : vector<8xf32> to vector<8x1xf32>
    %79 = vector.broadcast %78 : vector<8x1xf32> to vector<8x8xf32>
    %80 = arith.subf %76, %79 : vector<8x8xf32>
    %81 = math.exp %80 : vector<8x8xf32>
    %cst_32 = arith.constant dense<0.000000e+00> : vector<8xf32>
    %82 = vector.multi_reduction <add>, %81, %cst_32 [1] : vector<8x8xf32> to vector<8xf32>
    %83 = vector.shape_cast %82 : vector<8xf32> to vector<8x1xf32>
    %84 = tpu.reciprocal %83 {approx = true} : vector<8x1xf32> -> vector<8x1xf32>
    %85 = vector.broadcast %84 : vector<8x1xf32> to vector<8x8xf32>
    %86 = arith.mulf %81, %85 : vector<8x8xf32>
    %cst_33 = arith.constant dense<0.000000e+00> : vector<8x8xf32>
    %87 = tpu.matmul %86, %73, %cst_33 {dimension_numbers = #tpu.dot_dimension_numbers<[1], [0], [0], [1], [0, 0, 1, 1], [], []>} : vector<8x8xf32>, vector<8x8xf32>, vector<8x8xf32> -> vector<8x8xf32>
    %c24 = arith.constant 24 : index
    %c0_34 = arith.constant 0 : index
    %88 = vector.load %arg5[%c24, %c0_34] : memref<32x32xf32, #tpu.memory_space<vmem>>, vector<8x32xf32>
    %cst_35 = arith.constant dense<0.000000e+00> : vector<8x32xf32>
    %89 = tpu.matmul %87, %88, %cst_35 {dimension_numbers = #tpu.dot_dimension_numbers<[1], [0], [0], [1], [0, 0, 1, 1], [], []>} : vector<8x8xf32>, vector<8x32xf32>, vector<8x32xf32> -> vector<8x32xf32>
    %90 = arith.addf %70, %89 : vector<8x32xf32>
    %91 = arith.addf %1, %90 : vector<8x32xf32>
    %c0_36 = arith.constant 0 : index
    %c0_37 = arith.constant 0 : index
    %92 = vector.load %arg6[%c0_36, %c0_37] : memref<1x32xf32, #tpu.memory_space<vmem>>, vector<1x32xf32>
    %93 = vector.broadcast %92 : vector<1x32xf32> to vector<8x32xf32>
    %94 = arith.addf %91, %93 : vector<8x32xf32>
    %cst_38 = arith.constant dense<0.000000e+00> : vector<8xf32>
    %95 = vector.multi_reduction <add>, %94, %cst_38 [1] : vector<8x32xf32> to vector<8xf32>
    %96 = vector.shape_cast %95 : vector<8xf32> to vector<8x1xf32>
    %cst_39 = arith.constant 3.200000e+01 : f32
    %97 = vector.broadcast %cst_39 : f32 to vector<8x1xf32>
    %98 = arith.divf %96, %97 : vector<8x1xf32>
    %99 = vector.broadcast %98 : vector<8x1xf32> to vector<8x32xf32>
    %100 = arith.subf %94, %99 : vector<8x32xf32>
    %101 = vector.broadcast %98 : vector<8x1xf32> to vector<8x32xf32>
    %102 = arith.subf %94, %101 : vector<8x32xf32>
    %103 = arith.mulf %100, %102 : vector<8x32xf32>
    %cst_40 = arith.constant dense<0.000000e+00> : vector<8xf32>
    %104 = vector.multi_reduction <add>, %103, %cst_40 [1] : vector<8x32xf32> to vector<8xf32>
    %105 = vector.shape_cast %104 : vector<8xf32> to vector<8x1xf32>
    %cst_41 = arith.constant 3.200000e+01 : f32
    %106 = vector.broadcast %cst_41 : f32 to vector<8x1xf32>
    %107 = arith.divf %105, %106 : vector<8x1xf32>
    %108 = vector.broadcast %98 : vector<8x1xf32> to vector<8x32xf32>
    %109 = arith.subf %94, %108 : vector<8x32xf32>
    %cst_42 = arith.constant 9.99999974E-6 : f32
    %110 = vector.broadcast %cst_42 : f32 to vector<8x1xf32>
    %111 = arith.addf %107, %110 : vector<8x1xf32>
    %112 = math.rsqrt %111 : vector<8x1xf32>
    %113 = vector.broadcast %112 : vector<8x1xf32> to vector<8x32xf32>
    %114 = arith.mulf %109, %113 : vector<8x32xf32>
    %c0_43 = arith.constant 0 : index
    %c0_44 = arith.constant 0 : index
    %115 = vector.load %arg7[%c0_43, %c0_44] : memref<1x32xf32, #tpu.memory_space<vmem>>, vector<1x32xf32>
    %116 = vector.broadcast %115 : vector<1x32xf32> to vector<8x32xf32>
    %117 = arith.mulf %114, %116 : vector<8x32xf32>
    %c0_45 = arith.constant 0 : index
    %c0_46 = arith.constant 0 : index
    %118 = vector.load %arg8[%c0_45, %c0_46] : memref<1x32xf32, #tpu.memory_space<vmem>>, vector<1x32xf32>
    %119 = vector.broadcast %118 : vector<1x32xf32> to vector<8x32xf32>
    %120 = arith.addf %117, %119 : vector<8x32xf32>
    %c0_47 = arith.constant 0 : index
    %c0_48 = arith.constant 0 : index
    %c0_49 = arith.constant 0 : index
    %121 = vector.load %arg9[%c0_47, %c0_48, %c0_49] : memref<1x8x32xf32, #tpu.memory_space<vmem>>, vector<1x8x32xf32>
    %122 = vector.shape_cast %121 : vector<1x8x32xf32> to vector<8x32xf32>
    %123 = vector.shape_cast %120 : vector<8x32xf32> to vector<1x8x32xf32>
    tpu.vector_store %arg9[%c0_47, %c0_48, %c0_49], %123 {strides = array<i32>} : memref<1x8x32xf32, #tpu.memory_space<vmem>>, vector<1x8x32xf32>,
    return
  }
  func.func @transform_0(%arg0: i32) -> (i32, i32, i32) {
    %c0_i32 = arith.constant 0 : i32
    %c0_i32_0 = arith.constant 0 : i32
    %c0_i32_1 = arith.constant 0 : i32
    return %arg0, %c0_i32, %c0_i32_0 : i32, i32, i32
  }
  func.func @transform_1(%arg0: i32) -> (i32, i32, i32) {
    %c0_i32 = arith.constant 0 : i32
    %c0_i32_0 = arith.constant 0 : i32
    %c0_i32_1 = arith.constant 0 : i32
    return %arg0, %c0_i32, %c0_i32_0 : i32, i32, i32
  }
  func.func @transform_2(%arg0: i32) -> (i32, i32) {
    %c0_i32 = arith.constant 0 : i32
    %c0_i32_0 = arith.constant 0 : i32
    %c0_i32_1 = arith.constant 0 : i32
    return %c0_i32, %c0_i32_0 : i32, i32
  }
  func.func @transform_3(%arg0: i32) -> (i32, i32) {
    %c0_i32 = arith.constant 0 : i32
    %c0_i32_0 = arith.constant 0 : i32
    %c0_i32_1 = arith.constant 0 : i32
    return %c0_i32, %c0_i32_0 : i32, i32
  }
  func.func @transform_4(%arg0: i32) -> (i32, i32) {
    %c0_i32 = arith.constant 0 : i32
    %c0_i32_0 = arith.constant 0 : i32
    %c0_i32_1 = arith.constant 0 : i32
    return %c0_i32, %c0_i32_0 : i32, i32
  }
  func.func @transform_5(%arg0: i32) -> (i32, i32) {
    %c0_i32 = arith.constant 0 : i32
    %c0_i32_0 = arith.constant 0 : i32
    %c0_i32_1 = arith.constant 0 : i32
    return %c0_i32, %c0_i32_0 : i32, i32
  }
  func.func @transform_6(%arg0: i32) -> (i32, i32) {
    %c0_i32 = arith.constant 0 : i32
    %c0_i32_0 = arith.constant 0 : i32
    %c0_i32_1 = arith.constant 0 : i32
    return %c0_i32, %c0_i32_0 : i32, i32
  }
  func.func @transform_7(%arg0: i32) -> (i32, i32) {
    %c0_i32 = arith.constant 0 : i32
    %c0_i32_0 = arith.constant 0 : i32
    %c0_i32_1 = arith.constant 0 : i32
    return %c0_i32, %c0_i32_0 : i32, i32
  }
  func.func @transform_8(%arg0: i32) -> (i32, i32, i32) {
    %c0_i32 = arith.constant 0 : i32
    %c0_i32_0 = arith.constant 0 : i32
    %c0_i32_1 = arith.constant 0 : i32
    return %arg0, %c0_i32, %c0_i32_0 : i32, i32, i32
  }
}

module attributes {stable_mosaic.version = 11 : i64} {
  func.func @_ln_kernel(%arg0: i32, %arg1: memref<16x32xf32, #tpu.memory_space<vmem>>, %arg2: memref<1x32xf32, #tpu.memory_space<vmem>>, %arg3: memref<1x32xf32, #tpu.memory_space<vmem>>, %arg4: memref<16x32xf32, #tpu.memory_space<vmem>>) attributes {dimension_semantics = [#tpu.dimension_semantics<parallel>], iteration_bounds = array<i64: 1>, scalar_prefetch = 0 : i64, scratch_operands = 0 : i64, tpu.core_type = #tpu.core_type<tc>, window_params = [{transform_indices = @transform_0, window_bounds = array<i64: 16, 32>}, {pipeline_mode = #tpu.pipeline_mode<synchronous>, transform_indices = @transform_1, window_bounds = array<i64: 1, 32>}, {pipeline_mode = #tpu.pipeline_mode<synchronous>, transform_indices = @transform_2, window_bounds = array<i64: 1, 32>}, {transform_indices = @transform_3, window_bounds = array<i64: 16, 32>}]} {
    %c0 = arith.constant 0 : index
    %c0_0 = arith.constant 0 : index
    %0 = vector.load %arg1[%c0, %c0_0] : memref<16x32xf32, #tpu.memory_space<vmem>>, vector<16x32xf32>
    %cst = arith.constant dense<0.000000e+00> : vector<16xf32>
    %1 = vector.multi_reduction <add>, %0, %cst [1] : vector<16x32xf32> to vector<16xf32>
    %2 = vector.shape_cast %1 : vector<16xf32> to vector<16x1xf32>
    %cst_1 = arith.constant 3.200000e+01 : f32
    %3 = vector.broadcast %cst_1 : f32 to vector<16x1xf32>
    %4 = arith.divf %2, %3 : vector<16x1xf32>
    %5 = vector.broadcast %4 : vector<16x1xf32> to vector<16x32xf32>
    %6 = arith.subf %0, %5 : vector<16x32xf32>
    %7 = vector.broadcast %4 : vector<16x1xf32> to vector<16x32xf32>
    %8 = arith.subf %0, %7 : vector<16x32xf32>
    %9 = arith.mulf %6, %8 : vector<16x32xf32>
    %cst_2 = arith.constant dense<0.000000e+00> : vector<16xf32>
    %10 = vector.multi_reduction <add>, %9, %cst_2 [1] : vector<16x32xf32> to vector<16xf32>
    %11 = vector.shape_cast %10 : vector<16xf32> to vector<16x1xf32>
    %cst_3 = arith.constant 3.200000e+01 : f32
    %12 = vector.broadcast %cst_3 : f32 to vector<16x1xf32>
    %13 = arith.divf %11, %12 : vector<16x1xf32>
    %14 = vector.broadcast %4 : vector<16x1xf32> to vector<16x32xf32>
    %15 = arith.subf %0, %14 : vector<16x32xf32>
    %cst_4 = arith.constant 9.99999974E-6 : f32
    %16 = vector.broadcast %cst_4 : f32 to vector<16x1xf32>
    %17 = arith.addf %13, %16 : vector<16x1xf32>
    %18 = math.rsqrt %17 : vector<16x1xf32>
    %19 = vector.broadcast %18 : vector<16x1xf32> to vector<16x32xf32>
    %20 = arith.mulf %15, %19 : vector<16x32xf32>
    %c0_5 = arith.constant 0 : index
    %c0_6 = arith.constant 0 : index
    %21 = vector.load %arg2[%c0_5, %c0_6] : memref<1x32xf32, #tpu.memory_space<vmem>>, vector<1x32xf32>
    %22 = vector.broadcast %21 : vector<1x32xf32> to vector<16x32xf32>
    %23 = arith.mulf %20, %22 : vector<16x32xf32>
    %c0_7 = arith.constant 0 : index
    %c0_8 = arith.constant 0 : index
    %24 = vector.load %arg3[%c0_7, %c0_8] : memref<1x32xf32, #tpu.memory_space<vmem>>, vector<1x32xf32>
    %25 = vector.broadcast %24 : vector<1x32xf32> to vector<16x32xf32>
    %26 = arith.addf %23, %25 : vector<16x32xf32>
    %c0_9 = arith.constant 0 : index
    %c0_10 = arith.constant 0 : index
    %27 = vector.load %arg4[%c0_9, %c0_10] : memref<16x32xf32, #tpu.memory_space<vmem>>, vector<16x32xf32>
    tpu.vector_store %arg4[%c0_9, %c0_10], %26 {strides = array<i32>} : memref<16x32xf32, #tpu.memory_space<vmem>>, vector<16x32xf32>,
    return
  }
  func.func @transform_0(%arg0: i32) -> (i32, i32) {
    %c0_i32 = arith.constant 0 : i32
    %c0_i32_0 = arith.constant 0 : i32
    return %arg0, %c0_i32 : i32, i32
  }
  func.func @transform_1(%arg0: i32) -> (i32, i32) {
    %c0_i32 = arith.constant 0 : i32
    %c0_i32_0 = arith.constant 0 : i32
    %c0_i32_1 = arith.constant 0 : i32
    return %c0_i32, %c0_i32_0 : i32, i32
  }
  func.func @transform_2(%arg0: i32) -> (i32, i32) {
    %c0_i32 = arith.constant 0 : i32
    %c0_i32_0 = arith.constant 0 : i32
    %c0_i32_1 = arith.constant 0 : i32
    return %c0_i32, %c0_i32_0 : i32, i32
  }
  func.func @transform_3(%arg0: i32) -> (i32, i32) {
    %c0_i32 = arith.constant 0 : i32
    %c0_i32_0 = arith.constant 0 : i32
    return %arg0, %c0_i32 : i32, i32
  }
}

</mosaic_0001>

<llo_original>
// kernel: transformer_decoder_forward.9
$region0: #{transformer_decoder_forward.9}
  #allocation0 [shape = 'u32[]', space=smem, size = 0x4, offset = 0x4, fixed_abs, tag = 'smem constant byte address 0x4 - core index']
  #allocation1 [shape = 'u32[72,128]{1,0:T(1,128)}', space=vmem, size = 0x9000, scoped, tag = 'internal scratch']
  %s0 = inlined_call_operand.vmem [shape: f32[16,32], index: 0, kind: input, shape index: {}]
  %s1 = inlined_call_operand.vmem [shape: f32[32,64], index: 1, kind: input, shape index: {}]
  %s2 = inlined_call_operand.vmem [shape: f32[1,64], index: 2, kind: input, shape index: {}]
  %s3 = inlined_call_operand.vmem [shape: f32[64,32], index: 3, kind: input, shape index: {}]
  %s4 = inlined_call_operand.vmem [shape: f32[1,32], index: 4, kind: input, shape index: {}]
  %s5 = inlined_call_operand.vmem [shape: f32[1,32], index: 5, kind: input, shape index: {}]
  %s6 = inlined_call_operand.vmem [shape: f32[1,32], index: 6, kind: input, shape index: {}]
  %s7 = inlined_call_operand.vmem [shape: f32[16,32], index: 7, kind: output, shape index: {}]
  %s8 = sld [smem:[#allocation0]]
  $region38: #{transformer_decoder_forward.9} parent=0
    _
  %s10 = ssub.s32 1, %s8
  %s11 = scalar_select 0, %s10, %s8
  // Predicated region
  $region2: #{transformer_decoder_forward.9} parent=0 // pred_check
    _
  $region3: #{transformer_decoder_forward.9} parent=0 // pred_check_branch
    %13 = sbr.rel (0) target = $region5
  $region4: #{transformer_decoder_forward.9} parent=0 // pred_region
    _
  $region5: #{transformer_decoder_forward.9} parent=0 // pred_fallthru
    _
  // Predicated region
  $region6: #{transformer_decoder_forward.9} parent=0 // pred_check
    _
  $region7: #{transformer_decoder_forward.9} parent=0 // pred_check_branch
    %15 = sbr.rel (0) target = $region9
  $region8: #{transformer_decoder_forward.9} parent=0 // pred_region
    _
  $region9: #{transformer_decoder_forward.9} parent=0 // pred_fallthru
    _
  // Predicated region
  $region10: #{transformer_decoder_forward.9} parent=0 // pred_check
    _
  $region11: #{transformer_decoder_forward.9} parent=0 // pred_check_branch
    %17 = sbr.rel (0) target = $region13
  $region12: #{transformer_decoder_forward.9} parent=0 // pred_region
    _
  $region13: #{transformer_decoder_forward.9} parent=0 // pred_fallthru
    _
  // Predicated region
  $region14: #{transformer_decoder_forward.9} parent=0 // pred_check
    _
  $region15: #{transformer_decoder_forward.9} parent=0 // pred_check_branch
    %19 = sbr.rel (0) target = $region17
  $region16: #{transformer_decoder_forward.9} parent=0 // pred_region
    _
  $region17: #{transformer_decoder_forward.9} parent=0 // pred_fallthru
    _
  // Predicated region
  $region18: #{transformer_decoder_forward.9} parent=0 // pred_check
    _
  $region19: #{transformer_decoder_forward.9} parent=0 // pred_check_branch
    %21 = sbr.rel (0) target = $region21
  $region20: #{transformer_decoder_forward.9} parent=0 // pred_region
    _
  $region21: #{transformer_decoder_forward.9} parent=0 // pred_fallthru
    _
  // Predicated region
  $region22: #{transformer_decoder_forward.9} parent=0 // pred_check
    _
  $region23: #{transformer_decoder_forward.9} parent=0 // pred_check_branch
    %23 = sbr.rel (0) target = $region25
  $region24: #{transformer_decoder_forward.9} parent=0 // pred_region
    _
  $region25: #{transformer_decoder_forward.9} parent=0 // pred_fallthru
    _
  // Predicated region
  $region26: #{transformer_decoder_forward.9} parent=0 // pred_check
    _
  $region27: #{transformer_decoder_forward.9} parent=0 // pred_check_branch
    %25 = sbr.rel (0) target = $region29
  $region28: #{transformer_decoder_forward.9} parent=0 // pred_region
    _
  $region29: #{transformer_decoder_forward.9} parent=0 // pred_fallthru
    _
  %v26 = vld [vmem:[%s0] sm:$0xff]
  %v27 = vld [vmem:[%s0 + $0x8] sm:$0xff]
  %v28 = vld [vmem:[%s1] sm:$0xff]
  %v29 = vld [vmem:[%s1 + $0x8] sm:$0xff]
  %v30 = vld [vmem:[%s1 + $0x10] sm:$0xff]
  %v31 = vld [vmem:[%s1 + $0x18] sm:$0xff]
  %v32 = vld [vmem:[%s2] sm:$0x1]
  %v34 = vperm.slane %v32, 0
  %vm36 = vcmask 261120
  %v38 = vsel %vm36, %v26, 0
  %v41 = vsel %vm36, %v27, 0
  %43 = vmatpush.msra.mxu0 0.0
  %44 = vmatpush.msra.mxu0 0.0
  %45 = vmatpush.msra.mxu0 0.0
  %46 = vmatpush.msra.mxu0 0.0
  %47 = vmatpush.msra.mxu0 0.0
  %48 = vmatpush.msra.mxu0 0.0
  %49 = vmatpush.msra.mxu0 0.0
  %50 = vmatpush.msra.mxu0 0.0
  %51 = vmatpush.msra.mxu0 0.0
  %52 = vmatpush.msra.mxu0 0.0
  %53 = vmatpush.msra.mxu0 0.0
  %54 = vmatpush.msra.mxu0 0.0
  %55 = vmatpush.msra.mxu0 %v31
  %56 = vmatpush.msra.mxu0 %v30
  %57 = vmatpush.msra.mxu0 %v29
  %58 = vmatpush.msra.mxu0 %v28
  %59 = vmatmul.f32.gmra.mxu0 %v38
  %v60 = vpop.f32.mrf.mxu0
  %v61 = vadd.f32 %v34, %v60
  %62 = vmatmul.f32.gmra.mxu0 %v41
  %v63 = vpop.f32.mrf.mxu0
  %v64 = vadd.f32 %v34, %v63
  %65 = vdwg.mxu0
  %v66 = vmax.f32 %v61, 0.0
  %v67 = vmax.f32 %v64, 0.0
  %v68 = vld [vmem:[%s3] sm:$0xff]
  %v69 = vld [vmem:[%s3 + $0x8] sm:$0xff]
  %v70 = vld [vmem:[%s3 + $0x10] sm:$0xff]
  %v71 = vld [vmem:[%s3 + $0x18] sm:$0xff]
  %v72 = vld [vmem:[%s3 + $0x20] sm:$0xff]
  %v73 = vld [vmem:[%s3 + $0x28] sm:$0xff]
  %v74 = vld [vmem:[%s3 + $0x30] sm:$0xff]
  %v75 = vld [vmem:[%s3 + $0x38] sm:$0xff]
  %v76 = vld [vmem:[%s4] sm:$0x1]
  %v78 = vperm.slane %v76, 0
  %vm80 = vcmask 523264
  %v82 = vsel %vm80, %v66, 0
  %v85 = vsel %vm80, %v67, 0
  %87 = vmatpush.msra.mxu0 0.0
  %88 = vmatpush.msra.mxu0 0.0
  %89 = vmatpush.msra.mxu0 0.0
  %90 = vmatpush.msra.mxu0 0.0
  %91 = vmatpush.msra.mxu0 0.0
  %92 = vmatpush.msra.mxu0 0.0
  %93 = vmatpush.msra.mxu0 0.0
  %94 = vmatpush.msra.mxu0 0.0
  %95 = vmatpush.msra.mxu0 %v75
  %96 = vmatpush.msra.mxu0 %v74
  %97 = vmatpush.msra.mxu0 %v73
  %98 = vmatpush.msra.mxu0 %v72
  %99 = vmatpush.msra.mxu0 %v71
  %100 = vmatpush.msra.mxu0 %v70
  %101 = vmatpush.msra.mxu0 %v69
  %102 = vmatpush.msra.mxu0 %v68
  %103 = vmatmul.f32.gmra.mxu0 %v82
  %v104 = vpop.f32.mrf.mxu0
  %v105 = vadd.f32 %v78, %v104
  %106 = vmatmul.f32.gmra.mxu0 %v85
  %v107 = vpop.f32.mrf.mxu0
  %v108 = vadd.f32 %v78, %v107
  %109 = vdwg.mxu0
  %v110 = vadd.f32 %v26, %v105
  %v111 = vadd.f32 %v27, %v108
  %v112 = vsel %vm36, %v110, 0.0
  %113 = vadd.xlane.f32.xlu0 %v112
  %v114 = vpop.xlane.xlu0 %113
  %v115 = vsel %vm36, %v111, 0.0
  %116 = vadd.xlane.f32.xlu0 %v115
  %v117 = vpop.xlane.xlu0 %116
  %v118 = vrcp.pop 32.0
  %v119 = vmul.f32 32.0, %v118
  %v120 = vsub.f32 1.0, %v119
  %v121 = vmul.f32 %v118, %v120
  %v122 = vadd.f32 %v118, %v121
  %vm123 = vweird.f32 %v118
  %v124 = vsel %vm123, %v118, %v122
  %v125 = vmul.f32 %v114, %v124
  %v126 = vmul.f32 %v117, %v124
  %v127 = vsub.f32 %v110, %v125
  %v128 = vsub.f32 %v111, %v126
  %v129 = vmul.f32 %v127, %v127
  %v130 = vmul.f32 %v128, %v128
  %v131 = vsel %vm36, %v129, 0.0
  %132 = vadd.xlane.f32.xlu0 %v131
  %v133 = vpop.xlane.xlu0 %132
  %v134 = vsel %vm36, %v130, 0.0
  %135 = vadd.xlane.f32.xlu0 %v134
  %v136 = vpop.xlane.xlu0 %135
  %v137 = vmul.f32 %v133, %v124
  %v138 = vmul.f32 %v136, %v124
  %v139 = vadd.f32 %v137, 1e-05
  %v140 = vadd.f32 %v138, 1e-05
  %v141 = vrsqrt.pop %v139
  %v142 = vmul.f32 %v141, %v139
  %v143 = vmul.f32 %v142, %v141
  %v144 = vmul.f32 0.5, %v143
  %v145 = vsub.f32 1.5, %v144
  %v146 = vmul.f32 %v141, %v145
  %vm147 = vweird.f32 %v139
  %vm148 = vweird.f32 %v141
  %vm149 = vmor %vm147, %vm148
  %v150 = vsel %vm149, %v141, %v146
  %v151 = vrsqrt.pop %v140
  %v152 = vmul.f32 %v151, %v140
  %v153 = vmul.f32 %v152, %v151
  %v154 = vmul.f32 0.5, %v153
  %v155 = vsub.f32 1.5, %v154
  %v156 = vmul.f32 %v151, %v155
  %vm157 = vweird.f32 %v140
  %vm158 = vweird.f32 %v151
  %vm159 = vmor %vm157, %vm158
  %v160 = vsel %vm159, %v151, %v156
  %v161 = vmul.f32 %v127, %v150
  %v162 = vmul.f32 %v128, %v160
  %v163 = vld [vmem:[%s5] sm:$0x1]
  %v165 = vperm.slane %v163, 0
  %v167 = vmul.f32 %v161, %v165
  %v168 = vmul.f32 %v162, %v165
  %v169 = vld [vmem:[%s6] sm:$0x1]
  %v171 = vperm.slane %v169, 0
  %v173 = vadd.f32 %v167, %v171
  %v174 = vadd.f32 %v168, %v171
  %175 = vst.msk [vmem:[%s7] sm:$0xff] %vm36, %v173
  %176 = vst.msk [vmem:[%s7 + $0x8] sm:$0xff] %vm36, %v174
  // Predicated region
  $region30: #{transformer_decoder_forward.9} parent=0 // pred_check
    _
  $region31: #{transformer_decoder_forward.9} parent=0 // pred_check_branch
    %178 = sbr.rel (0) target = $region33
  $region32: #{transformer_decoder_forward.9} parent=0 // pred_region
    _
  $region33: #{transformer_decoder_forward.9} parent=0 // pred_fallthru
    _
  // Predicated region
  $region34: #{transformer_decoder_forward.9} parent=0 // pred_check
    _
  $region35: #{transformer_decoder_forward.9} parent=0 // pred_check_branch
    %180 = sbr.rel (0) target = $region37
  $region36: #{transformer_decoder_forward.9} parent=0 // pred_region
    _
  $region37: #{transformer_decoder_forward.9} parent=0 // pred_fallthru
    _

// kernel: transformer_decoder_forward.7
$region0: #{transformer_decoder_forward.7}
  #allocation0 [shape = 'u32[]', space=smem, size = 0x4, offset = 0x4, fixed_abs, tag = 'smem constant byte address 0x4 - core index']
  #allocation1 [shape = 'u32[72,128]{1,0:T(1,128)}', space=vmem, size = 0x9000, scoped, tag = 'internal scratch']
  %s0 = inlined_call_operand.vmem [shape: f32[2,8,32], index: 0, kind: input, shape index: {}, may-alias: {0,1}]
  %s1 = inlined_call_operand.vmem [shape: f32[2,8,32], index: 1, kind: input, shape index: {}, may-alias: {0,1}]
  %s2 = inlined_call_operand.hbm [shape: f32[32,96], index: 2, kind: input, shape index: {}]
  %s3 = inlined_call_operand.vmem [shape: f32[1,96], index: 3, kind: input, shape index: {}]
  %s4 = inlined_call_operand.hbm [shape: f32[32,32], index: 4, kind: input, shape index: {}]
  %s5 = inlined_call_operand.vmem [shape: f32[1,32], index: 5, kind: input, shape index: {}]
  %s6 = inlined_call_operand.vmem [shape: f32[1,32], index: 6, kind: input, shape index: {}]
  %s7 = inlined_call_operand.vmem [shape: f32[1,32], index: 7, kind: input, shape index: {}]
  %s8 = inlined_call_operand.vmem [shape: f32[2,8,32], index: 8, kind: output, shape index: {}]
  %s9 = sld [smem:[#allocation0]]
  $region73: #{transformer_decoder_forward.7} parent=0
    _
  %s11 = ssub.s32 1, %s9
  %s12 = scalar_select 0, %s11, %s9
  $region1: #{transformer_decoder_forward.7} parent=0
    #allocation2 [shape = 'u8[16384]{0}', space=vmem, size = 0x4000, scoped, tag = 'input window, operand 2, single buffered']
    #allocation3 [shape = 's32[2]{0}', space=sflag, size = 0x8, scoped, tag = 'scoped memory for transformer_decoder_forward.7']
    #allocation4 [shape = 'u8[16384]{0}', space=vmem, size = 0x4000, scoped, tag = 'input window, operand 4, single buffered']
    #allocation5 [shape = 's32[1]{0}', space=sflag, size = 0x4, scoped, tag = 'scoped memory for transformer_decoder_forward.7']
    %13 = vsyncpa [#allocation3], 0
    %14 = vsyncpa [#allocation5], 0
    loop: start=0, step=1, limit=4
    $region2: #{transformer_decoder_forward.7} parent=1 // loop_pre_header
      _
    $region3: #{transformer_decoder_forward.7} parent=1 // loop_header
      %s16 = sphi 0, %s20
      %p17 = scmp.ge.s32.totalorder %s16, 4
      %s26 = sphi 0, %s28
      %s29 = sphi 0, %s26
      %s30 = sphi 0, %s29
      %s46 = sphi 0, %s30
      %s52 = sphi 0, %s54
      %s55 = sphi 0, %s52
      %s56 = sphi 0, %s55
      %s72 = sphi 0, %s56
      %s76 = sphi 0, %s76
      %s78 = sphi 0, %s76
      %s79 = sphi 0, %s78
      %s93 = sphi 0, %s79
      %s97 = sphi 0, %s97
      %s99 = sphi 0, %s97
      %s100 = sphi 0, %s99
      %s114 = sphi 0, %s100
      %s118 = sphi 0, %s118
      %s120 = sphi 0, %s118
      %s121 = sphi 0, %s120
      %s135 = sphi 0, %s121
      %s139 = sphi 0, %s139
      %s141 = sphi 0, %s139
      %s142 = sphi 0, %s141
      %s156 = sphi 0, %s142
      %s160 = sphi 0, %s160
      %s162 = sphi 0, %s160
      %s163 = sphi 0, %s162
      %s177 = sphi 0, %s163
      %s181 = sphi 0, %s181
      %s183 = sphi 0, %s181
      %s184 = sphi 0, %s183
      %s198 = sphi 0, %s184
      %s204 = sphi 0, %s206
      %s207 = sphi 0, %s204
      %s208 = sphi 0, %s207
      %s224 = sphi 0, %s208
    $region4: #{transformer_decoder_forward.7} parent=1 // loop_header_branch
      %19 = sbr.rel (%p17) target = $region8
    $region5: #{transformer_decoder_forward.7} parent=1 // loop_body
      %s21 = ssub.s32 %s16, 1
      %s22 = ssub.s32 %s16, 2
      %s23 = sadd.s32 %s16, 1
      %s24 = ssub.s32 %s16, %s23
      %p25 = scmp.eq.s32.totalorder %s24, 0
      %s27 = sadd.s32 %s26, 1
      %s28 = scalar_select %p25, %s26, %s27
      %p31 = pneg %p25
      %p32 = scmp.eq.s32.totalorder %s16, 1
      %p33 = por %p31, %p32
      %p34 = scmp.ne.s32.totalorder %s26, %s29
      %p35 = scmp.eq.s32.totalorder %s16, 0
      %p36 = por %p34, %p35
      %p37 = scmp.ne.s32.totalorder %s26, %s29
      %p38 = scmp.eq.s32.totalorder %s21, 1
      %p39 = por %p37, %p38
      %p40 = scmp.ne.s32.totalorder %s29, %s30
      %p41 = scmp.eq.s32.totalorder %s21, 0
      %p42 = por %p40, %p41
      %p43 = scmp.ne.s32.totalorder %s29, %s30
      %p44 = scmp.eq.s32.totalorder %s22, 1
      %p45 = por %p43, %p44
      %p47 = scmp.ne.s32.totalorder %s30, %s46
      %p48 = scmp.eq.s32.totalorder %s22, 0
      %p49 = por %p47, %p48
      %s50 = ssub.s32 %s16, %s23
      %p51 = scmp.eq.s32.totalorder %s50, 0
      %s53 = sadd.s32 %s52, 1
      %s54 = scalar_select %p51, %s52, %s53
      %p57 = pneg %p51
      %p58 = scmp.eq.s32.totalorder %s16, 1
      %p59 = por %p57, %p58
      %p60 = scmp.ne.s32.totalorder %s52, %s55
      %p61 = scmp.eq.s32.totalorder %s16, 0
      %p62 = por %p60, %p61
      %p63 = scmp.ne.s32.totalorder %s52, %s55
      %p64 = scmp.eq.s32.totalorder %s21, 1
      %p65 = por %p63, %p64
      %p66 = scmp.ne.s32.totalorder %s55, %s56
      %p67 = scmp.eq.s32.totalorder %s21, 0
      %p68 = por %p66, %p67
      %p69 = scmp.ne.s32.totalorder %s55, %s56
      %p70 = scmp.eq.s32.totalorder %s22, 1
      %p71 = por %p69, %p70
      %p73 = scmp.ne.s32.totalorder %s56, %s72
      %p74 = scmp.eq.s32.totalorder %s22, 0
      %p75 = por %p73, %p74
      %s77 = sadd.s32 %s76, 1
      %p80 = scmp.eq.s32.totalorder %s16, 1
      %p81 = scmp.ne.s32.totalorder %s76, %s78
      %p82 = scmp.eq.s32.totalorder %s16, 0
      %p83 = por %p81, %p82
      %p84 = scmp.ne.s32.totalorder %s76, %s78
      %p85 = scmp.eq.s32.totalorder %s21, 1
      %p86 = por %p84, %p85
      %p87 = scmp.ne.s32.totalorder %s78, %s79
      %p88 = scmp.eq.s32.totalorder %s21, 0
      %p89 = por %p87, %p88
      %p90 = scmp.ne.s32.totalorder %s78, %s79
      %p91 = scmp.eq.s32.totalorder %s22, 1
      %p92 = por %p90, %p91
      %p94 = scmp.ne.s32.totalorder %s79, %s93
      %p95 = scmp.eq.s32.totalorder %s22, 0
      %p96 = por %p94, %p95
      %s98 = sadd.s32 %s97, 1
      %p101 = scmp.eq.s32.totalorder %s16, 1
      %p102 = scmp.ne.s32.totalorder %s97, %s99
      %p103 = scmp.eq.s32.totalorder %s16, 0
      %p104 = por %p102, %p103
      %p105 = scmp.ne.s32.totalorder %s97, %s99
      %p106 = scmp.eq.s32.totalorder %s21, 1
      %p107 = por %p105, %p106
      %p108 = scmp.ne.s32.totalorder %s99, %s100
      %p109 = scmp.eq.s32.totalorder %s21, 0
      %p110 = por %p108, %p109
      %p111 = scmp.ne.s32.totalorder %s99, %s100
      %p112 = scmp.eq.s32.totalorder %s22, 1
      %p113 = por %p111, %p112
      %p115 = scmp.ne.s32.totalorder %s100, %s114
      %p116 = scmp.eq.s32.totalorder %s22, 0
      %p117 = por %p115, %p116
      %s119 = sadd.s32 %s118, 1
      %p122 = scmp.eq.s32.totalorder %s16, 1
      %p123 = scmp.ne.s32.totalorder %s118, %s120
      %p124 = scmp.eq.s32.totalorder %s16, 0
      %p125 = por %p123, %p124
      %p126 = scmp.ne.s32.totalorder %s118, %s120
      %p127 = scmp.eq.s32.totalorder %s21, 1
      %p128 = por %p126, %p127
      %p129 = scmp.ne.s32.totalorder %s120, %s121
      %p130 = scmp.eq.s32.totalorder %s21, 0
      %p131 = por %p129, %p130
      %p132 = scmp.ne.s32.totalorder %s120, %s121
      %p133 = scmp.eq.s32.totalorder %s22, 1
      %p134 = por %p132, %p133
      %p136 = scmp.ne.s32.totalorder %s121, %s135
      %p137 = scmp.eq.s32.totalorder %s22, 0
      %p138 = por %p136, %p137
      %s140 = sadd.s32 %s139, 1
      %p143 = scmp.eq.s32.totalorder %s16, 1
      %p144 = scmp.ne.s32.totalorder %s139, %s141
      %p145 = scmp.eq.s32.totalorder %s16, 0
      %p146 = por %p144, %p145
      %p147 = scmp.ne.s32.totalorder %s139, %s141
      %p148 = scmp.eq.s32.totalorder %s21, 1
      %p149 = por %p147, %p148
      %p150 = scmp.ne.s32.totalorder %s141, %s142
      %p151 = scmp.eq.s32.totalorder %s21, 0
      %p152 = por %p150, %p151
      %p153 = scmp.ne.s32.totalorder %s141, %s142
      %p154 = scmp.eq.s32.totalorder %s22, 1
      %p155 = por %p153, %p154
      %p157 = scmp.ne.s32.totalorder %s142, %s156
      %p158 = scmp.eq.s32.totalorder %s22, 0
      %p159 = por %p157, %p158
      %s161 = sadd.s32 %s160, 1
      %p164 = scmp.eq.s32.totalorder %s16, 1
      %p165 = scmp.ne.s32.totalorder %s160, %s162
      %p166 = scmp.eq.s32.totalorder %s16, 0
      %p167 = por %p165, %p166
      %p168 = scmp.ne.s32.totalorder %s160, %s162
      %p169 = scmp.eq.s32.totalorder %s21, 1
      %p170 = por %p168, %p169
      %p171 = scmp.ne.s32.totalorder %s162, %s163
      %p172 = scmp.eq.s32.totalorder %s21, 0
      %p173 = por %p171, %p172
      %p174 = scmp.ne.s32.totalorder %s162, %s163
      %p175 = scmp.eq.s32.totalorder %s22, 1
      %p176 = por %p174, %p175
      %p178 = scmp.ne.s32.totalorder %s163, %s177
      %p179 = scmp.eq.s32.totalorder %s22, 0
      %p180 = por %p178, %p179
      %s182 = sadd.s32 %s181, 1
      %p185 = scmp.eq.s32.totalorder %s16, 1
      %p186 = scmp.ne.s32.totalorder %s181, %s183
      %p187 = scmp.eq.s32.totalorder %s16, 0
      %p188 = por %p186, %p187
      %p189 = scmp.ne.s32.totalorder %s181, %s183
      %p190 = scmp.eq.s32.totalorder %s21, 1
      %p191 = por %p189, %p190
      %p192 = scmp.ne.s32.totalorder %s183, %s184
      %p193 = scmp.eq.s32.totalorder %s21, 0
      %p194 = por %p192, %p193
      %p195 = scmp.ne.s32.totalorder %s183, %s184
      %p196 = scmp.eq.s32.totalorder %s22, 1
      %p197 = por %p195, %p196
      %p199 = scmp.ne.s32.totalorder %s184, %s198
      %p200 = scmp.eq.s32.totalorder %s22, 0
      %p201 = por %p199, %p200
      %s202 = ssub.s32 %s16, %s23
      %p203 = scmp.eq.s32.totalorder %s202, 0
      %s205 = sadd.s32 %s204, 1
      %s206 = scalar_select %p203, %s204, %s205
      %p209 = pneg %p203
      %p210 = scmp.eq.s32.totalorder %s16, 1
      %p211 = por %p209, %p210
      %p212 = scmp.ne.s32.totalorder %s204, %s207
      %p213 = scmp.eq.s32.totalorder %s16, 0
      %p214 = por %p212, %p213
      %p215 = scmp.ne.s32.totalorder %s204, %s207
      %p216 = scmp.eq.s32.totalorder %s21, 1
      %p217 = por %p215, %p216
      %p218 = scmp.ne.s32.totalorder %s207, %s208
      %p219 = scmp.eq.s32.totalorder %s21, 0
      %p220 = por %p218, %p219
      %p221 = scmp.ne.s32.totalorder %s207, %s208
      %p222 = scmp.eq.s32.totalorder %s22, 1
      %p223 = por %p221, %p222
      %p225 = scmp.ne.s32.totalorder %s208, %s224
      %p226 = scmp.eq.s32.totalorder %s22, 0
      %p227 = por %p225, %p226
      %p228 = scmp.le.s32.totalorder 1, %s16
      %p229 = scmp.lt.s32.totalorder %s16, 3
      %p230 = pnand %p228, %p229
      %p231 = pneg %p230
      // Predicated region
      $region9: #{transformer_decoder_forward.7} parent=5 // pred_check
        _
      $region10: #{transformer_decoder_forward.7} parent=5 // pred_check_branch
        %233 = sbr.rel (%p230) target = $region12
      $region11: #{transformer_decoder_forward.7} parent=5 // pred_region
        %s234 = ssub.s32 %s16, 1
        // Predicated region
        $region13: #{transformer_decoder_forward.7} parent=11 // pred_check
          %p235 = pneg %p89
        $region14: #{transformer_decoder_forward.7} parent=11 // pred_check_branch
          %237 = sbr.rel (%p235) target = $region16
        $region15: #{transformer_decoder_forward.7} parent=11 // pred_region
          %239 = vsyncadd [#allocation3], 0
          %s240 = sshll.u32 %s2, 4
          %s241 = int_to_ptr.hbm [resolvable:$true] %s240
          %s242 = sshll.u32 [#allocation2], 4
          %s243 = int_to_ptr.vmem [resolvable:$true] %s242
          %248 = dma.hbm_to_vmem [thread:$0]  %s241, 512, %s243, [#allocation3], 128, 128, 8
        $region16: #{transformer_decoder_forward.7} parent=11 // pred_fallthru
          _
        // Predicated region
        $region17: #{transformer_decoder_forward.7} parent=11 // pred_check
          %p249 = pneg %p110
        $region18: #{transformer_decoder_forward.7} parent=11 // pred_check_branch
          %251 = sbr.rel (%p249) target = $region20
        $region19: #{transformer_decoder_forward.7} parent=11 // pred_region
          _
        $region20: #{transformer_decoder_forward.7} parent=11 // pred_fallthru
          _
        // Predicated region
        $region21: #{transformer_decoder_forward.7} parent=11 // pred_check
          %p252 = pneg %p131
        $region22: #{transformer_decoder_forward.7} parent=11 // pred_check_branch
          %254 = sbr.rel (%p252) target = $region24
        $region23: #{transformer_decoder_forward.7} parent=11 // pred_region
          %256 = vsyncadd [#allocation5], 0
          %s257 = sshll.u32 %s4, 4
          %s258 = int_to_ptr.hbm [resolvable:$true] %s257
          %s259 = sshll.u32 [#allocation4], 4
          %s260 = int_to_ptr.vmem [resolvable:$true] %s259
          %265 = dma.hbm_to_vmem [thread:$0]  %s258, 512, %s260, [#allocation5], 128, 128, 8
        $region24: #{transformer_decoder_forward.7} parent=11 // pred_fallthru
          _
        // Predicated region
        $region25: #{transformer_decoder_forward.7} parent=11 // pred_check
          %p266 = pneg %p152
        $region26: #{transformer_decoder_forward.7} parent=11 // pred_check_branch
          %268 = sbr.rel (%p266) target = $region28
        $region27: #{transformer_decoder_forward.7} parent=11 // pred_region
          _
        $region28: #{transformer_decoder_forward.7} parent=11 // pred_fallthru
          _
        // Predicated region
        $region29: #{transformer_decoder_forward.7} parent=11 // pred_check
          %p269 = pneg %p173
        $region30: #{transformer_decoder_forward.7} parent=11 // pred_check_branch
          %271 = sbr.rel (%p269) target = $region32
        $region31: #{transformer_decoder_forward.7} parent=11 // pred_region
          _
        $region32: #{transformer_decoder_forward.7} parent=11 // pred_fallthru
          _
        // Predicated region
        $region33: #{transformer_decoder_forward.7} parent=11 // pred_check
          %p272 = pneg %p194
        $region34: #{transformer_decoder_forward.7} parent=11 // pred_check_branch
          %274 = sbr.rel (%p272) target = $region36
        $region35: #{transformer_decoder_forward.7} parent=11 // pred_region
          _
        $region36: #{transformer_decoder_forward.7} parent=11 // pred_fallthru
          _
      $region12: #{transformer_decoder_forward.7} parent=5 // pred_fallthru
        _
      %p275 = scmp.lt.s32.totalorder %s16, 2
      // Predicated region
      $region37: #{transformer_decoder_forward.7} parent=5 // pred_check
        %p276 = pneg %p275
      $region38: #{transformer_decoder_forward.7} parent=5 // pred_check_branch
        %278 = sbr.rel (%p276) target = $region40
      $region39: #{transformer_decoder_forward.7} parent=5 // pred_region
        // Predicated region
        $region41: #{transformer_decoder_forward.7} parent=39 // pred_check
          %p279 = pneg %p36
        $region42: #{transformer_decoder_forward.7} parent=39 // pred_check_branch
          %281 = sbr.rel (%p279) target = $region44
        $region43: #{transformer_decoder_forward.7} parent=39 // pred_region
          %p282 = scmp.lt.s32.totalorder %s16, 1
          %s283 = scalar_select %p282, %s16, 1
          %s284 = smul.addr %s283, 8
          %s285 = scalar_lea.vmem %s0, %s284
        $region44: #{transformer_decoder_forward.7} parent=39 // pred_fallthru
          _
        // Predicated region
        $region45: #{transformer_decoder_forward.7} parent=39 // pred_check
          %p286 = pneg %p62
        $region46: #{transformer_decoder_forward.7} parent=39 // pred_check_branch
          %288 = sbr.rel (%p286) target = $region48
        $region47: #{transformer_decoder_forward.7} parent=39 // pred_region
          %p289 = scmp.lt.s32.totalorder %s16, 1
          %s290 = scalar_select %p289, %s16, 1
          %s291 = smul.addr %s290, 8
          %s292 = scalar_lea.vmem %s1, %s291
        $region48: #{transformer_decoder_forward.7} parent=39 // pred_fallthru
          _
      $region40: #{transformer_decoder_forward.7} parent=5 // pred_fallthru
        _
      %p293 = scmp.le.s32.totalorder 1, %s16
      %p294 = scmp.lt.s32.totalorder %s16, 3
      %p295 = pnand %p293, %p294
      %p296 = pneg %p295
      // Predicated region
      $region49: #{transformer_decoder_forward.7} parent=5 // pred_check
        _
      $region50: #{transformer_decoder_forward.7} parent=5 // pred_check_branch
        %298 = sbr.rel (%p295) target = $region52
      $region51: #{transformer_decoder_forward.7} parent=5 // pred_region
        %s299 = ssub.s32 %s16, 1
        // Predicated region
        $region53: #{transformer_decoder_forward.7} parent=51 // pred_check
          %p300 = pneg %p89
        $region54: #{transformer_decoder_forward.7} parent=51 // pred_check_branch
          %302 = sbr.rel (%p300) target = $region56
        $region55: #{transformer_decoder_forward.7} parent=51 // pred_region
          %304 = dma.done [#allocation3], 512
        $region56: #{transformer_decoder_forward.7} parent=51 // pred_fallthru
          _
        // Predicated region
        $region57: #{transformer_decoder_forward.7} parent=51 // pred_check
          %p305 = pneg %p131
        $region58: #{transformer_decoder_forward.7} parent=51 // pred_check_branch
          %307 = sbr.rel (%p305) target = $region60
        $region59: #{transformer_decoder_forward.7} parent=51 // pred_region
          %309 = dma.done [#allocation5], 512
        $region60: #{transformer_decoder_forward.7} parent=51 // pred_fallthru
          _
        %p310 = scmp.lt.s32.totalorder %s21, 1
        %s311 = scalar_select %p310, %s21, 1
        %s312 = smul.addr %s311, 8
        %s313 = scalar_lea.vmem %s0, %s312
        %p314 = pneg %p42
        %p315 = pneg %p39
        %p316 = scmp.lt.s32.totalorder %s21, 1
        %s317 = scalar_select %p316, %s21, 1
        %s318 = smul.addr %s317, 8
        %s319 = scalar_lea.vmem %s1, %s318
        %p320 = pneg %p68
        %p321 = pneg %p65
        %p322 = pneg %p89
        %p323 = pneg %p86
        %p324 = pneg %p110
        %p325 = pneg %p107
        %p326 = pneg %p131
        %p327 = pneg %p128
        %p328 = pneg %p152
        %p329 = pneg %p149
        %p330 = pneg %p173
        %p331 = pneg %p170
        %p332 = pneg %p194
        %p333 = pneg %p191
        %p334 = pneg %p220
        %p335 = pneg %p217
        %p336 = scmp.lt.s32.totalorder %s21, 1
        %s337 = scalar_select %p336, %s21, 1
        %s338 = smul.addr %s337, 8
        %s339 = scalar_lea.vmem %s8, %s338
        %p340 = scmp.lt.s32.totalorder %s21, 1
        %s341 = scalar_select %p340, %s21, 1
        %s342 = smul.addr %s341, 8
        %s343 = scalar_lea.vmem %s0, %s342
        %p344 = scmp.lt.s32.totalorder %s21, 1
        %s345 = scalar_select %p344, %s21, 1
        %s346 = smul.addr %s345, 8
        %s347 = scalar_lea.vmem %s1, %s346
        %p348 = scmp.lt.s32.totalorder %s21, 1
        %s349 = scalar_select %p348, %s21, 1
        %s350 = smul.addr %s349, 8
        %s351 = scalar_lea.vmem %s8, %s350
        %v352 = vld [vmem:[%s343] sm:$0xff]
        %v353 = vld [vmem:[#allocation2] sm:$0xff]
        %v354 = vld [vmem:[#allocation2 + $0x8] sm:$0xff]
        %v355 = vld [vmem:[#allocation2 + $0x10] sm:$0xff]
        %v356 = vld [vmem:[#allocation2 + $0x18] sm:$0xff]
        %v357 = vld [vmem:[%s3] sm:$0x1]
        %v359 = vperm.slane %v357, 0
        %vm361 = vcmask 261120
        %v363 = vsel %vm361, %v352, 0
        %365 = vmatpush.msra.mxu0 0.0
        %366 = vmatpush.msra.mxu0 0.0
        %367 = vmatpush.msra.mxu0 0.0
        %368 = vmatpush.msra.mxu0 0.0
        %369 = vmatpush.msra.mxu0 0.0
        %370 = vmatpush.msra.mxu0 0.0
        %371 = vmatpush.msra.mxu0 0.0
        %372 = vmatpush.msra.mxu0 0.0
        %373 = vmatpush.msra.mxu0 0.0
        %374 = vmatpush.msra.mxu0 0.0
        %375 = vmatpush.msra.mxu0 0.0
        %376 = vmatpush.msra.mxu0 0.0
        %377 = vmatpush.msra.mxu0 %v356
        %378 = vmatpush.msra.mxu0 %v355
        %379 = vmatpush.msra.mxu0 %v354
        %380 = vmatpush.msra.mxu0 %v353
        %381 = vmatmul.f32.gmra.mxu0 %v363
        %v382 = vpop.f32.mrf.mxu0
        %v383 = vadd.f32 %v359, %v382
        %384 = vdwg.mxu0
        %386 = vrot.lane.b32.xlu0 %v383, 96
        %v387 = vpop.permute.xlu0 %386
        %vm388 = vcmask 64512
        %v389 = vsel %vm388, %v383, 0
        %v391 = vsel %vm388, %v387, 0
        %393 = vmatpush.xpose.msra.mxu0 0.0
        %394 = vmatpush.xpose.msra.mxu0 0.0
        %395 = vmatpush.xpose.msra.mxu0 0.0
        %396 = vmatpush.xpose.msra.mxu0 0.0
        %397 = vmatpush.xpose.msra.mxu0 0.0
        %398 = vmatpush.xpose.msra.mxu0 0.0
        %399 = vmatpush.xpose.msra.mxu0 0.0
        %400 = vmatpush.xpose.msra.mxu0 0.0
        %401 = vmatpush.xpose.msra.mxu0 0.0
        %402 = vmatpush.xpose.msra.mxu0 0.0
        %403 = vmatpush.xpose.msra.mxu0 0.0
        %404 = vmatpush.xpose.msra.mxu0 0.0
        %405 = vmatpush.xpose.msra.mxu0 0.0
        %406 = vmatpush.xpose.msra.mxu0 0.0
        %407 = vmatpush.xpose.msra.mxu0 0.0
        %408 = vmatpush.xpose.msra.mxu0 %v391
        %409 = vmatmul.f32.gmra.mxu0 %v389
        %v410 = vpop.f32.mrf.mxu0
        %v411 = vadd.f32 0.0, %v410
        %412 = vdwg.mxu0
        %v413 = vmul.f32 %v411, 0.35355338
        %v414 = vsel %vm388, %v413, -inf
        %415 = vmax.xlane.f32.xlu0 %v414
        %v416 = vpop.xlane.xlu0 %415
        %v417 = vsub.f32 %v413, %v416
        %v418 = vmul.f32 %v417, 1.442695
        %v419 = vpow.pop %v418
        %v420 = vsel %vm388, %v419, 0.0
        %421 = vadd.xlane.f32.xlu0 %v420
        %v422 = vpop.xlane.xlu0 %421
        %v423 = vrcp.pop %v422
        %v424 = vmul.f32 %v419, %v423
        %425 = vrot.lane.b32.xlu0 %v383, 64
        %v426 = vpop.permute.xlu0 %425
        %v429 = vsel %vm388, %v424, 0
        %431 = vmatpush.msra.mxu0 0.0
        %432 = vmatpush.msra.mxu0 0.0
        %433 = vmatpush.msra.mxu0 0.0
        %434 = vmatpush.msra.mxu0 0.0
        %435 = vmatpush.msra.mxu0 0.0
        %436 = vmatpush.msra.mxu0 0.0
        %437 = vmatpush.msra.mxu0 0.0
        %438 = vmatpush.msra.mxu0 0.0
        %439 = vmatpush.msra.mxu0 0.0
        %440 = vmatpush.msra.mxu0 0.0
        %441 = vmatpush.msra.mxu0 0.0
        %442 = vmatpush.msra.mxu0 0.0
        %443 = vmatpush.msra.mxu0 0.0
        %444 = vmatpush.msra.mxu0 0.0
        %445 = vmatpush.msra.mxu0 0.0
        %446 = vmatpush.msra.mxu0 %v426
        %447 = vmatmul.f32.gmra.mxu0 %v429
        %v448 = vpop.f32.mrf.mxu0
        %v449 = vadd.f32 0.0, %v448
        %450 = vdwg.mxu0
        %v451 = vld [vmem:[#allocation4] sm:$0xff]
        %452 = vrot.lane.b32.xlu0 %v383, 120
        %v453 = vpop.permute.xlu0 %452
        %454 = vrot.lane.b32.xlu0 %v383, 88
        %v455 = vpop.permute.xlu0 %454
        %v456 = vsel %vm388, %v453, 0
        %v458 = vsel %vm388, %v455, 0
        %460 = vmatpush.xpose.msra.mxu0 0.0
        %461 = vmatpush.xpose.msra.mxu0 0.0
        %462 = vmatpush.xpose.msra.mxu0 0.0
        %463 = vmatpush.xpose.msra.mxu0 0.0
        %464 = vmatpush.xpose.msra.mxu0 0.0
        %465 = vmatpush.xpose.msra.mxu0 0.0
        %466 = vmatpush.xpose.msra.mxu0 0.0
        %467 = vmatpush.xpose.msra.mxu0 0.0
        %468 = vmatpush.xpose.msra.mxu0 0.0
        %469 = vmatpush.xpose.msra.mxu0 0.0
        %470 = vmatpush.xpose.msra.mxu0 0.0
        %471 = vmatpush.xpose.msra.mxu0 0.0
        %472 = vmatpush.xpose.msra.mxu0 0.0
        %473 = vmatpush.xpose.msra.mxu0 0.0
        %474 = vmatpush.xpose.msra.mxu0 0.0
        %475 = vmatpush.xpose.msra.mxu0 %v458
        %476 = vmatmul.f32.gmra.mxu0 %v456
        %v477 = vpop.f32.mrf.mxu0
        %v478 = vadd.f32 0.0, %v477
        %479 = vdwg.mxu0
        %v480 = vmul.f32 %v478, 0.35355338
        %v481 = vsel %vm388, %v480, -inf
        %482 = vmax.xlane.f32.xlu0 %v481
        %v483 = vpop.xlane.xlu0 %482
        %v484 = vsub.f32 %v480, %v483
        %v485 = vmul.f32 %v484, 1.442695
        %v486 = vpow.pop %v485
        %v487 = vsel %vm388, %v486, 0.0
        %488 = vadd.xlane.f32.xlu0 %v487
        %v489 = vpop.xlane.xlu0 %488
        %v490 = vrcp.pop %v489
        %v491 = vmul.f32 %v486, %v490
        %492 = vrot.lane.b32.xlu0 %v383, 56
        %v493 = vpop.permute.xlu0 %492
        %v496 = vsel %vm388, %v491, 0
        %498 = vmatpush.msra.mxu0 0.0
        %499 = vmatpush.msra.mxu0 0.0
        %500 = vmatpush.msra.mxu0 0.0
        %501 = vmatpush.msra.mxu0 0.0
        %502 = vmatpush.msra.mxu0 0.0
        %503 = vmatpush.msra.mxu0 0.0
        %504 = vmatpush.msra.mxu0 0.0
        %505 = vmatpush.msra.mxu0 0.0
        %506 = vmatpush.msra.mxu0 0.0
        %507 = vmatpush.msra.mxu0 0.0
        %508 = vmatpush.msra.mxu0 0.0
        %509 = vmatpush.msra.mxu0 0.0
        %510 = vmatpush.msra.mxu0 0.0
        %511 = vmatpush.msra.mxu0 0.0
        %512 = vmatpush.msra.mxu0 0.0
        %513 = vmatpush.msra.mxu0 %v493
        %514 = vmatmul.f32.gmra.mxu0 %v496
        %v515 = vpop.f32.mrf.mxu0
        %v516 = vadd.f32 0.0, %v515
        %517 = vdwg.mxu0
        %v518 = vld [vmem:[#allocation4 + $0x8] sm:$0xff]
        %v520 = vsel %vm388, %v516, 0
        %522 = vmatpush.msra.mxu0 0.0
        %523 = vmatpush.msra.mxu0 0.0
        %524 = vmatpush.msra.mxu0 0.0
        %525 = vmatpush.msra.mxu0 0.0
        %526 = vmatpush.msra.mxu0 0.0
        %527 = vmatpush.msra.mxu0 0.0
        %528 = vmatpush.msra.mxu0 0.0
        %529 = vmatpush.msra.mxu0 0.0
        %530 = vmatpush.msra.mxu0 0.0
        %531 = vmatpush.msra.mxu0 0.0
        %532 = vmatpush.msra.mxu0 0.0
        %533 = vmatpush.msra.mxu0 0.0
        %534 = vmatpush.msra.mxu0 0.0
        %535 = vmatpush.msra.mxu0 0.0
        %536 = vmatpush.msra.mxu0 0.0
        %537 = vmatpush.msra.mxu0 %v518
        %538 = vmatmul.f32.gmra.mxu0 %v520
        %v539 = vpop.f32.mrf.mxu0
        %v540 = vadd.f32 0.0, %v539
        %541 = vdwg.mxu0
        %v543 = vsel %vm388, %v449, 0
        %545 = vmatpush.msra.mxu0 0.0
        %546 = vmatpush.msra.mxu0 0.0
        %547 = vmatpush.msra.mxu0 0.0
        %548 = vmatpush.msra.mxu0 0.0
        %549 = vmatpush.msra.mxu0 0.0
        %550 = vmatpush.msra.mxu0 0.0
        %551 = vmatpush.msra.mxu0 0.0
        %552 = vmatpush.msra.mxu0 0.0
        %553 = vmatpush.msra.mxu0 0.0
        %554 = vmatpush.msra.mxu0 0.0
        %555 = vmatpush.msra.mxu0 0.0
        %556 = vmatpush.msra.mxu0 0.0
        %557 = vmatpush.msra.mxu0 0.0
        %558 = vmatpush.msra.mxu0 0.0
        %559 = vmatpush.msra.mxu0 0.0
        %560 = vmatpush.msra.mxu0 %v451
        %561 = vmatmul.f32.gmra.mxu0 %v543
        %v562 = vpop.f32.mrf.mxu0
        %v563 = vadd.f32 %v540, %v562
        %564 = vdwg.mxu0
        %565 = vrot.lane.b32.xlu0 %v383, 112
        %v566 = vpop.permute.xlu0 %565
        %567 = vrot.lane.b32.xlu0 %v383, 80
        %v568 = vpop.permute.xlu0 %567
        %v569 = vsel %vm388, %v566, 0
        %v571 = vsel %vm388, %v568, 0
        %573 = vmatpush.xpose.msra.mxu0 0.0
        %574 = vmatpush.xpose.msra.mxu0 0.0
        %575 = vmatpush.xpose.msra.mxu0 0.0
        %576 = vmatpush.xpose.msra.mxu0 0.0
        %577 = vmatpush.xpose.msra.mxu0 0.0
        %578 = vmatpush.xpose.msra.mxu0 0.0
        %579 = vmatpush.xpose.msra.mxu0 0.0
        %580 = vmatpush.xpose.msra.mxu0 0.0
        %581 = vmatpush.xpose.msra.mxu0 0.0
        %582 = vmatpush.xpose.msra.mxu0 0.0
        %583 = vmatpush.xpose.msra.mxu0 0.0
        %584 = vmatpush.xpose.msra.mxu0 0.0
        %585 = vmatpush.xpose.msra.mxu0 0.0
        %586 = vmatpush.xpose.msra.mxu0 0.0
        %587 = vmatpush.xpose.msra.mxu0 0.0
        %588 = vmatpush.xpose.msra.mxu0 %v571
        %589 = vmatmul.f32.gmra.mxu0 %v569
        %v590 = vpop.f32.mrf.mxu0
        %v591 = vadd.f32 0.0, %v590
        %592 = vdwg.mxu0
        %v593 = vmul.f32 %v591, 0.35355338
        %v594 = vsel %vm388, %v593, -inf
        %595 = vmax.xlane.f32.xlu0 %v594
        %v596 = vpop.xlane.xlu0 %595
        %v597 = vsub.f32 %v593, %v596
        %v598 = vmul.f32 %v597, 1.442695
        %v599 = vpow.pop %v598
        %v600 = vsel %vm388, %v599, 0.0
        %601 = vadd.xlane.f32.xlu0 %v600
        %v602 = vpop.xlane.xlu0 %601
        %v603 = vrcp.pop %v602
        %v604 = vmul.f32 %v599, %v603
        %605 = vrot.lane.b32.xlu0 %v383, 48
        %v606 = vpop.permute.xlu0 %605
        %v609 = vsel %vm388, %v604, 0
        %611 = vmatpush.msra.mxu0 0.0
        %612 = vmatpush.msra.mxu0 0.0
        %613 = vmatpush.msra.mxu0 0.0
        %614 = vmatpush.msra.mxu0 0.0
        %615 = vmatpush.msra.mxu0 0.0
        %616 = vmatpush.msra.mxu0 0.0
        %617 = vmatpush.msra.mxu0 0.0
        %618 = vmatpush.msra.mxu0 0.0
        %619 = vmatpush.msra.mxu0 0.0
        %620 = vmatpush.msra.mxu0 0.0
        %621 = vmatpush.msra.mxu0 0.0
        %622 = vmatpush.msra.mxu0 0.0
        %623 = vmatpush.msra.mxu0 0.0
        %624 = vmatpush.msra.mxu0 0.0
        %625 = vmatpush.msra.mxu0 0.0
        %626 = vmatpush.msra.mxu0 %v606
        %627 = vmatmul.f32.gmra.mxu0 %v609
        %v628 = vpop.f32.mrf.mxu0
        %v629 = vadd.f32 0.0, %v628
        %630 = vdwg.mxu0
        %v631 = vld [vmem:[#allocation4 + $0x10] sm:$0xff]
        %v633 = vsel %vm388, %v629, 0
        %635 = vmatpush.msra.mxu0 0.0
        %636 = vmatpush.msra.mxu0 0.0
        %637 = vmatpush.msra.mxu0 0.0
        %638 = vmatpush.msra.mxu0 0.0
        %639 = vmatpush.msra.mxu0 0.0
        %640 = vmatpush.msra.mxu0 0.0
        %641 = vmatpush.msra.mxu0 0.0
        %642 = vmatpush.msra.mxu0 0.0
        %643 = vmatpush.msra.mxu0 0.0
        %644 = vmatpush.msra.mxu0 0.0
        %645 = vmatpush.msra.mxu0 0.0
        %646 = vmatpush.msra.mxu0 0.0
        %647 = vmatpush.msra.mxu0 0.0
        %648 = vmatpush.msra.mxu0 0.0
        %649 = vmatpush.msra.mxu0 0.0
        %650 = vmatpush.msra.mxu0 %v631
        %651 = vmatmul.f32.gmra.mxu0 %v633
        %v652 = vpop.f32.mrf.mxu0
        %v653 = vadd.f32 0.0, %v652
        %654 = vdwg.mxu0
        %v655 = vadd.f32 %v563, %v653
        %656 = vrot.lane.b32.xlu0 %v383, 104
        %v657 = vpop.permute.xlu0 %656
        %658 = vrot.lane.b32.xlu0 %v383, 72
        %v659 = vpop.permute.xlu0 %658
        %v660 = vsel %vm388, %v657, 0
        %v662 = vsel %vm388, %v659, 0
        %664 = vmatpush.xpose.msra.mxu0 0.0
        %665 = vmatpush.xpose.msra.mxu0 0.0
        %666 = vmatpush.xpose.msra.mxu0 0.0
        %667 = vmatpush.xpose.msra.mxu0 0.0
        %668 = vmatpush.xpose.msra.mxu0 0.0
        %669 = vmatpush.xpose.msra.mxu0 0.0
        %670 = vmatpush.xpose.msra.mxu0 0.0
        %671 = vmatpush.xpose.msra.mxu0 0.0
        %672 = vmatpush.xpose.msra.mxu0 0.0
        %673 = vmatpush.xpose.msra.mxu0 0.0
        %674 = vmatpush.xpose.msra.mxu0 0.0
        %675 = vmatpush.xpose.msra.mxu0 0.0
        %676 = vmatpush.xpose.msra.mxu0 0.0
        %677 = vmatpush.xpose.msra.mxu0 0.0
        %678 = vmatpush.xpose.msra.mxu0 0.0
        %679 = vmatpush.xpose.msra.mxu0 %v662
        %680 = vmatmul.f32.gmra.mxu0 %v660
        %v681 = vpop.f32.mrf.mxu0
        %v682 = vadd.f32 0.0, %v681
        %683 = vdwg.mxu0
        %v684 = vmul.f32 %v682, 0.35355338
        %v685 = vsel %vm388, %v684, -inf
        %686 = vmax.xlane.f32.xlu0 %v685
        %v687 = vpop.xlane.xlu0 %686
        %v688 = vsub.f32 %v684, %v687
        %v689 = vmul.f32 %v688, 1.442695
        %v690 = vpow.pop %v689
        %v691 = vsel %vm388, %v690, 0.0
        %692 = vadd.xlane.f32.xlu0 %v691
        %v693 = vpop.xlane.xlu0 %692
        %v694 = vrcp.pop %v693
        %v695 = vmul.f32 %v690, %v694
        %696 = vrot.lane.b32.xlu0 %v383, 40
        %v697 = vpop.permute.xlu0 %696
        %v700 = vsel %vm388, %v695, 0
        %702 = vmatpush.msra.mxu0 0.0
        %703 = vmatpush.msra.mxu0 0.0
        %704 = vmatpush.msra.mxu0 0.0
        %705 = vmatpush.msra.mxu0 0.0
        %706 = vmatpush.msra.mxu0 0.0
        %707 = vmatpush.msra.mxu0 0.0
        %708 = vmatpush.msra.mxu0 0.0
        %709 = vmatpush.msra.mxu0 0.0
        %710 = vmatpush.msra.mxu0 0.0
        %711 = vmatpush.msra.mxu0 0.0
        %712 = vmatpush.msra.mxu0 0.0
        %713 = vmatpush.msra.mxu0 0.0
        %714 = vmatpush.msra.mxu0 0.0
        %715 = vmatpush.msra.mxu0 0.0
        %716 = vmatpush.msra.mxu0 0.0
        %717 = vmatpush.msra.mxu0 %v697
        %718 = vmatmul.f32.gmra.mxu0 %v700
        %v719 = vpop.f32.mrf.mxu0
        %v720 = vadd.f32 0.0, %v719
        %721 = vdwg.mxu0
        %v722 = vld [vmem:[#allocation4 + $0x18] sm:$0xff]
        %v724 = vsel %vm388, %v720, 0
        %726 = vmatpush.msra.mxu0 0.0
        %727 = vmatpush.msra.mxu0 0.0
        %728 = vmatpush.msra.mxu0 0.0
        %729 = vmatpush.msra.mxu0 0.0
        %730 = vmatpush.msra.mxu0 0.0
        %731 = vmatpush.msra.mxu0 0.0
        %732 = vmatpush.msra.mxu0 0.0
        %733 = vmatpush.msra.mxu0 0.0
        %734 = vmatpush.msra.mxu0 0.0
        %735 = vmatpush.msra.mxu0 0.0
        %736 = vmatpush.msra.mxu0 0.0
        %737 = vmatpush.msra.mxu0 0.0
        %738 = vmatpush.msra.mxu0 0.0
        %739 = vmatpush.msra.mxu0 0.0
        %740 = vmatpush.msra.mxu0 0.0
        %741 = vmatpush.msra.mxu0 %v722
        %742 = vmatmul.f32.gmra.mxu0 %v724
        %v743 = vpop.f32.mrf.mxu0
        %v744 = vadd.f32 0.0, %v743
        %745 = vdwg.mxu0
        %v746 = vadd.f32 %v655, %v744
        %v747 = vadd.f32 %v352, %v746
        %v748 = vld [vmem:[%s5] sm:$0x1]
        %v750 = vperm.slane %v748, 0
        %v752 = vadd.f32 %v747, %v750
        %v753 = vsel %vm361, %v752, 0.0
        %754 = vadd.xlane.f32.xlu0 %v753
        %v755 = vpop.xlane.xlu0 %754
        %v756 = vrcp.pop 32.0
        %v757 = vmul.f32 32.0, %v756
        %v758 = vsub.f32 1.0, %v757
        %v759 = vmul.f32 %v756, %v758
        %v760 = vadd.f32 %v756, %v759
        %vm761 = vweird.f32 %v756
        %v762 = vsel %vm761, %v756, %v760
        %v763 = vmul.f32 %v755, %v762
        %v764 = vsub.f32 %v752, %v763
        %v765 = vmul.f32 %v764, %v764
        %v766 = vsel %vm361, %v765, 0.0
        %767 = vadd.xlane.f32.xlu0 %v766
        %v768 = vpop.xlane.xlu0 %767
        %v769 = vmul.f32 %v768, %v762
        %v770 = vadd.f32 %v769, 1e-05
        %v771 = vrsqrt.pop %v770
        %v772 = vmul.f32 %v771, %v770
        %v773 = vmul.f32 %v772, %v771
        %v774 = vmul.f32 0.5, %v773
        %v775 = vsub.f32 1.5, %v774
        %v776 = vmul.f32 %v771, %v775
        %vm777 = vweird.f32 %v770
        %vm778 = vweird.f32 %v771
        %vm779 = vmor %vm777, %vm778
        %v780 = vsel %vm779, %v771, %v776
        %v781 = vmul.f32 %v764, %v780
        %v782 = vld [vmem:[%s6] sm:$0x1]
        %v784 = vperm.slane %v782, 0
        %v786 = vmul.f32 %v781, %v784
        %v787 = vld [vmem:[%s7] sm:$0x1]
        %v789 = vperm.slane %v787, 0
        %v791 = vadd.f32 %v786, %v789
        %792 = vst.msk [vmem:[%s351] sm:$0xff] %vm361, %v791
        %p793 = scmp.lt.s32.totalorder %s21, 1
        %s794 = scalar_select %p793, %s21, 1
        %s795 = smul.addr %s794, 8
        %s796 = scalar_lea.vmem %s8, %s795
        // Predicated region
        $region61: #{transformer_decoder_forward.7} parent=51 // pred_check
          %p797 = pneg %p217
        $region62: #{transformer_decoder_forward.7} parent=51 // pred_check_branch
          %799 = sbr.rel (%p797) target = $region64
        $region63: #{transformer_decoder_forward.7} parent=51 // pred_region
          _
        $region64: #{transformer_decoder_forward.7} parent=51 // pred_fallthru
          _
      $region52: #{transformer_decoder_forward.7} parent=5 // pred_fallthru
        _
      %p800 = scmp.le.s32.totalorder 2, %s16
      // Predicated region
      $region65: #{transformer_decoder_forward.7} parent=5 // pred_check
        %p801 = pneg %p800
      $region66: #{transformer_decoder_forward.7} parent=5 // pred_check_branch
        %803 = sbr.rel (%p801) target = $region68
      $region67: #{transformer_decoder_forward.7} parent=5 // pred_region
        %s804 = ssub.s32 %s16, 2
        // Predicated region
        $region69: #{transformer_decoder_forward.7} parent=67 // pred_check
          %p805 = pneg %p223
        $region70: #{transformer_decoder_forward.7} parent=67 // pred_check_branch
          %807 = sbr.rel (%p805) target = $region72
        $region71: #{transformer_decoder_forward.7} parent=67 // pred_region
          %p808 = scmp.lt.s32.totalorder %s22, 1
          %s809 = scalar_select %p808, %s22, 1
          %s810 = smul.addr %s809, 8
          %s811 = scalar_lea.vmem %s8, %s810
        $region72: #{transformer_decoder_forward.7} parent=67 // pred_fallthru
          _
      $region68: #{transformer_decoder_forward.7} parent=5 // pred_fallthru
        _
    $region6: #{transformer_decoder_forward.7} parent=1 // loop_footer
      %s20 = sadd.s32 1, %s16
    $region7: #{transformer_decoder_forward.7} parent=1 // loop_footer_branch
      %15 = sbr.rel target = $region3
    $region8: #{transformer_decoder_forward.7} parent=1 // loop_exit
      _
    %812 = vsyncpa [#allocation3], 1
    %s813 = scalar_lea.sflag [#allocation3], 1
    %814 = vsyncpa %s813, 1
    %815 = vsyncpa [#allocation5], 1

// kernel: transformer_decoder_forward.8
$region0: #{transformer_decoder_forward.8}
  #allocation0 [shape = 'u32[]', space=smem, size = 0x4, offset = 0x4, fixed_abs, tag = 'smem constant byte address 0x4 - core index']
  #allocation1 [shape = 'u32[72,128]{1,0:T(1,128)}', space=vmem, size = 0x9000, scoped, tag = 'internal scratch']
  %s0 = inlined_call_operand.vmem [shape: f32[2,8,32], index: 0, kind: input, shape index: {}]
  %s1 = inlined_call_operand.vmem [shape: f32[2,8,32], index: 1, kind: input, shape index: {}]
  %s2 = inlined_call_operand.hbm [shape: f32[32,96], index: 2, kind: input, shape index: {}]
  %s3 = inlined_call_operand.vmem [shape: f32[1,96], index: 3, kind: input, shape index: {}]
  %s4 = inlined_call_operand.hbm [shape: f32[32,32], index: 4, kind: input, shape index: {}]
  %s5 = inlined_call_operand.vmem [shape: f32[1,32], index: 5, kind: input, shape index: {}]
  %s6 = inlined_call_operand.vmem [shape: f32[1,32], index: 6, kind: input, shape index: {}]
  %s7 = inlined_call_operand.vmem [shape: f32[1,32], index: 7, kind: input, shape index: {}]
  %s8 = inlined_call_operand.vmem [shape: f32[2,8,32], index: 8, kind: output, shape index: {}]
  %s9 = sld [smem:[#allocation0]]
  $region73: #{transformer_decoder_forward.8} parent=0
    _
  %s11 = ssub.s32 1, %s9
  %s12 = scalar_select 0, %s11, %s9
  $region1: #{transformer_decoder_forward.8} parent=0
    #allocation2 [shape = 'u8[16384]{0}', space=vmem, size = 0x4000, scoped, tag = 'input window, operand 2, single buffered']
    #allocation3 [shape = 's32[2]{0}', space=sflag, size = 0x8, scoped, tag = 'scoped memory for transformer_decoder_forward.8']
    #allocation4 [shape = 'u8[16384]{0}', space=vmem, size = 0x4000, scoped, tag = 'input window, operand 4, single buffered']
    #allocation5 [shape = 's32[1]{0}', space=sflag, size = 0x4, scoped, tag = 'scoped memory for transformer_decoder_forward.8']
    %13 = vsyncpa [#allocation3], 0
    %14 = vsyncpa [#allocation5], 0
    loop: start=0, step=1, limit=4
    $region2: #{transformer_decoder_forward.8} parent=1 // loop_pre_header
      _
    $region3: #{transformer_decoder_forward.8} parent=1 // loop_header
      %s16 = sphi 0, %s20
      %p17 = scmp.ge.s32.totalorder %s16, 4
      %s26 = sphi 0, %s28
      %s29 = sphi 0, %s26
      %s30 = sphi 0, %s29
      %s46 = sphi 0, %s30
      %s52 = sphi 0, %s54
      %s55 = sphi 0, %s52
      %s56 = sphi 0, %s55
      %s72 = sphi 0, %s56
      %s76 = sphi 0, %s76
      %s78 = sphi 0, %s76
      %s79 = sphi 0, %s78
      %s93 = sphi 0, %s79
      %s97 = sphi 0, %s97
      %s99 = sphi 0, %s97
      %s100 = sphi 0, %s99
      %s114 = sphi 0, %s100
      %s118 = sphi 0, %s118
      %s120 = sphi 0, %s118
      %s121 = sphi 0, %s120
      %s135 = sphi 0, %s121
      %s139 = sphi 0, %s139
      %s141 = sphi 0, %s139
      %s142 = sphi 0, %s141
      %s156 = sphi 0, %s142
      %s160 = sphi 0, %s160
      %s162 = sphi 0, %s160
      %s163 = sphi 0, %s162
      %s177 = sphi 0, %s163
      %s181 = sphi 0, %s181
      %s183 = sphi 0, %s181
      %s184 = sphi 0, %s183
      %s198 = sphi 0, %s184
      %s204 = sphi 0, %s206
      %s207 = sphi 0, %s204
      %s208 = sphi 0, %s207
      %s224 = sphi 0, %s208
    $region4: #{transformer_decoder_forward.8} parent=1 // loop_header_branch
      %19 = sbr.rel (%p17) target = $region8
    $region5: #{transformer_decoder_forward.8} parent=1 // loop_body
      %s21 = ssub.s32 %s16, 1
      %s22 = ssub.s32 %s16, 2
      %s23 = sadd.s32 %s16, 1
      %s24 = ssub.s32 %s16, %s23
      %p25 = scmp.eq.s32.totalorder %s24, 0
      %s27 = sadd.s32 %s26, 1
      %s28 = scalar_select %p25, %s26, %s27
      %p31 = pneg %p25
      %p32 = scmp.eq.s32.totalorder %s16, 1
      %p33 = por %p31, %p32
      %p34 = scmp.ne.s32.totalorder %s26, %s29
      %p35 = scmp.eq.s32.totalorder %s16, 0
      %p36 = por %p34, %p35
      %p37 = scmp.ne.s32.totalorder %s26, %s29
      %p38 = scmp.eq.s32.totalorder %s21, 1
      %p39 = por %p37, %p38
      %p40 = scmp.ne.s32.totalorder %s29, %s30
      %p41 = scmp.eq.s32.totalorder %s21, 0
      %p42 = por %p40, %p41
      %p43 = scmp.ne.s32.totalorder %s29, %s30
      %p44 = scmp.eq.s32.totalorder %s22, 1
      %p45 = por %p43, %p44
      %p47 = scmp.ne.s32.totalorder %s30, %s46
      %p48 = scmp.eq.s32.totalorder %s22, 0
      %p49 = por %p47, %p48
      %s50 = ssub.s32 %s16, %s23
      %p51 = scmp.eq.s32.totalorder %s50, 0
      %s53 = sadd.s32 %s52, 1
      %s54 = scalar_select %p51, %s52, %s53
      %p57 = pneg %p51
      %p58 = scmp.eq.s32.totalorder %s16, 1
      %p59 = por %p57, %p58
      %p60 = scmp.ne.s32.totalorder %s52, %s55
      %p61 = scmp.eq.s32.totalorder %s16, 0
      %p62 = por %p60, %p61
      %p63 = scmp.ne.s32.totalorder %s52, %s55
      %p64 = scmp.eq.s32.totalorder %s21, 1
      %p65 = por %p63, %p64
      %p66 = scmp.ne.s32.totalorder %s55, %s56
      %p67 = scmp.eq.s32.totalorder %s21, 0
      %p68 = por %p66, %p67
      %p69 = scmp.ne.s32.totalorder %s55, %s56
      %p70 = scmp.eq.s32.totalorder %s22, 1
      %p71 = por %p69, %p70
      %p73 = scmp.ne.s32.totalorder %s56, %s72
      %p74 = scmp.eq.s32.totalorder %s22, 0
      %p75 = por %p73, %p74
      %s77 = sadd.s32 %s76, 1
      %p80 = scmp.eq.s32.totalorder %s16, 1
      %p81 = scmp.ne.s32.totalorder %s76, %s78
      %p82 = scmp.eq.s32.totalorder %s16, 0
      %p83 = por %p81, %p82
      %p84 = scmp.ne.s32.totalorder %s76, %s78
      %p85 = scmp.eq.s32.totalorder %s21, 1
      %p86 = por %p84, %p85
      %p87 = scmp.ne.s32.totalorder %s78, %s79
      %p88 = scmp.eq.s32.totalorder %s21, 0
      %p89 = por %p87, %p88
      %p90 = scmp.ne.s32.totalorder %s78, %s79
      %p91 = scmp.eq.s32.totalorder %s22, 1
      %p92 = por %p90, %p91
      %p94 = scmp.ne.s32.totalorder %s79, %s93
      %p95 = scmp.eq.s32.totalorder %s22, 0
      %p96 = por %p94, %p95
      %s98 = sadd.s32 %s97, 1
      %p101 = scmp.eq.s32.totalorder %s16, 1
      %p102 = scmp.ne.s32.totalorder %s97, %s99
      %p103 = scmp.eq.s32.totalorder %s16, 0
      %p104 = por %p102, %p103
      %p105 = scmp.ne.s32.totalorder %s97, %s99
      %p106 = scmp.eq.s32.totalorder %s21, 1
      %p107 = por %p105, %p106
      %p108 = scmp.ne.s32.totalorder %s99, %s100
      %p109 = scmp.eq.s32.totalorder %s21, 0
      %p110 = por %p108, %p109
      %p111 = scmp.ne.s32.totalorder %s99, %s100
      %p112 = scmp.eq.s32.totalorder %s22, 1
      %p113 = por %p111, %p112
      %p115 = scmp.ne.s32.totalorder %s100, %s114
      %p116 = scmp.eq.s32.totalorder %s22, 0
      %p117 = por %p115, %p116
      %s119 = sadd.s32 %s118, 1
      %p122 = scmp.eq.s32.totalorder %s16, 1
      %p123 = scmp.ne.s32.totalorder %s118, %s120
      %p124 = scmp.eq.s32.totalorder %s16, 0
      %p125 = por %p123, %p124
      %p126 = scmp.ne.s32.totalorder %s118, %s120
      %p127 = scmp.eq.s32.totalorder %s21, 1
      %p128 = por %p126, %p127
      %p129 = scmp.ne.s32.totalorder %s120, %s121
      %p130 = scmp.eq.s32.totalorder %s21, 0
      %p131 = por %p129, %p130
      %p132 = scmp.ne.s32.totalorder %s120, %s121
      %p133 = scmp.eq.s32.totalorder %s22, 1
      %p134 = por %p132, %p133
      %p136 = scmp.ne.s32.totalorder %s121, %s135
      %p137 = scmp.eq.s32.totalorder %s22, 0
      %p138 = por %p136, %p137
      %s140 = sadd.s32 %s139, 1
      %p143 = scmp.eq.s32.totalorder %s16, 1
      %p144 = scmp.ne.s32.totalorder %s139, %s141
      %p145 = scmp.eq.s32.totalorder %s16, 0
      %p146 = por %p144, %p145
      %p147 = scmp.ne.s32.totalorder %s139, %s141
      %p148 = scmp.eq.s32.totalorder %s21, 1
      %p149 = por %p147, %p148
      %p150 = scmp.ne.s32.totalorder %s141, %s142
      %p151 = scmp.eq.s32.totalorder %s21, 0
      %p152 = por %p150, %p151
      %p153 = scmp.ne.s32.totalorder %s141, %s142
      %p154 = scmp.eq.s32.totalorder %s22, 1
      %p155 = por %p153, %p154
      %p157 = scmp.ne.s32.totalorder %s142, %s156
      %p158 = scmp.eq.s32.totalorder %s22, 0
      %p159 = por %p157, %p158
      %s161 = sadd.s32 %s160, 1
      %p164 = scmp.eq.s32.totalorder %s16, 1
      %p165 = scmp.ne.s32.totalorder %s160, %s162
      %p166 = scmp.eq.s32.totalorder %s16, 0
      %p167 = por %p165, %p166
      %p168 = scmp.ne.s32.totalorder %s160, %s162
      %p169 = scmp.eq.s32.totalorder %s21, 1
      %p170 = por %p168, %p169
      %p171 = scmp.ne.s32.totalorder %s162, %s163
      %p172 = scmp.eq.s32.totalorder %s21, 0
      %p173 = por %p171, %p172
      %p174 = scmp.ne.s32.totalorder %s162, %s163
      %p175 = scmp.eq.s32.totalorder %s22, 1
      %p176 = por %p174, %p175
      %p178 = scmp.ne.s32.totalorder %s163, %s177
      %p179 = scmp.eq.s32.totalorder %s22, 0
      %p180 = por %p178, %p179
      %s182 = sadd.s32 %s181, 1
      %p185 = scmp.eq.s32.totalorder %s16, 1
      %p186 = scmp.ne.s32.totalorder %s181, %s183
      %p187 = scmp.eq.s32.totalorder %s16, 0
      %p188 = por %p186, %p187
      %p189 = scmp.ne.s32.totalorder %s181, %s183
      %p190 = scmp.eq.s32.totalorder %s21, 1
      %p191 = por %p189, %p190
      %p192 = scmp.ne.s32.totalorder %s183, %s184
      %p193 = scmp.eq.s32.totalorder %s21, 0
      %p194 = por %p192, %p193
      %p195 = scmp.ne.s32.totalorder %s183, %s184
      %p196 = scmp.eq.s32.totalorder %s22, 1
      %p197 = por %p195, %p196
      %p199 = scmp.ne.s32.totalorder %s184, %s198
      %p200 = scmp.eq.s32.totalorder %s22, 0
      %p201 = por %p199, %p200
      %s202 = ssub.s32 %s16, %s23
      %p203 = scmp.eq.s32.totalorder %s202, 0
      %s205 = sadd.s32 %s204, 1
      %s206 = scalar_select %p203, %s204, %s205
      %p209 = pneg %p203
      %p210 = scmp.eq.s32.totalorder %s16, 1
      %p211 = por %p209, %p210
      %p212 = scmp.ne.s32.totalorder %s204, %s207
      %p213 = scmp.eq.s32.totalorder %s16, 0
      %p214 = por %p212, %p213
      %p215 = scmp.ne.s32.totalorder %s204, %s207
      %p216 = scmp.eq.s32.totalorder %s21, 1
      %p217 = por %p215, %p216
      %p218 = scmp.ne.s32.totalorder %s207, %s208
      %p219 = scmp.eq.s32.totalorder %s21, 0
      %p220 = por %p218, %p219
      %p221 = scmp.ne.s32.totalorder %s207, %s208
      %p222 = scmp.eq.s32.totalorder %s22, 1
      %p223 = por %p221, %p222
      %p225 = scmp.ne.s32.totalorder %s208, %s224
      %p226 = scmp.eq.s32.totalorder %s22, 0
      %p227 = por %p225, %p226
      %p228 = scmp.le.s32.totalorder 1, %s16
      %p229 = scmp.lt.s32.totalorder %s16, 3
      %p230 = pnand %p228, %p229
      %p231 = pneg %p230
      // Predicated region
      $region9: #{transformer_decoder_forward.8} parent=5 // pred_check
        _
      $region10: #{transformer_decoder_forward.8} parent=5 // pred_check_branch
        %233 = sbr.rel (%p230) target = $region12
      $region11: #{transformer_decoder_forward.8} parent=5 // pred_region
        %s234 = ssub.s32 %s16, 1
        // Predicated region
        $region13: #{transformer_decoder_forward.8} parent=11 // pred_check
          %p235 = pneg %p89
        $region14: #{transformer_decoder_forward.8} parent=11 // pred_check_branch
          %237 = sbr.rel (%p235) target = $region16
        $region15: #{transformer_decoder_forward.8} parent=11 // pred_region
          %239 = vsyncadd [#allocation3], 0
          %s240 = sshll.u32 %s2, 4
          %s241 = int_to_ptr.hbm [resolvable:$true] %s240
          %s242 = sshll.u32 [#allocation2], 4
          %s243 = int_to_ptr.vmem [resolvable:$true] %s242
          %248 = dma.hbm_to_vmem [thread:$0]  %s241, 512, %s243, [#allocation3], 128, 128, 8
        $region16: #{transformer_decoder_forward.8} parent=11 // pred_fallthru
          _
        // Predicated region
        $region17: #{transformer_decoder_forward.8} parent=11 // pred_check
          %p249 = pneg %p110
        $region18: #{transformer_decoder_forward.8} parent=11 // pred_check_branch
          %251 = sbr.rel (%p249) target = $region20
        $region19: #{transformer_decoder_forward.8} parent=11 // pred_region
          _
        $region20: #{transformer_decoder_forward.8} parent=11 // pred_fallthru
          _
        // Predicated region
        $region21: #{transformer_decoder_forward.8} parent=11 // pred_check
          %p252 = pneg %p131
        $region22: #{transformer_decoder_forward.8} parent=11 // pred_check_branch
          %254 = sbr.rel (%p252) target = $region24
        $region23: #{transformer_decoder_forward.8} parent=11 // pred_region
          %256 = vsyncadd [#allocation5], 0
          %s257 = sshll.u32 %s4, 4
          %s258 = int_to_ptr.hbm [resolvable:$true] %s257
          %s259 = sshll.u32 [#allocation4], 4
          %s260 = int_to_ptr.vmem [resolvable:$true] %s259
          %265 = dma.hbm_to_vmem [thread:$0]  %s258, 512, %s260, [#allocation5], 128, 128, 8
        $region24: #{transformer_decoder_forward.8} parent=11 // pred_fallthru
          _
        // Predicated region
        $region25: #{transformer_decoder_forward.8} parent=11 // pred_check
          %p266 = pneg %p152
        $region26: #{transformer_decoder_forward.8} parent=11 // pred_check_branch
          %268 = sbr.rel (%p266) target = $region28
        $region27: #{transformer_decoder_forward.8} parent=11 // pred_region
          _
        $region28: #{transformer_decoder_forward.8} parent=11 // pred_fallthru
          _
        // Predicated region
        $region29: #{transformer_decoder_forward.8} parent=11 // pred_check
          %p269 = pneg %p173
        $region30: #{transformer_decoder_forward.8} parent=11 // pred_check_branch
          %271 = sbr.rel (%p269) target = $region32
        $region31: #{transformer_decoder_forward.8} parent=11 // pred_region
          _
        $region32: #{transformer_decoder_forward.8} parent=11 // pred_fallthru
          _
        // Predicated region
        $region33: #{transformer_decoder_forward.8} parent=11 // pred_check
          %p272 = pneg %p194
        $region34: #{transformer_decoder_forward.8} parent=11 // pred_check_branch
          %274 = sbr.rel (%p272) target = $region36
        $region35: #{transformer_decoder_forward.8} parent=11 // pred_region
          _
        $region36: #{transformer_decoder_forward.8} parent=11 // pred_fallthru
          _
      $region12: #{transformer_decoder_forward.8} parent=5 // pred_fallthru
        _
      %p275 = scmp.lt.s32.totalorder %s16, 2
      // Predicated region
      $region37: #{transformer_decoder_forward.8} parent=5 // pred_check
        %p276 = pneg %p275
      $region38: #{transformer_decoder_forward.8} parent=5 // pred_check_branch
        %278 = sbr.rel (%p276) target = $region40
      $region39: #{transformer_decoder_forward.8} parent=5 // pred_region
        // Predicated region
        $region41: #{transformer_decoder_forward.8} parent=39 // pred_check
          %p279 = pneg %p36
        $region42: #{transformer_decoder_forward.8} parent=39 // pred_check_branch
          %281 = sbr.rel (%p279) target = $region44
        $region43: #{transformer_decoder_forward.8} parent=39 // pred_region
          %p282 = scmp.lt.s32.totalorder %s16, 1
          %s283 = scalar_select %p282, %s16, 1
          %s284 = smul.addr %s283, 8
          %s285 = scalar_lea.vmem %s0, %s284
        $region44: #{transformer_decoder_forward.8} parent=39 // pred_fallthru
          _
        // Predicated region
        $region45: #{transformer_decoder_forward.8} parent=39 // pred_check
          %p286 = pneg %p62
        $region46: #{transformer_decoder_forward.8} parent=39 // pred_check_branch
          %288 = sbr.rel (%p286) target = $region48
        $region47: #{transformer_decoder_forward.8} parent=39 // pred_region
          %p289 = scmp.lt.s32.totalorder %s16, 1
          %s290 = scalar_select %p289, %s16, 1
          %s291 = smul.addr %s290, 8
          %s292 = scalar_lea.vmem %s1, %s291
        $region48: #{transformer_decoder_forward.8} parent=39 // pred_fallthru
          _
      $region40: #{transformer_decoder_forward.8} parent=5 // pred_fallthru
        _
      %p293 = scmp.le.s32.totalorder 1, %s16
      %p294 = scmp.lt.s32.totalorder %s16, 3
      %p295 = pnand %p293, %p294
      %p296 = pneg %p295
      // Predicated region
      $region49: #{transformer_decoder_forward.8} parent=5 // pred_check
        _
      $region50: #{transformer_decoder_forward.8} parent=5 // pred_check_branch
        %298 = sbr.rel (%p295) target = $region52
      $region51: #{transformer_decoder_forward.8} parent=5 // pred_region
        %s299 = ssub.s32 %s16, 1
        // Predicated region
        $region53: #{transformer_decoder_forward.8} parent=51 // pred_check
          %p300 = pneg %p89
        $region54: #{transformer_decoder_forward.8} parent=51 // pred_check_branch
          %302 = sbr.rel (%p300) target = $region56
        $region55: #{transformer_decoder_forward.8} parent=51 // pred_region
          %304 = dma.done [#allocation3], 512
        $region56: #{transformer_decoder_forward.8} parent=51 // pred_fallthru
          _
        // Predicated region
        $region57: #{transformer_decoder_forward.8} parent=51 // pred_check
          %p305 = pneg %p131
        $region58: #{transformer_decoder_forward.8} parent=51 // pred_check_branch
          %307 = sbr.rel (%p305) target = $region60
        $region59: #{transformer_decoder_forward.8} parent=51 // pred_region
          %309 = dma.done [#allocation5], 512
        $region60: #{transformer_decoder_forward.8} parent=51 // pred_fallthru
          _
        %p310 = scmp.lt.s32.totalorder %s21, 1
        %s311 = scalar_select %p310, %s21, 1
        %s312 = smul.addr %s311, 8
        %s313 = scalar_lea.vmem %s0, %s312
        %p314 = pneg %p42
        %p315 = pneg %p39
        %p316 = scmp.lt.s32.totalorder %s21, 1
        %s317 = scalar_select %p316, %s21, 1
        %s318 = smul.addr %s317, 8
        %s319 = scalar_lea.vmem %s1, %s318
        %p320 = pneg %p68
        %p321 = pneg %p65
        %p322 = pneg %p89
        %p323 = pneg %p86
        %p324 = pneg %p110
        %p325 = pneg %p107
        %p326 = pneg %p131
        %p327 = pneg %p128
        %p328 = pneg %p152
        %p329 = pneg %p149
        %p330 = pneg %p173
        %p331 = pneg %p170
        %p332 = pneg %p194
        %p333 = pneg %p191
        %p334 = pneg %p220
        %p335 = pneg %p217
        %p336 = scmp.lt.s32.totalorder %s21, 1
        %s337 = scalar_select %p336, %s21, 1
        %s338 = smul.addr %s337, 8
        %s339 = scalar_lea.vmem %s8, %s338
        %p340 = scmp.lt.s32.totalorder %s21, 1
        %s341 = scalar_select %p340, %s21, 1
        %s342 = smul.addr %s341, 8
        %s343 = scalar_lea.vmem %s0, %s342
        %p344 = scmp.lt.s32.totalorder %s21, 1
        %s345 = scalar_select %p344, %s21, 1
        %s346 = smul.addr %s345, 8
        %s347 = scalar_lea.vmem %s1, %s346
        %p348 = scmp.lt.s32.totalorder %s21, 1
        %s349 = scalar_select %p348, %s21, 1
        %s350 = smul.addr %s349, 8
        %s351 = scalar_lea.vmem %s8, %s350
        %v352 = vld [vmem:[%s343] sm:$0xff]
        %v353 = vld [vmem:[%s347] sm:$0xff]
        %v354 = vld [vmem:[#allocation2] sm:$0xff]
        %v355 = vld [vmem:[#allocation2 + $0x8] sm:$0xff]
        %v356 = vld [vmem:[#allocation2 + $0x10] sm:$0xff]
        %v357 = vld [vmem:[#allocation2 + $0x18] sm:$0xff]
        %v358 = vld [vmem:[%s3] sm:$0x1]
        %v360 = vperm.slane %v358, 0
        %vm362 = vcmask 261120
        %v364 = vsel %vm362, %v352, 0
        %366 = vmatpush.msra.mxu0 0.0
        %367 = vmatpush.msra.mxu0 0.0
        %368 = vmatpush.msra.mxu0 0.0
        %369 = vmatpush.msra.mxu0 0.0
        %370 = vmatpush.msra.mxu0 0.0
        %371 = vmatpush.msra.mxu0 0.0
        %372 = vmatpush.msra.mxu0 0.0
        %373 = vmatpush.msra.mxu0 0.0
        %374 = vmatpush.msra.mxu0 0.0
        %375 = vmatpush.msra.mxu0 0.0
        %376 = vmatpush.msra.mxu0 0.0
        %377 = vmatpush.msra.mxu0 0.0
        %378 = vmatpush.msra.mxu0 %v357
        %379 = vmatpush.msra.mxu0 %v356
        %380 = vmatpush.msra.mxu0 %v355
        %381 = vmatpush.msra.mxu0 %v354
        %382 = vmatmul.f32.gmra.mxu0 %v364
        %v383 = vpop.f32.mrf.mxu0
        %v384 = vadd.f32 %v360, %v383
        %385 = vdwg.mxu0
        %390 = vrot.lane.b32.xlu0 %v354, 96
        %v391 = vpop.permute.xlu0 %390
        %392 = vrot.lane.b32.xlu0 %v355, 96
        %v393 = vpop.permute.xlu0 %392
        %394 = vrot.lane.b32.xlu0 %v356, 96
        %v395 = vpop.permute.xlu0 %394
        %396 = vrot.lane.b32.xlu0 %v357, 96
        %v397 = vpop.permute.xlu0 %396
        %402 = vrot.lane.b32.xlu0 %v360, 96
        %v403 = vpop.permute.xlu0 %402
        %v406 = vsel %vm362, %v353, 0
        %408 = vmatpush.msra.mxu0 0.0
        %409 = vmatpush.msra.mxu0 0.0
        %410 = vmatpush.msra.mxu0 0.0
        %411 = vmatpush.msra.mxu0 0.0
        %412 = vmatpush.msra.mxu0 0.0
        %413 = vmatpush.msra.mxu0 0.0
        %414 = vmatpush.msra.mxu0 0.0
        %415 = vmatpush.msra.mxu0 0.0
        %416 = vmatpush.msra.mxu0 0.0
        %417 = vmatpush.msra.mxu0 0.0
        %418 = vmatpush.msra.mxu0 0.0
        %419 = vmatpush.msra.mxu0 0.0
        %420 = vmatpush.msra.mxu0 %v397
        %421 = vmatpush.msra.mxu0 %v395
        %422 = vmatpush.msra.mxu0 %v393
        %423 = vmatpush.msra.mxu0 %v391
        %424 = vmatmul.f32.gmra.mxu0 %v406
        %v425 = vpop.f32.mrf.mxu0
        %v426 = vadd.f32 %v403, %v425
        %427 = vdwg.mxu0
        %vm428 = vcmask 64512
        %v430 = vsel %vm428, %v384, 0
        %v433 = vsel %vm428, %v426, 0
        %435 = vmatpush.xpose.msra.mxu0 0.0
        %436 = vmatpush.xpose.msra.mxu0 0.0
        %437 = vmatpush.xpose.msra.mxu0 0.0
        %438 = vmatpush.xpose.msra.mxu0 0.0
        %439 = vmatpush.xpose.msra.mxu0 0.0
        %440 = vmatpush.xpose.msra.mxu0 0.0
        %441 = vmatpush.xpose.msra.mxu0 0.0
        %442 = vmatpush.xpose.msra.mxu0 0.0
        %443 = vmatpush.xpose.msra.mxu0 0.0
        %444 = vmatpush.xpose.msra.mxu0 0.0
        %445 = vmatpush.xpose.msra.mxu0 0.0
        %446 = vmatpush.xpose.msra.mxu0 0.0
        %447 = vmatpush.xpose.msra.mxu0 0.0
        %448 = vmatpush.xpose.msra.mxu0 0.0
        %449 = vmatpush.xpose.msra.mxu0 0.0
        %450 = vmatpush.xpose.msra.mxu0 %v433
        %451 = vmatmul.f32.gmra.mxu0 %v430
        %v452 = vpop.f32.mrf.mxu0
        %v453 = vadd.f32 0.0, %v452
        %454 = vdwg.mxu0
        %v455 = vmul.f32 %v453, 0.35355338
        %v456 = vsel %vm428, %v455, -inf
        %457 = vmax.xlane.f32.xlu0 %v456
        %v458 = vpop.xlane.xlu0 %457
        %v459 = vsub.f32 %v455, %v458
        %v460 = vmul.f32 %v459, 1.442695
        %v461 = vpow.pop %v460
        %v462 = vsel %vm428, %v461, 0.0
        %463 = vadd.xlane.f32.xlu0 %v462
        %v464 = vpop.xlane.xlu0 %463
        %v465 = vrcp.pop %v464
        %v466 = vmul.f32 %v461, %v465
        %467 = vrot.lane.b32.xlu0 %v426, 96
        %v468 = vpop.permute.xlu0 %467
        %v471 = vsel %vm428, %v466, 0
        %473 = vmatpush.msra.mxu0 0.0
        %474 = vmatpush.msra.mxu0 0.0
        %475 = vmatpush.msra.mxu0 0.0
        %476 = vmatpush.msra.mxu0 0.0
        %477 = vmatpush.msra.mxu0 0.0
        %478 = vmatpush.msra.mxu0 0.0
        %479 = vmatpush.msra.mxu0 0.0
        %480 = vmatpush.msra.mxu0 0.0
        %481 = vmatpush.msra.mxu0 0.0
        %482 = vmatpush.msra.mxu0 0.0
        %483 = vmatpush.msra.mxu0 0.0
        %484 = vmatpush.msra.mxu0 0.0
        %485 = vmatpush.msra.mxu0 0.0
        %486 = vmatpush.msra.mxu0 0.0
        %487 = vmatpush.msra.mxu0 0.0
        %488 = vmatpush.msra.mxu0 %v468
        %489 = vmatmul.f32.gmra.mxu0 %v471
        %v490 = vpop.f32.mrf.mxu0
        %v491 = vadd.f32 0.0, %v490
        %492 = vdwg.mxu0
        %v493 = vld [vmem:[#allocation4] sm:$0xff]
        %494 = vrot.lane.b32.xlu0 %v384, 120
        %v495 = vpop.permute.xlu0 %494
        %496 = vrot.lane.b32.xlu0 %v426, 120
        %v497 = vpop.permute.xlu0 %496
        %v498 = vsel %vm428, %v495, 0
        %v500 = vsel %vm428, %v497, 0
        %502 = vmatpush.xpose.msra.mxu0 0.0
        %503 = vmatpush.xpose.msra.mxu0 0.0
        %504 = vmatpush.xpose.msra.mxu0 0.0
        %505 = vmatpush.xpose.msra.mxu0 0.0
        %506 = vmatpush.xpose.msra.mxu0 0.0
        %507 = vmatpush.xpose.msra.mxu0 0.0
        %508 = vmatpush.xpose.msra.mxu0 0.0
        %509 = vmatpush.xpose.msra.mxu0 0.0
        %510 = vmatpush.xpose.msra.mxu0 0.0
        %511 = vmatpush.xpose.msra.mxu0 0.0
        %512 = vmatpush.xpose.msra.mxu0 0.0
        %513 = vmatpush.xpose.msra.mxu0 0.0
        %514 = vmatpush.xpose.msra.mxu0 0.0
        %515 = vmatpush.xpose.msra.mxu0 0.0
        %516 = vmatpush.xpose.msra.mxu0 0.0
        %517 = vmatpush.xpose.msra.mxu0 %v500
        %518 = vmatmul.f32.gmra.mxu0 %v498
        %v519 = vpop.f32.mrf.mxu0
        %v520 = vadd.f32 0.0, %v519
        %521 = vdwg.mxu0
        %v522 = vmul.f32 %v520, 0.35355338
        %v523 = vsel %vm428, %v522, -inf
        %524 = vmax.xlane.f32.xlu0 %v523
        %v525 = vpop.xlane.xlu0 %524
        %v526 = vsub.f32 %v522, %v525
        %v527 = vmul.f32 %v526, 1.442695
        %v528 = vpow.pop %v527
        %v529 = vsel %vm428, %v528, 0.0
        %530 = vadd.xlane.f32.xlu0 %v529
        %v531 = vpop.xlane.xlu0 %530
        %v532 = vrcp.pop %v531
        %v533 = vmul.f32 %v528, %v532
        %534 = vrot.lane.b32.xlu0 %v426, 88
        %v535 = vpop.permute.xlu0 %534
        %v538 = vsel %vm428, %v533, 0
        %540 = vmatpush.msra.mxu0 0.0
        %541 = vmatpush.msra.mxu0 0.0
        %542 = vmatpush.msra.mxu0 0.0
        %543 = vmatpush.msra.mxu0 0.0
        %544 = vmatpush.msra.mxu0 0.0
        %545 = vmatpush.msra.mxu0 0.0
        %546 = vmatpush.msra.mxu0 0.0
        %547 = vmatpush.msra.mxu0 0.0
        %548 = vmatpush.msra.mxu0 0.0
        %549 = vmatpush.msra.mxu0 0.0
        %550 = vmatpush.msra.mxu0 0.0
        %551 = vmatpush.msra.mxu0 0.0
        %552 = vmatpush.msra.mxu0 0.0
        %553 = vmatpush.msra.mxu0 0.0
        %554 = vmatpush.msra.mxu0 0.0
        %555 = vmatpush.msra.mxu0 %v535
        %556 = vmatmul.f32.gmra.mxu0 %v538
        %v557 = vpop.f32.mrf.mxu0
        %v558 = vadd.f32 0.0, %v557
        %559 = vdwg.mxu0
        %v560 = vld [vmem:[#allocation4 + $0x8] sm:$0xff]
        %v562 = vsel %vm428, %v558, 0
        %564 = vmatpush.msra.mxu0 0.0
        %565 = vmatpush.msra.mxu0 0.0
        %566 = vmatpush.msra.mxu0 0.0
        %567 = vmatpush.msra.mxu0 0.0
        %568 = vmatpush.msra.mxu0 0.0
        %569 = vmatpush.msra.mxu0 0.0
        %570 = vmatpush.msra.mxu0 0.0
        %571 = vmatpush.msra.mxu0 0.0
        %572 = vmatpush.msra.mxu0 0.0
        %573 = vmatpush.msra.mxu0 0.0
        %574 = vmatpush.msra.mxu0 0.0
        %575 = vmatpush.msra.mxu0 0.0
        %576 = vmatpush.msra.mxu0 0.0
        %577 = vmatpush.msra.mxu0 0.0
        %578 = vmatpush.msra.mxu0 0.0
        %579 = vmatpush.msra.mxu0 %v560
        %580 = vmatmul.f32.gmra.mxu0 %v562
        %v581 = vpop.f32.mrf.mxu0
        %v582 = vadd.f32 0.0, %v581
        %583 = vdwg.mxu0
        %v585 = vsel %vm428, %v491, 0
        %587 = vmatpush.msra.mxu0 0.0
        %588 = vmatpush.msra.mxu0 0.0
        %589 = vmatpush.msra.mxu0 0.0
        %590 = vmatpush.msra.mxu0 0.0
        %591 = vmatpush.msra.mxu0 0.0
        %592 = vmatpush.msra.mxu0 0.0
        %593 = vmatpush.msra.mxu0 0.0
        %594 = vmatpush.msra.mxu0 0.0
        %595 = vmatpush.msra.mxu0 0.0
        %596 = vmatpush.msra.mxu0 0.0
        %597 = vmatpush.msra.mxu0 0.0
        %598 = vmatpush.msra.mxu0 0.0
        %599 = vmatpush.msra.mxu0 0.0
        %600 = vmatpush.msra.mxu0 0.0
        %601 = vmatpush.msra.mxu0 0.0
        %602 = vmatpush.msra.mxu0 %v493
        %603 = vmatmul.f32.gmra.mxu0 %v585
        %v604 = vpop.f32.mrf.mxu0
        %v605 = vadd.f32 %v582, %v604
        %606 = vdwg.mxu0
        %607 = vrot.lane.b32.xlu0 %v384, 112
        %v608 = vpop.permute.xlu0 %607
        %609 = vrot.lane.b32.xlu0 %v426, 112
        %v610 = vpop.permute.xlu0 %609
        %v611 = vsel %vm428, %v608, 0
        %v613 = vsel %vm428, %v610, 0
        %615 = vmatpush.xpose.msra.mxu0 0.0
        %616 = vmatpush.xpose.msra.mxu0 0.0
        %617 = vmatpush.xpose.msra.mxu0 0.0
        %618 = vmatpush.xpose.msra.mxu0 0.0
        %619 = vmatpush.xpose.msra.mxu0 0.0
        %620 = vmatpush.xpose.msra.mxu0 0.0
        %621 = vmatpush.xpose.msra.mxu0 0.0
        %622 = vmatpush.xpose.msra.mxu0 0.0
        %623 = vmatpush.xpose.msra.mxu0 0.0
        %624 = vmatpush.xpose.msra.mxu0 0.0
        %625 = vmatpush.xpose.msra.mxu0 0.0
        %626 = vmatpush.xpose.msra.mxu0 0.0
        %627 = vmatpush.xpose.msra.mxu0 0.0
        %628 = vmatpush.xpose.msra.mxu0 0.0
        %629 = vmatpush.xpose.msra.mxu0 0.0
        %630 = vmatpush.xpose.msra.mxu0 %v613
        %631 = vmatmul.f32.gmra.mxu0 %v611
        %v632 = vpop.f32.mrf.mxu0
        %v633 = vadd.f32 0.0, %v632
        %634 = vdwg.mxu0
        %v635 = vmul.f32 %v633, 0.35355338
        %v636 = vsel %vm428, %v635, -inf
        %637 = vmax.xlane.f32.xlu0 %v636
        %v638 = vpop.xlane.xlu0 %637
        %v639 = vsub.f32 %v635, %v638
        %v640 = vmul.f32 %v639, 1.442695
        %v641 = vpow.pop %v640
        %v642 = vsel %vm428, %v641, 0.0
        %643 = vadd.xlane.f32.xlu0 %v642
        %v644 = vpop.xlane.xlu0 %643
        %v645 = vrcp.pop %v644
        %v646 = vmul.f32 %v641, %v645
        %647 = vrot.lane.b32.xlu0 %v426, 80
        %v648 = vpop.permute.xlu0 %647
        %v651 = vsel %vm428, %v646, 0
        %653 = vmatpush.msra.mxu0 0.0
        %654 = vmatpush.msra.mxu0 0.0
        %655 = vmatpush.msra.mxu0 0.0
        %656 = vmatpush.msra.mxu0 0.0
        %657 = vmatpush.msra.mxu0 0.0
        %658 = vmatpush.msra.mxu0 0.0
        %659 = vmatpush.msra.mxu0 0.0
        %660 = vmatpush.msra.mxu0 0.0
        %661 = vmatpush.msra.mxu0 0.0
        %662 = vmatpush.msra.mxu0 0.0
        %663 = vmatpush.msra.mxu0 0.0
        %664 = vmatpush.msra.mxu0 0.0
        %665 = vmatpush.msra.mxu0 0.0
        %666 = vmatpush.msra.mxu0 0.0
        %667 = vmatpush.msra.mxu0 0.0
        %668 = vmatpush.msra.mxu0 %v648
        %669 = vmatmul.f32.gmra.mxu0 %v651
        %v670 = vpop.f32.mrf.mxu0
        %v671 = vadd.f32 0.0, %v670
        %672 = vdwg.mxu0
        %v673 = vld [vmem:[#allocation4 + $0x10] sm:$0xff]
        %v675 = vsel %vm428, %v671, 0
        %677 = vmatpush.msra.mxu0 0.0
        %678 = vmatpush.msra.mxu0 0.0
        %679 = vmatpush.msra.mxu0 0.0
        %680 = vmatpush.msra.mxu0 0.0
        %681 = vmatpush.msra.mxu0 0.0
        %682 = vmatpush.msra.mxu0 0.0
        %683 = vmatpush.msra.mxu0 0.0
        %684 = vmatpush.msra.mxu0 0.0
        %685 = vmatpush.msra.mxu0 0.0
        %686 = vmatpush.msra.mxu0 0.0
        %687 = vmatpush.msra.mxu0 0.0
        %688 = vmatpush.msra.mxu0 0.0
        %689 = vmatpush.msra.mxu0 0.0
        %690 = vmatpush.msra.mxu0 0.0
        %691 = vmatpush.msra.mxu0 0.0
        %692 = vmatpush.msra.mxu0 %v673
        %693 = vmatmul.f32.gmra.mxu0 %v675
        %v694 = vpop.f32.mrf.mxu0
        %v695 = vadd.f32 0.0, %v694
        %696 = vdwg.mxu0
        %v697 = vadd.f32 %v605, %v695
        %698 = vrot.lane.b32.xlu0 %v384, 104
        %v699 = vpop.permute.xlu0 %698
        %700 = vrot.lane.b32.xlu0 %v426, 104
        %v701 = vpop.permute.xlu0 %700
        %v702 = vsel %vm428, %v699, 0
        %v704 = vsel %vm428, %v701, 0
        %706 = vmatpush.xpose.msra.mxu0 0.0
        %707 = vmatpush.xpose.msra.mxu0 0.0
        %708 = vmatpush.xpose.msra.mxu0 0.0
        %709 = vmatpush.xpose.msra.mxu0 0.0
        %710 = vmatpush.xpose.msra.mxu0 0.0
        %711 = vmatpush.xpose.msra.mxu0 0.0
        %712 = vmatpush.xpose.msra.mxu0 0.0
        %713 = vmatpush.xpose.msra.mxu0 0.0
        %714 = vmatpush.xpose.msra.mxu0 0.0
        %715 = vmatpush.xpose.msra.mxu0 0.0
        %716 = vmatpush.xpose.msra.mxu0 0.0
        %717 = vmatpush.xpose.msra.mxu0 0.0
        %718 = vmatpush.xpose.msra.mxu0 0.0
        %719 = vmatpush.xpose.msra.mxu0 0.0
        %720 = vmatpush.xpose.msra.mxu0 0.0
        %721 = vmatpush.xpose.msra.mxu0 %v704
        %722 = vmatmul.f32.gmra.mxu0 %v702
        %v723 = vpop.f32.mrf.mxu0
        %v724 = vadd.f32 0.0, %v723
        %725 = vdwg.mxu0
        %v726 = vmul.f32 %v724, 0.35355338
        %v727 = vsel %vm428, %v726, -inf
        %728 = vmax.xlane.f32.xlu0 %v727
        %v729 = vpop.xlane.xlu0 %728
        %v730 = vsub.f32 %v726, %v729
        %v731 = vmul.f32 %v730, 1.442695
        %v732 = vpow.pop %v731
        %v733 = vsel %vm428, %v732, 0.0
        %734 = vadd.xlane.f32.xlu0 %v733
        %v735 = vpop.xlane.xlu0 %734
        %v736 = vrcp.pop %v735
        %v737 = vmul.f32 %v732, %v736
        %738 = vrot.lane.b32.xlu0 %v426, 72
        %v739 = vpop.permute.xlu0 %738
        %v742 = vsel %vm428, %v737, 0
        %744 = vmatpush.msra.mxu0 0.0
        %745 = vmatpush.msra.mxu0 0.0
        %746 = vmatpush.msra.mxu0 0.0
        %747 = vmatpush.msra.mxu0 0.0
        %748 = vmatpush.msra.mxu0 0.0
        %749 = vmatpush.msra.mxu0 0.0
        %750 = vmatpush.msra.mxu0 0.0
        %751 = vmatpush.msra.mxu0 0.0
        %752 = vmatpush.msra.mxu0 0.0
        %753 = vmatpush.msra.mxu0 0.0
        %754 = vmatpush.msra.mxu0 0.0
        %755 = vmatpush.msra.mxu0 0.0
        %756 = vmatpush.msra.mxu0 0.0
        %757 = vmatpush.msra.mxu0 0.0
        %758 = vmatpush.msra.mxu0 0.0
        %759 = vmatpush.msra.mxu0 %v739
        %760 = vmatmul.f32.gmra.mxu0 %v742
        %v761 = vpop.f32.mrf.mxu0
        %v762 = vadd.f32 0.0, %v761
        %763 = vdwg.mxu0
        %v764 = vld [vmem:[#allocation4 + $0x18] sm:$0xff]
        %v766 = vsel %vm428, %v762, 0
        %768 = vmatpush.msra.mxu0 0.0
        %769 = vmatpush.msra.mxu0 0.0
        %770 = vmatpush.msra.mxu0 0.0
        %771 = vmatpush.msra.mxu0 0.0
        %772 = vmatpush.msra.mxu0 0.0
        %773 = vmatpush.msra.mxu0 0.0
        %774 = vmatpush.msra.mxu0 0.0
        %775 = vmatpush.msra.mxu0 0.0
        %776 = vmatpush.msra.mxu0 0.0
        %777 = vmatpush.msra.mxu0 0.0
        %778 = vmatpush.msra.mxu0 0.0
        %779 = vmatpush.msra.mxu0 0.0
        %780 = vmatpush.msra.mxu0 0.0
        %781 = vmatpush.msra.mxu0 0.0
        %782 = vmatpush.msra.mxu0 0.0
        %783 = vmatpush.msra.mxu0 %v764
        %784 = vmatmul.f32.gmra.mxu0 %v766
        %v785 = vpop.f32.mrf.mxu0
        %v786 = vadd.f32 0.0, %v785
        %787 = vdwg.mxu0
        %v788 = vadd.f32 %v697, %v786
        %v789 = vadd.f32 %v352, %v788
        %v790 = vld [vmem:[%s5] sm:$0x1]
        %v792 = vperm.slane %v790, 0
        %v794 = vadd.f32 %v789, %v792
        %v795 = vsel %vm362, %v794, 0.0
        %796 = vadd.xlane.f32.xlu0 %v795
        %v797 = vpop.xlane.xlu0 %796
        %v798 = vrcp.pop 32.0
        %v799 = vmul.f32 32.0, %v798
        %v800 = vsub.f32 1.0, %v799
        %v801 = vmul.f32 %v798, %v800
        %v802 = vadd.f32 %v798, %v801
        %vm803 = vweird.f32 %v798
        %v804 = vsel %vm803, %v798, %v802
        %v805 = vmul.f32 %v797, %v804
        %v806 = vsub.f32 %v794, %v805
        %v807 = vmul.f32 %v806, %v806
        %v808 = vsel %vm362, %v807, 0.0
        %809 = vadd.xlane.f32.xlu0 %v808
        %v810 = vpop.xlane.xlu0 %809
        %v811 = vmul.f32 %v810, %v804
        %v812 = vadd.f32 %v811, 1e-05
        %v813 = vrsqrt.pop %v812
        %v814 = vmul.f32 %v813, %v812
        %v815 = vmul.f32 %v814, %v813
        %v816 = vmul.f32 0.5, %v815
        %v817 = vsub.f32 1.5, %v816
        %v818 = vmul.f32 %v813, %v817
        %vm819 = vweird.f32 %v812
        %vm820 = vweird.f32 %v813
        %vm821 = vmor %vm819, %vm820
        %v822 = vsel %vm821, %v813, %v818
        %v823 = vmul.f32 %v806, %v822
        %v824 = vld [vmem:[%s6] sm:$0x1]
        %v826 = vperm.slane %v824, 0
        %v828 = vmul.f32 %v823, %v826
        %v829 = vld [vmem:[%s7] sm:$0x1]
        %v831 = vperm.slane %v829, 0
        %v833 = vadd.f32 %v828, %v831
        %834 = vst.msk [vmem:[%s351] sm:$0xff] %vm362, %v833
        %p835 = scmp.lt.s32.totalorder %s21, 1
        %s836 = scalar_select %p835, %s21, 1
        %s837 = smul.addr %s836, 8
        %s838 = scalar_lea.vmem %s8, %s837
        // Predicated region
        $region61: #{transformer_decoder_forward.8} parent=51 // pred_check
          %p839 = pneg %p217
        $region62: #{transformer_decoder_forward.8} parent=51 // pred_check_branch
          %841 = sbr.rel (%p839) target = $region64
        $region63: #{transformer_decoder_forward.8} parent=51 // pred_region
          _
        $region64: #{transformer_decoder_forward.8} parent=51 // pred_fallthru
          _
      $region52: #{transformer_decoder_forward.8} parent=5 // pred_fallthru
        _
      %p842 = scmp.le.s32.totalorder 2, %s16
      // Predicated region
      $region65: #{transformer_decoder_forward.8} parent=5 // pred_check
        %p843 = pneg %p842
      $region66: #{transformer_decoder_forward.8} parent=5 // pred_check_branch
        %845 = sbr.rel (%p843) target = $region68
      $region67: #{transformer_decoder_forward.8} parent=5 // pred_region
        %s846 = ssub.s32 %s16, 2
        // Predicated region
        $region69: #{transformer_decoder_forward.8} parent=67 // pred_check
          %p847 = pneg %p223
        $region70: #{transformer_decoder_forward.8} parent=67 // pred_check_branch
          %849 = sbr.rel (%p847) target = $region72
        $region71: #{transformer_decoder_forward.8} parent=67 // pred_region
          %p850 = scmp.lt.s32.totalorder %s22, 1
          %s851 = scalar_select %p850, %s22, 1
          %s852 = smul.addr %s851, 8
          %s853 = scalar_lea.vmem %s8, %s852
        $region72: #{transformer_decoder_forward.8} parent=67 // pred_fallthru
          _
      $region68: #{transformer_decoder_forward.8} parent=5 // pred_fallthru
        _
    $region6: #{transformer_decoder_forward.8} parent=1 // loop_footer
      %s20 = sadd.s32 1, %s16
    $region7: #{transformer_decoder_forward.8} parent=1 // loop_footer_branch
      %15 = sbr.rel target = $region3
    $region8: #{transformer_decoder_forward.8} parent=1 // loop_exit
      _
    %854 = vsyncpa [#allocation3], 1
    %s855 = scalar_lea.sflag [#allocation3], 1
    %856 = vsyncpa %s855, 1
    %857 = vsyncpa [#allocation5], 1

// kernel: transformer_decoder_forward.10
$region0: #{transformer_decoder_forward.10}
  #allocation0 [shape = 'u32[]', space=smem, size = 0x4, offset = 0x4, fixed_abs, tag = 'smem constant byte address 0x4 - core index']
  #allocation1 [shape = 'u32[72,128]{1,0:T(1,128)}', space=vmem, size = 0x9000, scoped, tag = 'internal scratch']
  %s0 = inlined_call_operand.vmem [shape: f32[2,8,32], index: 0, kind: input, shape index: {}, may-alias: {0,1}]
  %s1 = inlined_call_operand.vmem [shape: f32[2,8,32], index: 1, kind: input, shape index: {}, may-alias: {0,1}]
  %s2 = inlined_call_operand.vmem [shape: f32[32,96], index: 2, kind: input, shape index: {}]
  %s3 = inlined_call_operand.vmem [shape: f32[1,96], index: 3, kind: input, shape index: {}]
  %s4 = inlined_call_operand.vmem [shape: f32[32,32], index: 4, kind: input, shape index: {}]
  %s5 = inlined_call_operand.vmem [shape: f32[1,32], index: 5, kind: input, shape index: {}]
  %s6 = inlined_call_operand.vmem [shape: f32[1,32], index: 6, kind: input, shape index: {}]
  %s7 = inlined_call_operand.vmem [shape: f32[1,32], index: 7, kind: input, shape index: {}]
  %s8 = inlined_call_operand.vmem [shape: f32[2,8,32], index: 8, kind: output, shape index: {}]
  %s9 = sld [smem:[#allocation0]]
  $region65: #{transformer_decoder_forward.10} parent=0
    _
  %s11 = ssub.s32 1, %s9
  %s12 = scalar_select 0, %s11, %s9
  loop: start=0, step=1, limit=4
  $region2: #{transformer_decoder_forward.10} parent=0 // loop_pre_header
    _
  $region3: #{transformer_decoder_forward.10} parent=0 // loop_header
    %s14 = sphi 0, %s18
    %p15 = scmp.ge.s32.totalorder %s14, 4
    %s24 = sphi 0, %s26
    %s27 = sphi 0, %s24
    %s28 = sphi 0, %s27
    %s44 = sphi 0, %s28
    %s50 = sphi 0, %s52
    %s53 = sphi 0, %s50
    %s54 = sphi 0, %s53
    %s70 = sphi 0, %s54
    %s74 = sphi 0, %s74
    %s76 = sphi 0, %s74
    %s77 = sphi 0, %s76
    %s91 = sphi 0, %s77
    %s95 = sphi 0, %s95
    %s97 = sphi 0, %s95
    %s98 = sphi 0, %s97
    %s112 = sphi 0, %s98
    %s116 = sphi 0, %s116
    %s118 = sphi 0, %s116
    %s119 = sphi 0, %s118
    %s133 = sphi 0, %s119
    %s137 = sphi 0, %s137
    %s139 = sphi 0, %s137
    %s140 = sphi 0, %s139
    %s154 = sphi 0, %s140
    %s158 = sphi 0, %s158
    %s160 = sphi 0, %s158
    %s161 = sphi 0, %s160
    %s175 = sphi 0, %s161
    %s179 = sphi 0, %s179
    %s181 = sphi 0, %s179
    %s182 = sphi 0, %s181
    %s196 = sphi 0, %s182
    %s202 = sphi 0, %s204
    %s205 = sphi 0, %s202
    %s206 = sphi 0, %s205
    %s222 = sphi 0, %s206
  $region4: #{transformer_decoder_forward.10} parent=0 // loop_header_branch
    %17 = sbr.rel (%p15) target = $region8
  $region5: #{transformer_decoder_forward.10} parent=0 // loop_body
    %s19 = ssub.s32 %s14, 1
    %s20 = ssub.s32 %s14, 2
    %s21 = sadd.s32 %s14, 1
    %s22 = ssub.s32 %s14, %s21
    %p23 = scmp.eq.s32.totalorder %s22, 0
    %s25 = sadd.s32 %s24, 1
    %s26 = scalar_select %p23, %s24, %s25
    %p29 = pneg %p23
    %p30 = scmp.eq.s32.totalorder %s14, 1
    %p31 = por %p29, %p30
    %p32 = scmp.ne.s32.totalorder %s24, %s27
    %p33 = scmp.eq.s32.totalorder %s14, 0
    %p34 = por %p32, %p33
    %p35 = scmp.ne.s32.totalorder %s24, %s27
    %p36 = scmp.eq.s32.totalorder %s19, 1
    %p37 = por %p35, %p36
    %p38 = scmp.ne.s32.totalorder %s27, %s28
    %p39 = scmp.eq.s32.totalorder %s19, 0
    %p40 = por %p38, %p39
    %p41 = scmp.ne.s32.totalorder %s27, %s28
    %p42 = scmp.eq.s32.totalorder %s20, 1
    %p43 = por %p41, %p42
    %p45 = scmp.ne.s32.totalorder %s28, %s44
    %p46 = scmp.eq.s32.totalorder %s20, 0
    %p47 = por %p45, %p46
    %s48 = ssub.s32 %s14, %s21
    %p49 = scmp.eq.s32.totalorder %s48, 0
    %s51 = sadd.s32 %s50, 1
    %s52 = scalar_select %p49, %s50, %s51
    %p55 = pneg %p49
    %p56 = scmp.eq.s32.totalorder %s14, 1
    %p57 = por %p55, %p56
    %p58 = scmp.ne.s32.totalorder %s50, %s53
    %p59 = scmp.eq.s32.totalorder %s14, 0
    %p60 = por %p58, %p59
    %p61 = scmp.ne.s32.totalorder %s50, %s53
    %p62 = scmp.eq.s32.totalorder %s19, 1
    %p63 = por %p61, %p62
    %p64 = scmp.ne.s32.totalorder %s53, %s54
    %p65 = scmp.eq.s32.totalorder %s19, 0
    %p66 = por %p64, %p65
    %p67 = scmp.ne.s32.totalorder %s53, %s54
    %p68 = scmp.eq.s32.totalorder %s20, 1
    %p69 = por %p67, %p68
    %p71 = scmp.ne.s32.totalorder %s54, %s70
    %p72 = scmp.eq.s32.totalorder %s20, 0
    %p73 = por %p71, %p72
    %s75 = sadd.s32 %s74, 1
    %p78 = scmp.eq.s32.totalorder %s14, 1
    %p79 = scmp.ne.s32.totalorder %s74, %s76
    %p80 = scmp.eq.s32.totalorder %s14, 0
    %p81 = por %p79, %p80
    %p82 = scmp.ne.s32.totalorder %s74, %s76
    %p83 = scmp.eq.s32.totalorder %s19, 1
    %p84 = por %p82, %p83
    %p85 = scmp.ne.s32.totalorder %s76, %s77
    %p86 = scmp.eq.s32.totalorder %s19, 0
    %p87 = por %p85, %p86
    %p88 = scmp.ne.s32.totalorder %s76, %s77
    %p89 = scmp.eq.s32.totalorder %s20, 1
    %p90 = por %p88, %p89
    %p92 = scmp.ne.s32.totalorder %s77, %s91
    %p93 = scmp.eq.s32.totalorder %s20, 0
    %p94 = por %p92, %p93
    %s96 = sadd.s32 %s95, 1
    %p99 = scmp.eq.s32.totalorder %s14, 1
    %p100 = scmp.ne.s32.totalorder %s95, %s97
    %p101 = scmp.eq.s32.totalorder %s14, 0
    %p102 = por %p100, %p101
    %p103 = scmp.ne.s32.totalorder %s95, %s97
    %p104 = scmp.eq.s32.totalorder %s19, 1
    %p105 = por %p103, %p104
    %p106 = scmp.ne.s32.totalorder %s97, %s98
    %p107 = scmp.eq.s32.totalorder %s19, 0
    %p108 = por %p106, %p107
    %p109 = scmp.ne.s32.totalorder %s97, %s98
    %p110 = scmp.eq.s32.totalorder %s20, 1
    %p111 = por %p109, %p110
    %p113 = scmp.ne.s32.totalorder %s98, %s112
    %p114 = scmp.eq.s32.totalorder %s20, 0
    %p115 = por %p113, %p114
    %s117 = sadd.s32 %s116, 1
    %p120 = scmp.eq.s32.totalorder %s14, 1
    %p121 = scmp.ne.s32.totalorder %s116, %s118
    %p122 = scmp.eq.s32.totalorder %s14, 0
    %p123 = por %p121, %p122
    %p124 = scmp.ne.s32.totalorder %s116, %s118
    %p125 = scmp.eq.s32.totalorder %s19, 1
    %p126 = por %p124, %p125
    %p127 = scmp.ne.s32.totalorder %s118, %s119
    %p128 = scmp.eq.s32.totalorder %s19, 0
    %p129 = por %p127, %p128
    %p130 = scmp.ne.s32.totalorder %s118, %s119
    %p131 = scmp.eq.s32.totalorder %s20, 1
    %p132 = por %p130, %p131
    %p134 = scmp.ne.s32.totalorder %s119, %s133
    %p135 = scmp.eq.s32.totalorder %s20, 0
    %p136 = por %p134, %p135
    %s138 = sadd.s32 %s137, 1
    %p141 = scmp.eq.s32.totalorder %s14, 1
    %p142 = scmp.ne.s32.totalorder %s137, %s139
    %p143 = scmp.eq.s32.totalorder %s14, 0
    %p144 = por %p142, %p143
    %p145 = scmp.ne.s32.totalorder %s137, %s139
    %p146 = scmp.eq.s32.totalorder %s19, 1
    %p147 = por %p145, %p146
    %p148 = scmp.ne.s32.totalorder %s139, %s140
    %p149 = scmp.eq.s32.totalorder %s19, 0
    %p150 = por %p148, %p149
    %p151 = scmp.ne.s32.totalorder %s139, %s140
    %p152 = scmp.eq.s32.totalorder %s20, 1
    %p153 = por %p151, %p152
    %p155 = scmp.ne.s32.totalorder %s140, %s154
    %p156 = scmp.eq.s32.totalorder %s20, 0
    %p157 = por %p155, %p156
    %s159 = sadd.s32 %s158, 1
    %p162 = scmp.eq.s32.totalorder %s14, 1
    %p163 = scmp.ne.s32.totalorder %s158, %s160
    %p164 = scmp.eq.s32.totalorder %s14, 0
    %p165 = por %p163, %p164
    %p166 = scmp.ne.s32.totalorder %s158, %s160
    %p167 = scmp.eq.s32.totalorder %s19, 1
    %p168 = por %p166, %p167
    %p169 = scmp.ne.s32.totalorder %s160, %s161
    %p170 = scmp.eq.s32.totalorder %s19, 0
    %p171 = por %p169, %p170
    %p172 = scmp.ne.s32.totalorder %s160, %s161
    %p173 = scmp.eq.s32.totalorder %s20, 1
    %p174 = por %p172, %p173
    %p176 = scmp.ne.s32.totalorder %s161, %s175
    %p177 = scmp.eq.s32.totalorder %s20, 0
    %p178 = por %p176, %p177
    %s180 = sadd.s32 %s179, 1
    %p183 = scmp.eq.s32.totalorder %s14, 1
    %p184 = scmp.ne.s32.totalorder %s179, %s181
    %p185 = scmp.eq.s32.totalorder %s14, 0
    %p186 = por %p184, %p185
    %p187 = scmp.ne.s32.totalorder %s179, %s181
    %p188 = scmp.eq.s32.totalorder %s19, 1
    %p189 = por %p187, %p188
    %p190 = scmp.ne.s32.totalorder %s181, %s182
    %p191 = scmp.eq.s32.totalorder %s19, 0
    %p192 = por %p190, %p191
    %p193 = scmp.ne.s32.totalorder %s181, %s182
    %p194 = scmp.eq.s32.totalorder %s20, 1
    %p195 = por %p193, %p194
    %p197 = scmp.ne.s32.totalorder %s182, %s196
    %p198 = scmp.eq.s32.totalorder %s20, 0
    %p199 = por %p197, %p198
    %s200 = ssub.s32 %s14, %s21
    %p201 = scmp.eq.s32.totalorder %s200, 0
    %s203 = sadd.s32 %s202, 1
    %s204 = scalar_select %p201, %s202, %s203
    %p207 = pneg %p201
    %p208 = scmp.eq.s32.totalorder %s14, 1
    %p209 = por %p207, %p208
    %p210 = scmp.ne.s32.totalorder %s202, %s205
    %p211 = scmp.eq.s32.totalorder %s14, 0
    %p212 = por %p210, %p211
    %p213 = scmp.ne.s32.totalorder %s202, %s205
    %p214 = scmp.eq.s32.totalorder %s19, 1
    %p215 = por %p213, %p214
    %p216 = scmp.ne.s32.totalorder %s205, %s206
    %p217 = scmp.eq.s32.totalorder %s19, 0
    %p218 = por %p216, %p217
    %p219 = scmp.ne.s32.totalorder %s205, %s206
    %p220 = scmp.eq.s32.totalorder %s20, 1
    %p221 = por %p219, %p220
    %p223 = scmp.ne.s32.totalorder %s206, %s222
    %p224 = scmp.eq.s32.totalorder %s20, 0
    %p225 = por %p223, %p224
    %p226 = scmp.le.s32.totalorder 1, %s14
    %p227 = scmp.lt.s32.totalorder %s14, 3
    %p228 = pnand %p226, %p227
    %p229 = pneg %p228
    // Predicated region
    $region9: #{transformer_decoder_forward.10} parent=5 // pred_check
      _
    $region10: #{transformer_decoder_forward.10} parent=5 // pred_check_branch
      %231 = sbr.rel (%p228) target = $region12
    $region11: #{transformer_decoder_forward.10} parent=5 // pred_region
      %s232 = ssub.s32 %s14, 1
      // Predicated region
      $region13: #{transformer_decoder_forward.10} parent=11 // pred_check
        %p233 = pneg %p87
      $region14: #{transformer_decoder_forward.10} parent=11 // pred_check_branch
        %235 = sbr.rel (%p233) target = $region16
      $region15: #{transformer_decoder_forward.10} parent=11 // pred_region
        _
      $region16: #{transformer_decoder_forward.10} parent=11 // pred_fallthru
        _
      // Predicated region
      $region17: #{transformer_decoder_forward.10} parent=11 // pred_check
        %p236 = pneg %p108
      $region18: #{transformer_decoder_forward.10} parent=11 // pred_check_branch
        %238 = sbr.rel (%p236) target = $region20
      $region19: #{transformer_decoder_forward.10} parent=11 // pred_region
        _
      $region20: #{transformer_decoder_forward.10} parent=11 // pred_fallthru
        _
      // Predicated region
      $region21: #{transformer_decoder_forward.10} parent=11 // pred_check
        %p239 = pneg %p129
      $region22: #{transformer_decoder_forward.10} parent=11 // pred_check_branch
        %241 = sbr.rel (%p239) target = $region24
      $region23: #{transformer_decoder_forward.10} parent=11 // pred_region
        _
      $region24: #{transformer_decoder_forward.10} parent=11 // pred_fallthru
        _
      // Predicated region
      $region25: #{transformer_decoder_forward.10} parent=11 // pred_check
        %p242 = pneg %p150
      $region26: #{transformer_decoder_forward.10} parent=11 // pred_check_branch
        %244 = sbr.rel (%p242) target = $region28
      $region27: #{transformer_decoder_forward.10} parent=11 // pred_region
        _
      $region28: #{transformer_decoder_forward.10} parent=11 // pred_fallthru
        _
      // Predicated region
      $region29: #{transformer_decoder_forward.10} parent=11 // pred_check
        %p245 = pneg %p171
      $region30: #{transformer_decoder_forward.10} parent=11 // pred_check_branch
        %247 = sbr.rel (%p245) target = $region32
      $region31: #{transformer_decoder_forward.10} parent=11 // pred_region
        _
      $region32: #{transformer_decoder_forward.10} parent=11 // pred_fallthru
        _
      // Predicated region
      $region33: #{transformer_decoder_forward.10} parent=11 // pred_check
        %p248 = pneg %p192
      $region34: #{transformer_decoder_forward.10} parent=11 // pred_check_branch
        %250 = sbr.rel (%p248) target = $region36
      $region35: #{transformer_decoder_forward.10} parent=11 // pred_region
        _
      $region36: #{transformer_decoder_forward.10} parent=11 // pred_fallthru
        _
    $region12: #{transformer_decoder_forward.10} parent=5 // pred_fallthru
      _
    %p251 = scmp.lt.s32.totalorder %s14, 2
    // Predicated region
    $region37: #{transformer_decoder_forward.10} parent=5 // pred_check
      %p252 = pneg %p251
    $region38: #{transformer_decoder_forward.10} parent=5 // pred_check_branch
      %254 = sbr.rel (%p252) target = $region40
    $region39: #{transformer_decoder_forward.10} parent=5 // pred_region
      // Predicated region
      $region41: #{transformer_decoder_forward.10} parent=39 // pred_check
        %p255 = pneg %p34
      $region42: #{transformer_decoder_forward.10} parent=39 // pred_check_branch
        %257 = sbr.rel (%p255) target = $region44
      $region43: #{transformer_decoder_forward.10} parent=39 // pred_region
        %p258 = scmp.lt.s32.totalorder %s14, 1
        %s259 = scalar_select %p258, %s14, 1
        %s260 = smul.addr %s259, 8
        %s261 = scalar_lea.vmem %s0, %s260
      $region44: #{transformer_decoder_forward.10} parent=39 // pred_fallthru
        _
      // Predicated region
      $region45: #{transformer_decoder_forward.10} parent=39 // pred_check
        %p262 = pneg %p60
      $region46: #{transformer_decoder_forward.10} parent=39 // pred_check_branch
        %264 = sbr.rel (%p262) target = $region48
      $region47: #{transformer_decoder_forward.10} parent=39 // pred_region
        %p265 = scmp.lt.s32.totalorder %s14, 1
        %s266 = scalar_select %p265, %s14, 1
        %s267 = smul.addr %s266, 8
        %s268 = scalar_lea.vmem %s1, %s267
      $region48: #{transformer_decoder_forward.10} parent=39 // pred_fallthru
        _
    $region40: #{transformer_decoder_forward.10} parent=5 // pred_fallthru
      _
    %p269 = scmp.le.s32.totalorder 1, %s14
    %p270 = scmp.lt.s32.totalorder %s14, 3
    %p271 = pnand %p269, %p270
    %p272 = pneg %p271
    // Predicated region
    $region49: #{transformer_decoder_forward.10} parent=5 // pred_check
      _
    $region50: #{transformer_decoder_forward.10} parent=5 // pred_check_branch
      %274 = sbr.rel (%p271) target = $region52
    $region51: #{transformer_decoder_forward.10} parent=5 // pred_region
      %s275 = ssub.s32 %s14, 1
      %p276 = scmp.lt.s32.totalorder %s19, 1
      %s277 = scalar_select %p276, %s19, 1
      %s278 = smul.addr %s277, 8
      %s279 = scalar_lea.vmem %s0, %s278
      %p280 = pneg %p40
      %p281 = pneg %p37
      %p282 = scmp.lt.s32.totalorder %s19, 1
      %s283 = scalar_select %p282, %s19, 1
      %s284 = smul.addr %s283, 8
      %s285 = scalar_lea.vmem %s1, %s284
      %p286 = pneg %p66
      %p287 = pneg %p63
      %p288 = pneg %p87
      %p289 = pneg %p84
      %p290 = pneg %p108
      %p291 = pneg %p105
      %p292 = pneg %p129
      %p293 = pneg %p126
      %p294 = pneg %p150
      %p295 = pneg %p147
      %p296 = pneg %p171
      %p297 = pneg %p168
      %p298 = pneg %p192
      %p299 = pneg %p189
      %p300 = pneg %p218
      %p301 = pneg %p215
      %p302 = scmp.lt.s32.totalorder %s19, 1
      %s303 = scalar_select %p302, %s19, 1
      %s304 = smul.addr %s303, 8
      %s305 = scalar_lea.vmem %s8, %s304
      %p306 = scmp.lt.s32.totalorder %s19, 1
      %s307 = scalar_select %p306, %s19, 1
      %s308 = smul.addr %s307, 8
      %s309 = scalar_lea.vmem %s0, %s308
      %p310 = scmp.lt.s32.totalorder %s19, 1
      %s311 = scalar_select %p310, %s19, 1
      %s312 = smul.addr %s311, 8
      %s313 = scalar_lea.vmem %s1, %s312
      %p314 = scmp.lt.s32.totalorder %s19, 1
      %s315 = scalar_select %p314, %s19, 1
      %s316 = smul.addr %s315, 8
      %s317 = scalar_lea.vmem %s8, %s316
      %v318 = vld [vmem:[%s309] sm:$0xff]
      %v319 = vld [vmem:[%s2] sm:$0xff]
      %v320 = vld [vmem:[%s2 + $0x8] sm:$0xff]
      %v321 = vld [vmem:[%s2 + $0x10] sm:$0xff]
      %v322 = vld [vmem:[%s2 + $0x18] sm:$0xff]
      %v323 = vld [vmem:[%s3] sm:$0x1]
      %v325 = vperm.slane %v323, 0
      %vm327 = vcmask 261120
      %v329 = vsel %vm327, %v318, 0
      %331 = vmatpush.msra.mxu0 0.0
      %332 = vmatpush.msra.mxu0 0.0
      %333 = vmatpush.msra.mxu0 0.0
      %334 = vmatpush.msra.mxu0 0.0
      %335 = vmatpush.msra.mxu0 0.0
      %336 = vmatpush.msra.mxu0 0.0
      %337 = vmatpush.msra.mxu0 0.0
      %338 = vmatpush.msra.mxu0 0.0
      %339 = vmatpush.msra.mxu0 0.0
      %340 = vmatpush.msra.mxu0 0.0
      %341 = vmatpush.msra.mxu0 0.0
      %342 = vmatpush.msra.mxu0 0.0
      %343 = vmatpush.msra.mxu0 %v322
      %344 = vmatpush.msra.mxu0 %v321
      %345 = vmatpush.msra.mxu0 %v320
      %346 = vmatpush.msra.mxu0 %v319
      %347 = vmatmul.f32.gmra.mxu0 %v329
      %v348 = vpop.f32.mrf.mxu0
      %v349 = vadd.f32 %v325, %v348
      %350 = vdwg.mxu0
      %352 = vrot.lane.b32.xlu0 %v349, 96
      %v353 = vpop.permute.xlu0 %352
      %vm354 = vcmask 64512
      %v355 = vsel %vm354, %v349, 0
      %v357 = vsel %vm354, %v353, 0
      %359 = vmatpush.xpose.msra.mxu0 0.0
      %360 = vmatpush.xpose.msra.mxu0 0.0
      %361 = vmatpush.xpose.msra.mxu0 0.0
      %362 = vmatpush.xpose.msra.mxu0 0.0
      %363 = vmatpush.xpose.msra.mxu0 0.0
      %364 = vmatpush.xpose.msra.mxu0 0.0
      %365 = vmatpush.xpose.msra.mxu0 0.0
      %366 = vmatpush.xpose.msra.mxu0 0.0
      %367 = vmatpush.xpose.msra.mxu0 0.0
      %368 = vmatpush.xpose.msra.mxu0 0.0
      %369 = vmatpush.xpose.msra.mxu0 0.0
      %370 = vmatpush.xpose.msra.mxu0 0.0
      %371 = vmatpush.xpose.msra.mxu0 0.0
      %372 = vmatpush.xpose.msra.mxu0 0.0
      %373 = vmatpush.xpose.msra.mxu0 0.0
      %374 = vmatpush.xpose.msra.mxu0 %v357
      %375 = vmatmul.f32.gmra.mxu0 %v355
      %v376 = vpop.f32.mrf.mxu0
      %v377 = vadd.f32 0.0, %v376
      %378 = vdwg.mxu0
      %v379 = vmul.f32 %v377, 0.35355338
      %v380 = vsel %vm354, %v379, -inf
      %381 = vmax.xlane.f32.xlu0 %v380
      %v382 = vpop.xlane.xlu0 %381
      %v383 = vsub.f32 %v379, %v382
      %v384 = vmul.f32 %v383, 1.442695
      %v385 = vpow.pop %v384
      %v386 = vsel %vm354, %v385, 0.0
      %387 = vadd.xlane.f32.xlu0 %v386
      %v388 = vpop.xlane.xlu0 %387
      %v389 = vrcp.pop %v388
      %v390 = vmul.f32 %v385, %v389
      %391 = vrot.lane.b32.xlu0 %v349, 64
      %v392 = vpop.permute.xlu0 %391
      %v395 = vsel %vm354, %v390, 0
      %397 = vmatpush.msra.mxu0 0.0
      %398 = vmatpush.msra.mxu0 0.0
      %399 = vmatpush.msra.mxu0 0.0
      %400 = vmatpush.msra.mxu0 0.0
      %401 = vmatpush.msra.mxu0 0.0
      %402 = vmatpush.msra.mxu0 0.0
      %403 = vmatpush.msra.mxu0 0.0
      %404 = vmatpush.msra.mxu0 0.0
      %405 = vmatpush.msra.mxu0 0.0
      %406 = vmatpush.msra.mxu0 0.0
      %407 = vmatpush.msra.mxu0 0.0
      %408 = vmatpush.msra.mxu0 0.0
      %409 = vmatpush.msra.mxu0 0.0
      %410 = vmatpush.msra.mxu0 0.0
      %411 = vmatpush.msra.mxu0 0.0
      %412 = vmatpush.msra.mxu0 %v392
      %413 = vmatmul.f32.gmra.mxu0 %v395
      %v414 = vpop.f32.mrf.mxu0
      %v415 = vadd.f32 0.0, %v414
      %416 = vdwg.mxu0
      %v417 = vld [vmem:[%s4] sm:$0xff]
      %418 = vrot.lane.b32.xlu0 %v349, 120
      %v419 = vpop.permute.xlu0 %418
      %420 = vrot.lane.b32.xlu0 %v349, 88
      %v421 = vpop.permute.xlu0 %420
      %v422 = vsel %vm354, %v419, 0
      %v424 = vsel %vm354, %v421, 0
      %426 = vmatpush.xpose.msra.mxu0 0.0
      %427 = vmatpush.xpose.msra.mxu0 0.0
      %428 = vmatpush.xpose.msra.mxu0 0.0
      %429 = vmatpush.xpose.msra.mxu0 0.0
      %430 = vmatpush.xpose.msra.mxu0 0.0
      %431 = vmatpush.xpose.msra.mxu0 0.0
      %432 = vmatpush.xpose.msra.mxu0 0.0
      %433 = vmatpush.xpose.msra.mxu0 0.0
      %434 = vmatpush.xpose.msra.mxu0 0.0
      %435 = vmatpush.xpose.msra.mxu0 0.0
      %436 = vmatpush.xpose.msra.mxu0 0.0
      %437 = vmatpush.xpose.msra.mxu0 0.0
      %438 = vmatpush.xpose.msra.mxu0 0.0
      %439 = vmatpush.xpose.msra.mxu0 0.0
      %440 = vmatpush.xpose.msra.mxu0 0.0
      %441 = vmatpush.xpose.msra.mxu0 %v424
      %442 = vmatmul.f32.gmra.mxu0 %v422
      %v443 = vpop.f32.mrf.mxu0
      %v444 = vadd.f32 0.0, %v443
      %445 = vdwg.mxu0
      %v446 = vmul.f32 %v444, 0.35355338
      %v447 = vsel %vm354, %v446, -inf
      %448 = vmax.xlane.f32.xlu0 %v447
      %v449 = vpop.xlane.xlu0 %448
      %v450 = vsub.f32 %v446, %v449
      %v451 = vmul.f32 %v450, 1.442695
      %v452 = vpow.pop %v451
      %v453 = vsel %vm354, %v452, 0.0
      %454 = vadd.xlane.f32.xlu0 %v453
      %v455 = vpop.xlane.xlu0 %454
      %v456 = vrcp.pop %v455
      %v457 = vmul.f32 %v452, %v456
      %458 = vrot.lane.b32.xlu0 %v349, 56
      %v459 = vpop.permute.xlu0 %458
      %v462 = vsel %vm354, %v457, 0
      %464 = vmatpush.msra.mxu0 0.0
      %465 = vmatpush.msra.mxu0 0.0
      %466 = vmatpush.msra.mxu0 0.0
      %467 = vmatpush.msra.mxu0 0.0
      %468 = vmatpush.msra.mxu0 0.0
      %469 = vmatpush.msra.mxu0 0.0
      %470 = vmatpush.msra.mxu0 0.0
      %471 = vmatpush.msra.mxu0 0.0
      %472 = vmatpush.msra.mxu0 0.0
      %473 = vmatpush.msra.mxu0 0.0
      %474 = vmatpush.msra.mxu0 0.0
      %475 = vmatpush.msra.mxu0 0.0
      %476 = vmatpush.msra.mxu0 0.0
      %477 = vmatpush.msra.mxu0 0.0
      %478 = vmatpush.msra.mxu0 0.0
      %479 = vmatpush.msra.mxu0 %v459
      %480 = vmatmul.f32.gmra.mxu0 %v462
      %v481 = vpop.f32.mrf.mxu0
      %v482 = vadd.f32 0.0, %v481
      %483 = vdwg.mxu0
      %v484 = vld [vmem:[%s4 + $0x8] sm:$0xff]
      %v486 = vsel %vm354, %v482, 0
      %488 = vmatpush.msra.mxu0 0.0
      %489 = vmatpush.msra.mxu0 0.0
      %490 = vmatpush.msra.mxu0 0.0
      %491 = vmatpush.msra.mxu0 0.0
      %492 = vmatpush.msra.mxu0 0.0
      %493 = vmatpush.msra.mxu0 0.0
      %494 = vmatpush.msra.mxu0 0.0
      %495 = vmatpush.msra.mxu0 0.0
      %496 = vmatpush.msra.mxu0 0.0
      %497 = vmatpush.msra.mxu0 0.0
      %498 = vmatpush.msra.mxu0 0.0
      %499 = vmatpush.msra.mxu0 0.0
      %500 = vmatpush.msra.mxu0 0.0
      %501 = vmatpush.msra.mxu0 0.0
      %502 = vmatpush.msra.mxu0 0.0
      %503 = vmatpush.msra.mxu0 %v484
      %504 = vmatmul.f32.gmra.mxu0 %v486
      %v505 = vpop.f32.mrf.mxu0
      %v506 = vadd.f32 0.0, %v505
      %507 = vdwg.mxu0
      %v509 = vsel %vm354, %v415, 0
      %511 = vmatpush.msra.mxu0 0.0
      %512 = vmatpush.msra.mxu0 0.0
      %513 = vmatpush.msra.mxu0 0.0
      %514 = vmatpush.msra.mxu0 0.0
      %515 = vmatpush.msra.mxu0 0.0
      %516 = vmatpush.msra.mxu0 0.0
      %517 = vmatpush.msra.mxu0 0.0
      %518 = vmatpush.msra.mxu0 0.0
      %519 = vmatpush.msra.mxu0 0.0
      %520 = vmatpush.msra.mxu0 0.0
      %521 = vmatpush.msra.mxu0 0.0
      %522 = vmatpush.msra.mxu0 0.0
      %523 = vmatpush.msra.mxu0 0.0
      %524 = vmatpush.msra.mxu0 0.0
      %525 = vmatpush.msra.mxu0 0.0
      %526 = vmatpush.msra.mxu0 %v417
      %527 = vmatmul.f32.gmra.mxu0 %v509
      %v528 = vpop.f32.mrf.mxu0
      %v529 = vadd.f32 %v506, %v528
      %530 = vdwg.mxu0
      %531 = vrot.lane.b32.xlu0 %v349, 112
      %v532 = vpop.permute.xlu0 %531
      %533 = vrot.lane.b32.xlu0 %v349, 80
      %v534 = vpop.permute.xlu0 %533
      %v535 = vsel %vm354, %v532, 0
      %v537 = vsel %vm354, %v534, 0
      %539 = vmatpush.xpose.msra.mxu0 0.0
      %540 = vmatpush.xpose.msra.mxu0 0.0
      %541 = vmatpush.xpose.msra.mxu0 0.0
      %542 = vmatpush.xpose.msra.mxu0 0.0
      %543 = vmatpush.xpose.msra.mxu0 0.0
      %544 = vmatpush.xpose.msra.mxu0 0.0
      %545 = vmatpush.xpose.msra.mxu0 0.0
      %546 = vmatpush.xpose.msra.mxu0 0.0
      %547 = vmatpush.xpose.msra.mxu0 0.0
      %548 = vmatpush.xpose.msra.mxu0 0.0
      %549 = vmatpush.xpose.msra.mxu0 0.0
      %550 = vmatpush.xpose.msra.mxu0 0.0
      %551 = vmatpush.xpose.msra.mxu0 0.0
      %552 = vmatpush.xpose.msra.mxu0 0.0
      %553 = vmatpush.xpose.msra.mxu0 0.0
      %554 = vmatpush.xpose.msra.mxu0 %v537
      %555 = vmatmul.f32.gmra.mxu0 %v535
      %v556 = vpop.f32.mrf.mxu0
      %v557 = vadd.f32 0.0, %v556
      %558 = vdwg.mxu0
      %v559 = vmul.f32 %v557, 0.35355338
      %v560 = vsel %vm354, %v559, -inf
      %561 = vmax.xlane.f32.xlu0 %v560
      %v562 = vpop.xlane.xlu0 %561
      %v563 = vsub.f32 %v559, %v562
      %v564 = vmul.f32 %v563, 1.442695
      %v565 = vpow.pop %v564
      %v566 = vsel %vm354, %v565, 0.0
      %567 = vadd.xlane.f32.xlu0 %v566
      %v568 = vpop.xlane.xlu0 %567
      %v569 = vrcp.pop %v568
      %v570 = vmul.f32 %v565, %v569
      %571 = vrot.lane.b32.xlu0 %v349, 48
      %v572 = vpop.permute.xlu0 %571
      %v575 = vsel %vm354, %v570, 0
      %577 = vmatpush.msra.mxu0 0.0
      %578 = vmatpush.msra.mxu0 0.0
      %579 = vmatpush.msra.mxu0 0.0
      %580 = vmatpush.msra.mxu0 0.0
      %581 = vmatpush.msra.mxu0 0.0
      %582 = vmatpush.msra.mxu0 0.0
      %583 = vmatpush.msra.mxu0 0.0
      %584 = vmatpush.msra.mxu0 0.0
      %585 = vmatpush.msra.mxu0 0.0
      %586 = vmatpush.msra.mxu0 0.0
      %587 = vmatpush.msra.mxu0 0.0
      %588 = vmatpush.msra.mxu0 0.0
      %589 = vmatpush.msra.mxu0 0.0
      %590 = vmatpush.msra.mxu0 0.0
      %591 = vmatpush.msra.mxu0 0.0
      %592 = vmatpush.msra.mxu0 %v572
      %593 = vmatmul.f32.gmra.mxu0 %v575
      %v594 = vpop.f32.mrf.mxu0
      %v595 = vadd.f32 0.0, %v594
      %596 = vdwg.mxu0
      %v597 = vld [vmem:[%s4 + $0x10] sm:$0xff]
      %v599 = vsel %vm354, %v595, 0
      %601 = vmatpush.msra.mxu0 0.0
      %602 = vmatpush.msra.mxu0 0.0
      %603 = vmatpush.msra.mxu0 0.0
      %604 = vmatpush.msra.mxu0 0.0
      %605 = vmatpush.msra.mxu0 0.0
      %606 = vmatpush.msra.mxu0 0.0
      %607 = vmatpush.msra.mxu0 0.0
      %608 = vmatpush.msra.mxu0 0.0
      %609 = vmatpush.msra.mxu0 0.0
      %610 = vmatpush.msra.mxu0 0.0
      %611 = vmatpush.msra.mxu0 0.0
      %612 = vmatpush.msra.mxu0 0.0
      %613 = vmatpush.msra.mxu0 0.0
      %614 = vmatpush.msra.mxu0 0.0
      %615 = vmatpush.msra.mxu0 0.0
      %616 = vmatpush.msra.mxu0 %v597
      %617 = vmatmul.f32.gmra.mxu0 %v599
      %v618 = vpop.f32.mrf.mxu0
      %v619 = vadd.f32 0.0, %v618
      %620 = vdwg.mxu0
      %v621 = vadd.f32 %v529, %v619
      %622 = vrot.lane.b32.xlu0 %v349, 104
      %v623 = vpop.permute.xlu0 %622
      %624 = vrot.lane.b32.xlu0 %v349, 72
      %v625 = vpop.permute.xlu0 %624
      %v626 = vsel %vm354, %v623, 0
      %v628 = vsel %vm354, %v625, 0
      %630 = vmatpush.xpose.msra.mxu0 0.0
      %631 = vmatpush.xpose.msra.mxu0 0.0
      %632 = vmatpush.xpose.msra.mxu0 0.0
      %633 = vmatpush.xpose.msra.mxu0 0.0
      %634 = vmatpush.xpose.msra.mxu0 0.0
      %635 = vmatpush.xpose.msra.mxu0 0.0
      %636 = vmatpush.xpose.msra.mxu0 0.0
      %637 = vmatpush.xpose.msra.mxu0 0.0
      %638 = vmatpush.xpose.msra.mxu0 0.0
      %639 = vmatpush.xpose.msra.mxu0 0.0
      %640 = vmatpush.xpose.msra.mxu0 0.0
      %641 = vmatpush.xpose.msra.mxu0 0.0
      %642 = vmatpush.xpose.msra.mxu0 0.0
      %643 = vmatpush.xpose.msra.mxu0 0.0
      %644 = vmatpush.xpose.msra.mxu0 0.0
      %645 = vmatpush.xpose.msra.mxu0 %v628
      %646 = vmatmul.f32.gmra.mxu0 %v626
      %v647 = vpop.f32.mrf.mxu0
      %v648 = vadd.f32 0.0, %v647
      %649 = vdwg.mxu0
      %v650 = vmul.f32 %v648, 0.35355338
      %v651 = vsel %vm354, %v650, -inf
      %652 = vmax.xlane.f32.xlu0 %v651
      %v653 = vpop.xlane.xlu0 %652
      %v654 = vsub.f32 %v650, %v653
      %v655 = vmul.f32 %v654, 1.442695
      %v656 = vpow.pop %v655
      %v657 = vsel %vm354, %v656, 0.0
      %658 = vadd.xlane.f32.xlu0 %v657
      %v659 = vpop.xlane.xlu0 %658
      %v660 = vrcp.pop %v659
      %v661 = vmul.f32 %v656, %v660
      %662 = vrot.lane.b32.xlu0 %v349, 40
      %v663 = vpop.permute.xlu0 %662
      %v666 = vsel %vm354, %v661, 0
      %668 = vmatpush.msra.mxu0 0.0
      %669 = vmatpush.msra.mxu0 0.0
      %670 = vmatpush.msra.mxu0 0.0
      %671 = vmatpush.msra.mxu0 0.0
      %672 = vmatpush.msra.mxu0 0.0
      %673 = vmatpush.msra.mxu0 0.0
      %674 = vmatpush.msra.mxu0 0.0
      %675 = vmatpush.msra.mxu0 0.0
      %676 = vmatpush.msra.mxu0 0.0
      %677 = vmatpush.msra.mxu0 0.0
      %678 = vmatpush.msra.mxu0 0.0
      %679 = vmatpush.msra.mxu0 0.0
      %680 = vmatpush.msra.mxu0 0.0
      %681 = vmatpush.msra.mxu0 0.0
      %682 = vmatpush.msra.mxu0 0.0
      %683 = vmatpush.msra.mxu0 %v663
      %684 = vmatmul.f32.gmra.mxu0 %v666
      %v685 = vpop.f32.mrf.mxu0
      %v686 = vadd.f32 0.0, %v685
      %687 = vdwg.mxu0
      %v688 = vld [vmem:[%s4 + $0x18] sm:$0xff]
      %v690 = vsel %vm354, %v686, 0
      %692 = vmatpush.msra.mxu0 0.0
      %693 = vmatpush.msra.mxu0 0.0
      %694 = vmatpush.msra.mxu0 0.0
      %695 = vmatpush.msra.mxu0 0.0
      %696 = vmatpush.msra.mxu0 0.0
      %697 = vmatpush.msra.mxu0 0.0
      %698 = vmatpush.msra.mxu0 0.0
      %699 = vmatpush.msra.mxu0 0.0
      %700 = vmatpush.msra.mxu0 0.0
      %701 = vmatpush.msra.mxu0 0.0
      %702 = vmatpush.msra.mxu0 0.0
      %703 = vmatpush.msra.mxu0 0.0
      %704 = vmatpush.msra.mxu0 0.0
      %705 = vmatpush.msra.mxu0 0.0
      %706 = vmatpush.msra.mxu0 0.0
      %707 = vmatpush.msra.mxu0 %v688
      %708 = vmatmul.f32.gmra.mxu0 %v690
      %v709 = vpop.f32.mrf.mxu0
      %v710 = vadd.f32 0.0, %v709
      %711 = vdwg.mxu0
      %v712 = vadd.f32 %v621, %v710
      %v713 = vadd.f32 %v318, %v712
      %v714 = vld [vmem:[%s5] sm:$0x1]
      %v716 = vperm.slane %v714, 0
      %v718 = vadd.f32 %v713, %v716
      %v719 = vsel %vm327, %v718, 0.0
      %720 = vadd.xlane.f32.xlu0 %v719
      %v721 = vpop.xlane.xlu0 %720
      %v722 = vrcp.pop 32.0
      %v723 = vmul.f32 32.0, %v722
      %v724 = vsub.f32 1.0, %v723
      %v725 = vmul.f32 %v722, %v724
      %v726 = vadd.f32 %v722, %v725
      %vm727 = vweird.f32 %v722
      %v728 = vsel %vm727, %v722, %v726
      %v729 = vmul.f32 %v721, %v728
      %v730 = vsub.f32 %v718, %v729
      %v731 = vmul.f32 %v730, %v730
      %v732 = vsel %vm327, %v731, 0.0
      %733 = vadd.xlane.f32.xlu0 %v732
      %v734 = vpop.xlane.xlu0 %733
      %v735 = vmul.f32 %v734, %v728
      %v736 = vadd.f32 %v735, 1e-05
      %v737 = vrsqrt.pop %v736
      %v738 = vmul.f32 %v737, %v736
      %v739 = vmul.f32 %v738, %v737
      %v740 = vmul.f32 0.5, %v739
      %v741 = vsub.f32 1.5, %v740
      %v742 = vmul.f32 %v737, %v741
      %vm743 = vweird.f32 %v736
      %vm744 = vweird.f32 %v737
      %vm745 = vmor %vm743, %vm744
      %v746 = vsel %vm745, %v737, %v742
      %v747 = vmul.f32 %v730, %v746
      %v748 = vld [vmem:[%s6] sm:$0x1]
      %v750 = vperm.slane %v748, 0
      %v752 = vmul.f32 %v747, %v750
      %v753 = vld [vmem:[%s7] sm:$0x1]
      %v755 = vperm.slane %v753, 0
      %v757 = vadd.f32 %v752, %v755
      %758 = vst.msk [vmem:[%s317] sm:$0xff] %vm327, %v757
      %p759 = scmp.lt.s32.totalorder %s19, 1
      %s760 = scalar_select %p759, %s19, 1
      %s761 = smul.addr %s760, 8
      %s762 = scalar_lea.vmem %s8, %s761
      // Predicated region
      $region53: #{transformer_decoder_forward.10} parent=51 // pred_check
        %p763 = pneg %p215
      $region54: #{transformer_decoder_forward.10} parent=51 // pred_check_branch
        %765 = sbr.rel (%p763) target = $region56
      $region55: #{transformer_decoder_forward.10} parent=51 // pred_region
        _
      $region56: #{transformer_decoder_forward.10} parent=51 // pred_fallthru
        _
    $region52: #{transformer_decoder_forward.10} parent=5 // pred_fallthru
      _
    %p766 = scmp.le.s32.totalorder 2, %s14
    // Predicated region
    $region57: #{transformer_decoder_forward.10} parent=5 // pred_check
      %p767 = pneg %p766
    $region58: #{transformer_decoder_forward.10} parent=5 // pred_check_branch
      %769 = sbr.rel (%p767) target = $region60
    $region59: #{transformer_decoder_forward.10} parent=5 // pred_region
      %s770 = ssub.s32 %s14, 2
      // Predicated region
      $region61: #{transformer_decoder_forward.10} parent=59 // pred_check
        %p771 = pneg %p221
      $region62: #{transformer_decoder_forward.10} parent=59 // pred_check_branch
        %773 = sbr.rel (%p771) target = $region64
      $region63: #{transformer_decoder_forward.10} parent=59 // pred_region
        %p774 = scmp.lt.s32.totalorder %s20, 1
        %s775 = scalar_select %p774, %s20, 1
        %s776 = smul.addr %s775, 8
        %s777 = scalar_lea.vmem %s8, %s776
      $region64: #{transformer_decoder_forward.10} parent=59 // pred_fallthru
        _
    $region60: #{transformer_decoder_forward.10} parent=5 // pred_fallthru
      _
  $region6: #{transformer_decoder_forward.10} parent=0 // loop_footer
    %s18 = sadd.s32 1, %s14
  $region7: #{transformer_decoder_forward.10} parent=0 // loop_footer_branch
    %13 = sbr.rel target = $region3
  $region8: #{transformer_decoder_forward.10} parent=0 // loop_exit
    _

// kernel: transformer_decoder_forward.13
$region0: #{transformer_decoder_forward.13}
  #allocation0 [shape = 'u32[]', space=smem, size = 0x4, offset = 0x4, fixed_abs, tag = 'smem constant byte address 0x4 - core index']
  #allocation1 [shape = 'u32[72,128]{1,0:T(1,128)}', space=vmem, size = 0x9000, scoped, tag = 'internal scratch']
  %s0 = inlined_call_operand.vmem [shape: f32[16,32], index: 0, kind: input, shape index: {}]
  %s1 = inlined_call_operand.vmem [shape: f32[1,32], index: 1, kind: input, shape index: {}]
  %s2 = inlined_call_operand.vmem [shape: f32[1,32], index: 2, kind: input, shape index: {}]
  %s3 = inlined_call_operand.vmem [shape: f32[16,32], index: 3, kind: output, shape index: {}]
  %s4 = sld [smem:[#allocation0]]
  $region22: #{transformer_decoder_forward.13} parent=0
    _
  %s6 = ssub.s32 1, %s4
  %s7 = scalar_select 0, %s6, %s4
  // Predicated region
  $region2: #{transformer_decoder_forward.13} parent=0 // pred_check
    _
  $region3: #{transformer_decoder_forward.13} parent=0 // pred_check_branch
    %9 = sbr.rel (0) target = $region5
  $region4: #{transformer_decoder_forward.13} parent=0 // pred_region
    _
  $region5: #{transformer_decoder_forward.13} parent=0 // pred_fallthru
    _
  // Predicated region
  $region6: #{transformer_decoder_forward.13} parent=0 // pred_check
    _
  $region7: #{transformer_decoder_forward.13} parent=0 // pred_check_branch
    %11 = sbr.rel (0) target = $region9
  $region8: #{transformer_decoder_forward.13} parent=0 // pred_region
    _
  $region9: #{transformer_decoder_forward.13} parent=0 // pred_fallthru
    _
  // Predicated region
  $region10: #{transformer_decoder_forward.13} parent=0 // pred_check
    _
  $region11: #{transformer_decoder_forward.13} parent=0 // pred_check_branch
    %13 = sbr.rel (0) target = $region13
  $region12: #{transformer_decoder_forward.13} parent=0 // pred_region
    _
  $region13: #{transformer_decoder_forward.13} parent=0 // pred_fallthru
    _
  %v14 = vld [vmem:[%s0] sm:$0xff]
  %v15 = vld [vmem:[%s0 + $0x8] sm:$0xff]
  %vm16 = vcmask 261120
  %v17 = vsel %vm16, %v14, 0.0
  %18 = vadd.xlane.f32.xlu0 %v17
  %v19 = vpop.xlane.xlu0 %18
  %v20 = vsel %vm16, %v15, 0.0
  %21 = vadd.xlane.f32.xlu0 %v20
  %v22 = vpop.xlane.xlu0 %21
  %v23 = vrcp.pop 32.0
  %v24 = vmul.f32 32.0, %v23
  %v25 = vsub.f32 1.0, %v24
  %v26 = vmul.f32 %v23, %v25
  %v27 = vadd.f32 %v23, %v26
  %vm28 = vweird.f32 %v23
  %v29 = vsel %vm28, %v23, %v27
  %v30 = vmul.f32 %v19, %v29
  %v31 = vmul.f32 %v22, %v29
  %v32 = vsub.f32 %v14, %v30
  %v33 = vsub.f32 %v15, %v31
  %v34 = vmul.f32 %v32, %v32
  %v35 = vmul.f32 %v33, %v33
  %v36 = vsel %vm16, %v34, 0.0
  %37 = vadd.xlane.f32.xlu0 %v36
  %v38 = vpop.xlane.xlu0 %37
  %v39 = vsel %vm16, %v35, 0.0
  %40 = vadd.xlane.f32.xlu0 %v39
  %v41 = vpop.xlane.xlu0 %40
  %v42 = vmul.f32 %v38, %v29
  %v43 = vmul.f32 %v41, %v29
  %v44 = vadd.f32 %v42, 1e-05
  %v45 = vadd.f32 %v43, 1e-05
  %v46 = vrsqrt.pop %v44
  %v47 = vmul.f32 %v46, %v44
  %v48 = vmul.f32 %v47, %v46
  %v49 = vmul.f32 0.5, %v48
  %v50 = vsub.f32 1.5, %v49
  %v51 = vmul.f32 %v46, %v50
  %vm52 = vweird.f32 %v44
  %vm53 = vweird.f32 %v46
  %vm54 = vmor %vm52, %vm53
  %v55 = vsel %vm54, %v46, %v51
  %v56 = vrsqrt.pop %v45
  %v57 = vmul.f32 %v56, %v45
  %v58 = vmul.f32 %v57, %v56
  %v59 = vmul.f32 0.5, %v58
  %v60 = vsub.f32 1.5, %v59
  %v61 = vmul.f32 %v56, %v60
  %vm62 = vweird.f32 %v45
  %vm63 = vweird.f32 %v56
  %vm64 = vmor %vm62, %vm63
  %v65 = vsel %vm64, %v56, %v61
  %v66 = vmul.f32 %v32, %v55
  %v67 = vmul.f32 %v33, %v65
  %v68 = vld [vmem:[%s1] sm:$0x1]
  %v70 = vperm.slane %v68, 0
  %v72 = vmul.f32 %v66, %v70
  %v73 = vmul.f32 %v67, %v70
  %v74 = vld [vmem:[%s2] sm:$0x1]
  %v76 = vperm.slane %v74, 0
  %v78 = vadd.f32 %v72, %v76
  %v79 = vadd.f32 %v73, %v76
  %80 = vst.msk [vmem:[%s3] sm:$0xff] %vm16, %v78
  %81 = vst.msk [vmem:[%s3 + $0x8] sm:$0xff] %vm16, %v79
  // Predicated region
  $region14: #{transformer_decoder_forward.13} parent=0 // pred_check
    _
  $region15: #{transformer_decoder_forward.13} parent=0 // pred_check_branch
    %83 = sbr.rel (0) target = $region17
  $region16: #{transformer_decoder_forward.13} parent=0 // pred_region
    _
  $region17: #{transformer_decoder_forward.13} parent=0 // pred_fallthru
    _
  // Predicated region
  $region18: #{transformer_decoder_forward.13} parent=0 // pred_check
    _
  $region19: #{transformer_decoder_forward.13} parent=0 // pred_check_branch
    %85 = sbr.rel (0) target = $region21
  $region20: #{transformer_decoder_forward.13} parent=0 // pred_region
    _
  $region21: #{transformer_decoder_forward.13} parent=0 // pred_fallthru
    _

</llo_original>
